<compile_context>
chip_gen: v5e
topology: v5e:2x2
jax: 0.10.0
libtpu: 0.0.40
codegen_flags: <defaults>
</compile_context>

<pallas_src>
import math
import functools

import jax
import jax.numpy as jnp
from jax.experimental import pallas as pl
from jax.experimental.pallas import tpu as pltpu

_SQRT_2_OVER_PI = 0.7978845608028654


# ----------------------------------------------------------------------------
# In-kernel helpers
# ----------------------------------------------------------------------------
def _gelu(x):
    # TODO(synk): PyTorch BertIntermediate uses exact erf-GELU; the tanh
    # approximation is used here because erf has no guaranteed Mosaic lowering.
    return 0.5 * x * (1.0 + jnp.tanh(_SQRT_2_OVER_PI * (x + 0.044715 * x * x * x)))


def _linear_t(x, w, b):
    """x @ W^T + b, W kept in PyTorch (Dout, Din) layout (contract on Din)."""
    return jax.lax.dot_general(
        x, w, (((1,), (1,)), ((), ())),
        preferred_element_type=jnp.float32) + b


def _mha_block(xq, xkv, w_in, b_in, w_out, b_out, ctx_ref, *, nhead, same_qkv,
               want_attn):
    """One MultiheadAttention block (eval mode) for a single batch element.

    Returns (out (Lq, D), head-averaged attn (Lq, Lk) or None).
    """
    Lq, D = xq.shape
    Lk = xkv.shape[0]
    hd = D // nhead
    scale = 1.0 / math.sqrt(hd)

    if same_qkv:
        # Fused Q/K/V projection: one matmul with N = 3D.
        qkv = _linear_t(xq, w_in, b_in)                       # (Lq, 3D)
        q = qkv[:, 0 * D:1 * D]
        k = qkv[:, 1 * D:2 * D]
        v = qkv[:, 2 * D:3 * D]
    else:
        # Q projection + fused K/V projection (N = 2D).
        q = _linear_t(xq, w_in[0:D, :], b_in[:, 0:D])         # (Lq, D)
        kv = _linear_t(xkv, w_in[D:3 * D, :], b_in[:, D:3 * D])  # (Lk, 2D)
        k = kv[:, 0:D]
        v = kv[:, D:2 * D]

    # Per-head score matmuls (K=hd is inherent to MHA).  Stack along sublanes so
    # the softmax reductions / exp / reciprocal are emitted once, not nhead x.
    s = jnp.concatenate(
        [jax.lax.dot_general(q[:, h * hd:(h + 1) * hd],
                             k[:, h * hd:(h + 1) * hd],
                             (((1,), (1,)), ((), ())),
                             preferred_element_type=jnp.float32)
         for h in range(nhead)], axis=0) * scale              # (nhead*Lq, Lk)
    s = s - jnp.max(s, axis=-1, keepdims=True)
    e = jnp.exp(s)
    # approx reciprocal (EUP slot): attention rows sum to 1 only to ~1e-3.
    p = e * pl.reciprocal(jnp.sum(e, axis=-1, keepdims=True), approx=True)

    # Per-head context written into contiguous lane slices of a VMEM scratch so
    # the out-projection is a single K=D matmul instead of nhead K=hd matmuls.
    for h in range(nhead):
        ctx_ref[:, h * hd:(h + 1) * hd] = jnp.dot(
            p[h * Lq:(h + 1) * Lq, :], v[:, h * hd:(h + 1) * hd],
            preferred_element_type=jnp.float32)
    out = _linear_t(ctx_ref[...], w_out, b_out)               # (Lq, D), K = D

    attn = None
    if want_attn:
        acc = p[0:Lq, :]
        for h in range(1, nhead):
            acc = acc + p[h * Lq:(h + 1) * Lq, :]
        attn = acc * (1.0 / nhead)
    return out, attn


# ----------------------------------------------------------------------------
# Fused whole-forward kernel (one grid step = one batch element)
# ----------------------------------------------------------------------------
def _qformer_fwd_kernel(*refs, nhead, n_q, n_self, n_cross, with_qpos, with_attn):
    i = 0
    tgt_ref = refs[i]; i += 1
    vis_ref = refs[i]; i += 1
    qpos_ref = None
    if with_qpos:
        qpos_ref = refs[i]; i += 1
    (wS_in, bS_in, wS_out, bS_out,
     wC_in, bC_in, wC_out, bC_out,
     wI, bI, wO, bO) = refs[i:i + 12]
    i += 12
    src_ref = refs[i]
    attn_ref = refs[i + 1] if with_attn else None
    ctx_self_ref = refs[-2]
    ctx_cross_ref = refs[-1]

    tgt = tgt_ref[0].astype(jnp.float32)      # (Lt, h0) = cat(queries, txt) row block
    mem = vis_ref[0].astype(jnp.float32)      # (Nv, h1)

    # ---- self-attention stack: tgt = tgt + MHA(tgt, tgt, tgt) ----
    # tgt is DMA'd once and reused as query / key / value / residual.
    for l in range(n_self):
        out, _ = _mha_block(tgt, tgt, wS_in[l], bS_in[l], wS_out[l], bS_out[l],
                            ctx_self_ref, nhead=nhead, same_qkv=True,
                            want_attn=False)
        tgt = tgt + out

    # ---- intermediate: Linear(h0 -> h1) + GELU on the query slice ----
    tgt2 = _gelu(_linear_t(tgt[0:n_q, :], wI[...], bI[...]))   # (Nq, h1)

    # ---- cross-attention stack: tgt2 = tgt2 + MHA(tgt2 (+qpos), vis, vis) ----
    attn = None
    for l in range(n_cross):
        xq = tgt2 if qpos_ref is None else tgt2 + qpos_ref[0].astype(jnp.float32)
        want = with_attn and (l == n_cross - 1)
        out, a = _mha_block(xq, mem, wC_in[l], bC_in[l], wC_out[l], bC_out[l],
                            ctx_cross_ref, nhead=nhead, same_qkv=False,
                            want_attn=want)
        tgt2 = tgt2 + out
        if want:
            attn = a

    # ---- output: Linear(h1 -> h0) + GELU ----
    src = _gelu(_linear_t(tgt2, wO[...], bO[...]))             # (Nq, h0)
    src_ref[0] = src.astype(src_ref.dtype)
    if with_attn:
        attn_ref[0] = attn.astype(attn_ref.dtype)


# ----------------------------------------------------------------------------
# Pallas wrapper
# ----------------------------------------------------------------------------
def _qformer_pallas(params, tgt0, vis_b, qpos_b, n_q, return_attn):
    B, Lt, h0 = tgt0.shape
    Nv, h1 = vis_b.shape[1], vis_b.shape[2]
    nhead = params["nhead"]
    sa, ca = params["self_attn"], params["cross_attn"]
    n_self = sa["w_in"].shape[0]
    n_cross = ca["w_in"].shape[0]
    with_qpos = qpos_b is not None

    kernel = functools.partial(
        _qformer_fwd_kernel, nhead=nhead, n_q=n_q, n_self=n_self,
        n_cross=n_cross, with_qpos=with_qpos, with_attn=return_attn)

    def const_spec(a):
        # Constant-index full block (weights).  TODO(synk): at production D,
        # single-buffer these with pipeline_mode=pl.Buffered(1) to halve the
        # weight VMEM footprint on v7x.
        nd = a.ndim
        return pl.BlockSpec(a.shape, lambda b, _nd=nd: (0,) * _nd)

    inputs = [tgt0, vis_b]
    in_specs = [pl.BlockSpec((1, Lt, h0), lambda b: (b, 0, 0)),
                pl.BlockSpec((1, Nv, h1), lambda b: (b, 0, 0))]
    if with_qpos:
        inputs.append(qpos_b)
        in_specs.append(pl.BlockSpec((1, n_q, h1), lambda b: (b, 0, 0)))

    weights = [sa["w_in"], sa["b_in"], sa["w_out"], sa["b_out"],
               ca["w_in"], ca["b_in"], ca["w_out"], ca["b_out"],
               params["intermediate"]["weight"], params["intermediate"]["bias"],
               params["output"]["weight"], params["output"]["bias"]]
    inputs += weights
    in_specs += [const_spec(w) for w in weights]

    scratch_shapes = [pltpu.VMEM((Lt, h0), jnp.float32),   # self-attn ctx heads
                      pltpu.VMEM((n_q, h1), jnp.float32)]  # cross-attn ctx heads

    # TODO(synk): if B == 1 at inference, add a second "parallel" grid axis
    # (e.g. Lq tiles) so both v7x TensorCores get work.
    cp = pltpu.CompilerParams(
        dimension_semantics=("parallel",),
        vmem_limit_bytes=32 * 1024 * 1024)   # budget also valid for v7x (64 MiB)

    if return_attn:
        out_shape = (jax.ShapeDtypeStruct((B, n_q, h0), jnp.float32),
                     jax.ShapeDtypeStruct((B, n_q, Nv), jnp.float32))
        out_specs = (pl.BlockSpec((1, n_q, h0), lambda b: (b, 0, 0)),
                     pl.BlockSpec((1, n_q, Nv), lambda b: (b, 0, 0)))
        src, attn = pl.pallas_call(
            kernel, out_shape=out_shape, grid=(B,), in_specs=in_specs,
            out_specs=out_specs, scratch_shapes=scratch_shapes,
            compiler_params=cp)(*inputs)
        return src, attn

    out_shape = jax.ShapeDtypeStruct((B, n_q, h0), jnp.float32)
    out_specs = pl.BlockSpec((1, n_q, h0), lambda b: (b, 0, 0))
    src = pl.pallas_call(
        kernel, out_shape=out_shape, grid=(B,), in_specs=in_specs,
        out_specs=out_specs, scratch_shapes=scratch_shapes,
        compiler_params=cp)(*inputs)
    return src, None


def qformer_forward(params, queries, vis, txt, query_pos=None, return_attn=False):
    """
        vis: (N_v, B, h1)   txt: (N_t, B, h0)   queries: (N_q, B, h0)
        returns src: (N_q, B, h0), attn: (B, N_q, N_v) or None
    """
    n_q = queries.shape[0]
    # Single seq-first -> batch-first conversion (layout plumbing, once per fwd).
    q_b = jnp.transpose(queries, (1, 0, 2))
    t_b = jnp.transpose(txt, (1, 0, 2))
    v_b = jnp.transpose(vis, (1, 0, 2))
    qp_b = None if query_pos is None else jnp.transpose(query_pos, (1, 0, 2))
    tgt0 = jnp.concatenate([q_b, t_b], axis=1)                  # (B, Nq+Nt, h0)

    src_b, attn = _qformer_pallas(params, tgt0, v_b, qp_b, n_q, return_attn)
    src = jnp.transpose(src_b, (1, 0, 2))                       # back to (Nq, B, h0)
    # original returns (src, attn) in both cases (ternary binds before comma)
    return src, attn


# ----------------------------------------------------------------------------
# Deterministic parameter init (stacked per-layer weights, PyTorch layouts)
# ----------------------------------------------------------------------------
def init_qformer_params(key, hidden_size, nhead=8, selfattn_layer=1,
                        crossattn_layer=1, scale=0.2):
    h0, h1 = hidden_size
    ks, kc, ki, ko = jax.random.split(key, 4)

    def mha_stack(k, d, n):
        k1, k2, k3, k4 = jax.random.split(k, 4)
        w_in = scale * jax.random.normal(k1, (3 * d, d), jnp.float32)
        b_in = scale * jax.random.normal(k2, (1, 3 * d), jnp.float32)
        w_out = scale * jax.random.normal(k3, (d, d), jnp.float32)
        b_out = scale * jax.random.normal(k4, (1, d), jnp.float32)
        # _get_clones deep-copies one module -> identical weights per clone
        stack = lambda a: jnp.stack([a] * n, axis=0)
        return dict(w_in=stack(w_in), b_in=stack(b_in),
                    w_out=stack(w_out), b_out=stack(b_out))

    def dense(k, din, dout):
        k1, k2 = jax.random.split(k, 2)
        return dict(weight=scale * jax.random.normal(k1, (dout, din), jnp.float32),
                    bias=scale * jax.random.normal(k2, (1, dout), jnp.float32))

    return dict(nhead=nhead,
                self_attn=mha_stack(ks, h0, selfattn_layer),
                cross_attn=mha_stack(kc, h1, crossattn_layer),
                intermediate=dense(ki, h0, h1),
                output=dense(ko, h1, h0))


# ----------------------------------------------------------------------------
# Pure-JAX reference (same assumed semantics) for a correctness check
# ----------------------------------------------------------------------------
def _ref_forward(params, queries, vis, txt, query_pos=None):
    HI = jax.lax.Precision.HIGHEST
    nhead = params["nhead"]
    n_q = queries.shape[0]

    def gelu(x):
        return 0.5 * x * (1.0 + jnp.tanh(_SQRT_2_OVER_PI * (x + 0.044715 * x ** 3)))

    def mha(xq, xkv, w_in, b_in, w_out, b_out):
        B, Lq, D = xq.shape
        Lk = xkv.shape[1]
        hd = D // nhead
        q = jnp.einsum('bld,ed->ble', xq, w_in[:D], precision=HI) + b_in[0, :D]
        k = jnp.einsum('bld,ed->ble', xkv, w_in[D:2 * D], precision=HI) + b_in[0, D:2 * D]
        v = jnp.einsum('bld,ed->ble', xkv, w_in[2 * D:], precision=HI) + b_in[0, 2 * D:]
        qh = q.reshape(B, Lq, nhead, hd)
        kh = k.reshape(B, Lk, nhead, hd)
        vh = v.reshape(B, Lk, nhead, hd)
        s = jnp.einsum('bqhe,bkhe->bhqk', qh, kh, precision=HI) / math.sqrt(hd)
        p = jax.nn.softmax(s, axis=-1)
        ctx = jnp.einsum('bhqk,bkhe->bqhe', p, vh, precision=HI).reshape(B, Lq, D)
        out = jnp.einsum('bqd,ed->bqe', ctx, w_out, precision=HI) + b_out[0]
        return out, jnp.mean(p, axis=1)

    q_b = jnp.transpose(queries, (1, 0, 2))
    t_b = jnp.transpose(txt, (1, 0, 2))
    v_b = jnp.transpose(vis, (1, 0, 2))
    qp_b = None if query_pos is None else jnp.transpose(query_pos, (1, 0, 2))

    tgt = jnp.concatenate([q_b, t_b], axis=1)
    sa = params["self_attn"]
    for l in range(sa["w_in"].shape[0]):
        out, _ = mha(tgt, tgt, sa["w_in"][l], sa["b_in"][l],
                     sa["w_out"][l], sa["b_out"][l])
        tgt = tgt + out
    tgt2 = tgt[:, :n_q]
    tgt2 = gelu(jnp.einsum('bqd,ed->bqe', tgt2, params["intermediate"]["weight"],
                           precision=HI) + params["intermediate"]["bias"][0])
    ca = params["cross_attn"]
    attn = None
    for l in range(ca["w_in"].shape[0]):
        xq = tgt2 if qp_b is None else tgt2 + qp_b
        out, a = mha(xq, v_b, ca["w_in"][l], ca["b_in"][l],
                     ca["w_out"][l], ca["b_out"][l])
        tgt2 = tgt2 + out
        attn = a
    src = gelu(jnp.einsum('bqd,ed->bqe', tgt2, params["output"]["weight"],
                          precision=HI) + params["output"]["bias"][0])
    return jnp.transpose(src, (1, 0, 2)), attn


# ----------------------------------------------------------------------------
if __name__ == "__main__":
    h0, h1 = 32, 64
    nhead = 8
    Nq, Nt, Nv, B = 8, 8, 16, 2

    root = jax.random.PRNGKey(0)
    k_par, k_q, k_v, k_t = jax.random.split(root, 4)

    params = init_qformer_params(k_par, (h0, h1), nhead=nhead,
                                 selfattn_layer=1, crossattn_layer=1)

    queries = jax.random.normal(k_q, (Nq, B, h0), jnp.float32)
    vis = jax.random.normal(k_v, (Nv, B, h1), jnp.float32)
    txt = jax.random.normal(k_t, (Nt, B, h0), jnp.float32)

    # main path: single fused launch, no attention-probability writeback
    src, attn = qformer_forward(params, queries, vis, txt,
                                query_pos=None, return_attn=False)
    jax.block_until_ready(src)
    assert src.shape == (Nq, B, h0)
    assert attn is None

    # return_attn path: head-averaged probabilities produced in-kernel
    src2, attn2 = qformer_forward(params, queries, vis, txt,
                                  query_pos=None, return_attn=True)
    jax.block_until_ready((src2, attn2))
    assert src2.shape == (Nq, B, h0)
    assert attn2.shape == (B, Nq, Nv)

    # correctness vs. pure-JAX reference (tolerance covers approx reciprocal)
    ref_src, ref_attn = _ref_forward(params, queries, vis, txt, query_pos=None)
    assert jnp.allclose(src2, ref_src, atol=2e-2, rtol=2e-2), "src mismatch"
    assert jnp.allclose(attn2, ref_attn, atol=2e-2, rtol=2e-2), "attn mismatch"
    assert jnp.allclose(src, src2, atol=1e-5, rtol=1e-5)

    print("KERNEL_OK")
</pallas_src>

<mosaic_0001>
module attributes {stable_mosaic.version = 11 : i64} {
  func.func @_qformer_fwd_kernel(%arg0: i32, %arg1: memref<1x16x32xf32, #tpu.memory_space<vmem>>, %arg2: memref<1x16x64xf32, #tpu.memory_space<vmem>>, %arg3: memref<1x96x32xf32, #tpu.memory_space<vmem>>, %arg4: memref<1x1x96xf32, #tpu.memory_space<vmem>>, %arg5: memref<1x32x32xf32, #tpu.memory_space<vmem>>, %arg6: memref<1x1x32xf32, #tpu.memory_space<vmem>>, %arg7: memref<1x192x64xf32, #tpu.memory_space<vmem>>, %arg8: memref<1x1x192xf32, #tpu.memory_space<vmem>>, %arg9: memref<1x64x64xf32, #tpu.memory_space<vmem>>, %arg10: memref<1x1x64xf32, #tpu.memory_space<vmem>>, %arg11: memref<64x32xf32, #tpu.memory_space<vmem>>, %arg12: memref<1x64xf32, #tpu.memory_space<vmem>>, %arg13: memref<32x64xf32, #tpu.memory_space<vmem>>, %arg14: memref<1x32xf32, #tpu.memory_space<vmem>>, %arg15: memref<1x8x32xf32, #tpu.memory_space<vmem>>, %arg16: memref<16x32xf32, #tpu.memory_space<vmem>>, %arg17: memref<8x64xf32, #tpu.memory_space<vmem>>) attributes {dimension_semantics = [#tpu.dimension_semantics<parallel>], iteration_bounds = array<i64: 2>, scalar_prefetch = 0 : i64, scratch_operands = 2 : i64, tpu.core_type = #tpu.core_type<tc>, window_params = [{transform_indices = @transform_0, window_bounds = array<i64: 1, 16, 32>}, {transform_indices = @transform_1, window_bounds = array<i64: 1, 16, 64>}, {pipeline_mode = #tpu.pipeline_mode<synchronous>, transform_indices = @transform_2, window_bounds = array<i64: 1, 96, 32>}, {pipeline_mode = #tpu.pipeline_mode<synchronous>, transform_indices = @transform_3, window_bounds = array<i64: 1, 1, 96>}, {pipeline_mode = #tpu.pipeline_mode<synchronous>, transform_indices = @transform_4, window_bounds = array<i64: 1, 32, 32>}, {pipeline_mode = #tpu.pipeline_mode<synchronous>, transform_indices = @transform_5, window_bounds = array<i64: 1, 1, 32>}, {pipeline_mode = #tpu.pipeline_mode<synchronous>, transform_indices = @transform_6, window_bounds = array<i64: 1, 192, 64>}, {pipeline_mode = #tpu.pipeline_mode<synchronous>, transform_indices = @transform_7, window_bounds = array<i64: 1, 1, 192>}, {pipeline_mode = #tpu.pipeline_mode<synchronous>, transform_indices = @transform_8, window_bounds = array<i64: 1, 64, 64>}, {pipeline_mode = #tpu.pipeline_mode<synchronous>, transform_indices = @transform_9, window_bounds = array<i64: 1, 1, 64>}, {pipeline_mode = #tpu.pipeline_mode<synchronous>, transform_indices = @transform_10, window_bounds = array<i64: 64, 32>}, {pipeline_mode = #tpu.pipeline_mode<synchronous>, transform_indices = @transform_11, window_bounds = array<i64: 1, 64>}, {pipeline_mode = #tpu.pipeline_mode<synchronous>, transform_indices = @transform_12, window_bounds = array<i64: 32, 64>}, {pipeline_mode = #tpu.pipeline_mode<synchronous>, transform_indices = @transform_13, window_bounds = array<i64: 1, 32>}, {transform_indices = @transform_14, window_bounds = array<i64: 1, 8, 32>}]} {
    %c0 = arith.constant 0 : index
    %c0_0 = arith.constant 0 : index
    %c0_1 = arith.constant 0 : index
    %0 = vector.load %arg1[%c0, %c0_0, %c0_1] : memref<1x16x32xf32, #tpu.memory_space<vmem>>, vector<1x16x32xf32>
    %1 = vector.shape_cast %0 : vector<1x16x32xf32> to vector<16x32xf32>
    %c0_2 = arith.constant 0 : index
    %c0_3 = arith.constant 0 : index
    %c0_4 = arith.constant 0 : index
    %2 = vector.load %arg2[%c0_2, %c0_3, %c0_4] : memref<1x16x64xf32, #tpu.memory_space<vmem>>, vector<1x16x64xf32>
    %3 = vector.shape_cast %2 : vector<1x16x64xf32> to vector<16x64xf32>
    %c0_5 = arith.constant 0 : index
    %c0_6 = arith.constant 0 : index
    %c0_7 = arith.constant 0 : index
    %4 = vector.load %arg3[%c0_5, %c0_6, %c0_7] : memref<1x96x32xf32, #tpu.memory_space<vmem>>, vector<1x96x32xf32>
    %5 = vector.shape_cast %4 : vector<1x96x32xf32> to vector<96x32xf32>
    %c0_8 = arith.constant 0 : index
    %c0_9 = arith.constant 0 : index
    %c0_10 = arith.constant 0 : index
    %6 = vector.load %arg4[%c0_8, %c0_9, %c0_10] : memref<1x1x96xf32, #tpu.memory_space<vmem>>, vector<1x1x96xf32>
    %7 = vector.shape_cast %6 : vector<1x1x96xf32> to vector<1x96xf32>
    %c0_11 = arith.constant 0 : index
    %c0_12 = arith.constant 0 : index
    %c0_13 = arith.constant 0 : index
    %8 = vector.load %arg5[%c0_11, %c0_12, %c0_13] : memref<1x32x32xf32, #tpu.memory_space<vmem>>, vector<1x32x32xf32>
    %9 = vector.shape_cast %8 : vector<1x32x32xf32> to vector<32x32xf32>
    %c0_14 = arith.constant 0 : index
    %c0_15 = arith.constant 0 : index
    %c0_16 = arith.constant 0 : index
    %10 = vector.load %arg6[%c0_14, %c0_15, %c0_16] : memref<1x1x32xf32, #tpu.memory_space<vmem>>, vector<1x1x32xf32>
    %11 = vector.shape_cast %10 : vector<1x1x32xf32> to vector<1x32xf32>
    %cst = arith.constant dense<0.000000e+00> : vector<16x96xf32>
    %12 = tpu.matmul %1, %5, %cst {dimension_numbers = #tpu.dot_dimension_numbers<[1], [1], [0], [0], [0, 0, 1, 0], [], []>} : vector<16x32xf32>, vector<96x32xf32>, vector<16x96xf32> -> vector<16x96xf32>
    %13 = vector.broadcast %7 : vector<1x96xf32> to vector<16x96xf32>
    %14 = arith.addf %12, %13 : vector<16x96xf32>
    %15 = vector.extract_strided_slice %14 {offsets = [0, 0], sizes = [16, 32], strides = [1, 1]} : vector<16x96xf32> to vector<16x32xf32>
    %16 = vector.extract_strided_slice %14 {offsets = [0, 32], sizes = [16, 32], strides = [1, 1]} : vector<16x96xf32> to vector<16x32xf32>
    %17 = vector.extract_strided_slice %14 {offsets = [0, 64], sizes = [16, 32], strides = [1, 1]} : vector<16x96xf32> to vector<16x32xf32>
    %18 = vector.extract_strided_slice %15 {offsets = [0, 0], sizes = [16, 4], strides = [1, 1]} : vector<16x32xf32> to vector<16x4xf32>
    %19 = vector.extract_strided_slice %16 {offsets = [0, 0], sizes = [16, 4], strides = [1, 1]} : vector<16x32xf32> to vector<16x4xf32>
    %cst_17 = arith.constant dense<0.000000e+00> : vector<16x16xf32>
    %20 = tpu.matmul %18, %19, %cst_17 {dimension_numbers = #tpu.dot_dimension_numbers<[1], [1], [0], [0], [0, 0, 1, 0], [], []>} : vector<16x4xf32>, vector<16x4xf32>, vector<16x16xf32> -> vector<16x16xf32>
    %21 = vector.extract_strided_slice %15 {offsets = [0, 4], sizes = [16, 4], strides = [1, 1]} : vector<16x32xf32> to vector<16x4xf32>
    %22 = vector.extract_strided_slice %16 {offsets = [0, 4], sizes = [16, 4], strides = [1, 1]} : vector<16x32xf32> to vector<16x4xf32>
    %cst_18 = arith.constant dense<0.000000e+00> : vector<16x16xf32>
    %23 = tpu.matmul %21, %22, %cst_18 {dimension_numbers = #tpu.dot_dimension_numbers<[1], [1], [0], [0], [0, 0, 1, 0], [], []>} : vector<16x4xf32>, vector<16x4xf32>, vector<16x16xf32> -> vector<16x16xf32>
    %24 = vector.extract_strided_slice %15 {offsets = [0, 8], sizes = [16, 4], strides = [1, 1]} : vector<16x32xf32> to vector<16x4xf32>
    %25 = vector.extract_strided_slice %16 {offsets = [0, 8], sizes = [16, 4], strides = [1, 1]} : vector<16x32xf32> to vector<16x4xf32>
    %cst_19 = arith.constant dense<0.000000e+00> : vector<16x16xf32>
    %26 = tpu.matmul %24, %25, %cst_19 {dimension_numbers = #tpu.dot_dimension_numbers<[1], [1], [0], [0], [0, 0, 1, 0], [], []>} : vector<16x4xf32>, vector<16x4xf32>, vector<16x16xf32> -> vector<16x16xf32>
    %27 = vector.extract_strided_slice %15 {offsets = [0, 12], sizes = [16, 4], strides = [1, 1]} : vector<16x32xf32> to vector<16x4xf32>
    %28 = vector.extract_strided_slice %16 {offsets = [0, 12], sizes = [16, 4], strides = [1, 1]} : vector<16x32xf32> to vector<16x4xf32>
    %cst_20 = arith.constant dense<0.000000e+00> : vector<16x16xf32>
    %29 = tpu.matmul %27, %28, %cst_20 {dimension_numbers = #tpu.dot_dimension_numbers<[1], [1], [0], [0], [0, 0, 1, 0], [], []>} : vector<16x4xf32>, vector<16x4xf32>, vector<16x16xf32> -> vector<16x16xf32>
    %30 = vector.extract_strided_slice %15 {offsets = [0, 16], sizes = [16, 4], strides = [1, 1]} : vector<16x32xf32> to vector<16x4xf32>
    %31 = vector.extract_strided_slice %16 {offsets = [0, 16], sizes = [16, 4], strides = [1, 1]} : vector<16x32xf32> to vector<16x4xf32>
    %cst_21 = arith.constant dense<0.000000e+00> : vector<16x16xf32>
    %32 = tpu.matmul %30, %31, %cst_21 {dimension_numbers = #tpu.dot_dimension_numbers<[1], [1], [0], [0], [0, 0, 1, 0], [], []>} : vector<16x4xf32>, vector<16x4xf32>, vector<16x16xf32> -> vector<16x16xf32>
    %33 = vector.extract_strided_slice %15 {offsets = [0, 20], sizes = [16, 4], strides = [1, 1]} : vector<16x32xf32> to vector<16x4xf32>
    %34 = vector.extract_strided_slice %16 {offsets = [0, 20], sizes = [16, 4], strides = [1, 1]} : vector<16x32xf32> to vector<16x4xf32>
    %cst_22 = arith.constant dense<0.000000e+00> : vector<16x16xf32>
    %35 = tpu.matmul %33, %34, %cst_22 {dimension_numbers = #tpu.dot_dimension_numbers<[1], [1], [0], [0], [0, 0, 1, 0], [], []>} : vector<16x4xf32>, vector<16x4xf32>, vector<16x16xf32> -> vector<16x16xf32>
    %36 = vector.extract_strided_slice %15 {offsets = [0, 24], sizes = [16, 4], strides = [1, 1]} : vector<16x32xf32> to vector<16x4xf32>
    %37 = vector.extract_strided_slice %16 {offsets = [0, 24], sizes = [16, 4], strides = [1, 1]} : vector<16x32xf32> to vector<16x4xf32>
    %cst_23 = arith.constant dense<0.000000e+00> : vector<16x16xf32>
    %38 = tpu.matmul %36, %37, %cst_23 {dimension_numbers = #tpu.dot_dimension_numbers<[1], [1], [0], [0], [0, 0, 1, 0], [], []>} : vector<16x4xf32>, vector<16x4xf32>, vector<16x16xf32> -> vector<16x16xf32>
    %39 = vector.extract_strided_slice %15 {offsets = [0, 28], sizes = [16, 4], strides = [1, 1]} : vector<16x32xf32> to vector<16x4xf32>
    %40 = vector.extract_strided_slice %16 {offsets = [0, 28], sizes = [16, 4], strides = [1, 1]} : vector<16x32xf32> to vector<16x4xf32>
    %cst_24 = arith.constant dense<0.000000e+00> : vector<16x16xf32>
    %41 = tpu.matmul %39, %40, %cst_24 {dimension_numbers = #tpu.dot_dimension_numbers<[1], [1], [0], [0], [0, 0, 1, 0], [], []>} : vector<16x4xf32>, vector<16x4xf32>, vector<16x16xf32> -> vector<16x16xf32>
    %42 = tpu.concatenate %20, %23, %26, %29, %32, %35, %38, %41 in 0 : vector<16x16xf32>, vector<16x16xf32>, vector<16x16xf32>, vector<16x16xf32>, vector<16x16xf32>, vector<16x16xf32>, vector<16x16xf32>, vector<16x16xf32> -> vector<128x16xf32>
    %cst_25 = arith.constant 5.000000e-01 : f32
    %43 = vector.broadcast %cst_25 : f32 to vector<128x16xf32>
    %44 = arith.mulf %42, %43 : vector<128x16xf32>
    %cst_26 = arith.constant dense<0xFF800000> : vector<128xf32>
    %45 = vector.multi_reduction <maximumf>, %44, %cst_26 [1] : vector<128x16xf32> to vector<128xf32>
    %46 = vector.shape_cast %45 : vector<128xf32> to vector<128x1xf32>
    %47 = vector.broadcast %46 : vector<128x1xf32> to vector<128x16xf32>
    %48 = arith.subf %44, %47 : vector<128x16xf32>
    %49 = math.exp %48 : vector<128x16xf32>
    %cst_27 = arith.constant dense<0.000000e+00> : vector<128xf32>
    %50 = vector.multi_reduction <add>, %49, %cst_27 [1] : vector<128x16xf32> to vector<128xf32>
    %51 = vector.shape_cast %50 : vector<128xf32> to vector<128x1xf32>
    %52 = tpu.reciprocal %51 {approx = true} : vector<128x1xf32> -> vector<128x1xf32>
    %53 = vector.broadcast %52 : vector<128x1xf32> to vector<128x16xf32>
    %54 = arith.mulf %49, %53 : vector<128x16xf32>
    %55 = vector.extract_strided_slice %54 {offsets = [0, 0], sizes = [16, 16], strides = [1, 1]} : vector<128x16xf32> to vector<16x16xf32>
    %56 = vector.extract_strided_slice %17 {offsets = [0, 0], sizes = [16, 4], strides = [1, 1]} : vector<16x32xf32> to vector<16x4xf32>
    %cst_28 = arith.constant dense<0.000000e+00> : vector<16x4xf32>
    %57 = tpu.matmul %55, %56, %cst_28 {dimension_numbers = #tpu.dot_dimension_numbers<[1], [0], [0], [1], [0, 0, 1, 1], [], []>} : vector<16x16xf32>, vector<16x4xf32>, vector<16x4xf32> -> vector<16x4xf32>
    %c0_29 = arith.constant 0 : index
    %c0_30 = arith.constant 0 : index
    %58 = vector.load %arg16[%c0_29, %c0_30] : memref<16x32xf32, #tpu.memory_space<vmem>>, vector<16x4xf32>
    tpu.vector_store %arg16[%c0_29, %c0_30], %57 {strides = array<i32>} : memref<16x32xf32, #tpu.memory_space<vmem>>, vector<16x4xf32>,
    %59 = vector.extract_strided_slice %54 {offsets = [16, 0], sizes = [16, 16], strides = [1, 1]} : vector<128x16xf32> to vector<16x16xf32>
    %60 = vector.extract_strided_slice %17 {offsets = [0, 4], sizes = [16, 4], strides = [1, 1]} : vector<16x32xf32> to vector<16x4xf32>
    %cst_31 = arith.constant dense<0.000000e+00> : vector<16x4xf32>
    %61 = tpu.matmul %59, %60, %cst_31 {dimension_numbers = #tpu.dot_dimension_numbers<[1], [0], [0], [1], [0, 0, 1, 1], [], []>} : vector<16x16xf32>, vector<16x4xf32>, vector<16x4xf32> -> vector<16x4xf32>
    %c0_32 = arith.constant 0 : index
    %c4 = arith.constant 4 : index
    %62 = vector.load %arg16[%c0_32, %c4] : memref<16x32xf32, #tpu.memory_space<vmem>>, vector<16x4xf32>
    tpu.vector_store %arg16[%c0_32, %c4], %61 {strides = array<i32>} : memref<16x32xf32, #tpu.memory_space<vmem>>, vector<16x4xf32>,
    %63 = vector.extract_strided_slice %54 {offsets = [32, 0], sizes = [16, 16], strides = [1, 1]} : vector<128x16xf32> to vector<16x16xf32>
    %64 = vector.extract_strided_slice %17 {offsets = [0, 8], sizes = [16, 4], strides = [1, 1]} : vector<16x32xf32> to vector<16x4xf32>
    %cst_33 = arith.constant dense<0.000000e+00> : vector<16x4xf32>
    %65 = tpu.matmul %63, %64, %cst_33 {dimension_numbers = #tpu.dot_dimension_numbers<[1], [0], [0], [1], [0, 0, 1, 1], [], []>} : vector<16x16xf32>, vector<16x4xf32>, vector<16x4xf32> -> vector<16x4xf32>
    %c0_34 = arith.constant 0 : index
    %c8 = arith.constant 8 : index
    %66 = vector.load %arg16[%c0_34, %c8] : memref<16x32xf32, #tpu.memory_space<vmem>>, vector<16x4xf32>
    tpu.vector_store %arg16[%c0_34, %c8], %65 {strides = array<i32>} : memref<16x32xf32, #tpu.memory_space<vmem>>, vector<16x4xf32>,
    %67 = vector.extract_strided_slice %54 {offsets = [48, 0], sizes = [16, 16], strides = [1, 1]} : vector<128x16xf32> to vector<16x16xf32>
    %68 = vector.extract_strided_slice %17 {offsets = [0, 12], sizes = [16, 4], strides = [1, 1]} : vector<16x32xf32> to vector<16x4xf32>
    %cst_35 = arith.constant dense<0.000000e+00> : vector<16x4xf32>
    %69 = tpu.matmul %67, %68, %cst_35 {dimension_numbers = #tpu.dot_dimension_numbers<[1], [0], [0], [1], [0, 0, 1, 1], [], []>} : vector<16x16xf32>, vector<16x4xf32>, vector<16x4xf32> -> vector<16x4xf32>
    %c0_36 = arith.constant 0 : index
    %c12 = arith.constant 12 : index
    %70 = vector.load %arg16[%c0_36, %c12] : memref<16x32xf32, #tpu.memory_space<vmem>>, vector<16x4xf32>
    tpu.vector_store %arg16[%c0_36, %c12], %69 {strides = array<i32>} : memref<16x32xf32, #tpu.memory_space<vmem>>, vector<16x4xf32>,
    %71 = vector.extract_strided_slice %54 {offsets = [64, 0], sizes = [16, 16], strides = [1, 1]} : vector<128x16xf32> to vector<16x16xf32>
    %72 = vector.extract_strided_slice %17 {offsets = [0, 16], sizes = [16, 4], strides = [1, 1]} : vector<16x32xf32> to vector<16x4xf32>
    %cst_37 = arith.constant dense<0.000000e+00> : vector<16x4xf32>
    %73 = tpu.matmul %71, %72, %cst_37 {dimension_numbers = #tpu.dot_dimension_numbers<[1], [0], [0], [1], [0, 0, 1, 1], [], []>} : vector<16x16xf32>, vector<16x4xf32>, vector<16x4xf32> -> vector<16x4xf32>
    %c0_38 = arith.constant 0 : index
    %c16 = arith.constant 16 : index
    %74 = vector.load %arg16[%c0_38, %c16] : memref<16x32xf32, #tpu.memory_space<vmem>>, vector<16x4xf32>
    tpu.vector_store %arg16[%c0_38, %c16], %73 {strides = array<i32>} : memref<16x32xf32, #tpu.memory_space<vmem>>, vector<16x4xf32>,
    %75 = vector.extract_strided_slice %54 {offsets = [80, 0], sizes = [16, 16], strides = [1, 1]} : vector<128x16xf32> to vector<16x16xf32>
    %76 = vector.extract_strided_slice %17 {offsets = [0, 20], sizes = [16, 4], strides = [1, 1]} : vector<16x32xf32> to vector<16x4xf32>
    %cst_39 = arith.constant dense<0.000000e+00> : vector<16x4xf32>
    %77 = tpu.matmul %75, %76, %cst_39 {dimension_numbers = #tpu.dot_dimension_numbers<[1], [0], [0], [1], [0, 0, 1, 1], [], []>} : vector<16x16xf32>, vector<16x4xf32>, vector<16x4xf32> -> vector<16x4xf32>
    %c0_40 = arith.constant 0 : index
    %c20 = arith.constant 20 : index
    %78 = vector.load %arg16[%c0_40, %c20] : memref<16x32xf32, #tpu.memory_space<vmem>>, vector<16x4xf32>
    tpu.vector_store %arg16[%c0_40, %c20], %77 {strides = array<i32>} : memref<16x32xf32, #tpu.memory_space<vmem>>, vector<16x4xf32>,
    %79 = vector.extract_strided_slice %54 {offsets = [96, 0], sizes = [16, 16], strides = [1, 1]} : vector<128x16xf32> to vector<16x16xf32>
    %80 = vector.extract_strided_slice %17 {offsets = [0, 24], sizes = [16, 4], strides = [1, 1]} : vector<16x32xf32> to vector<16x4xf32>
    %cst_41 = arith.constant dense<0.000000e+00> : vector<16x4xf32>
    %81 = tpu.matmul %79, %80, %cst_41 {dimension_numbers = #tpu.dot_dimension_numbers<[1], [0], [0], [1], [0, 0, 1, 1], [], []>} : vector<16x16xf32>, vector<16x4xf32>, vector<16x4xf32> -> vector<16x4xf32>
    %c0_42 = arith.constant 0 : index
    %c24 = arith.constant 24 : index
    %82 = vector.load %arg16[%c0_42, %c24] : memref<16x32xf32, #tpu.memory_space<vmem>>, vector<16x4xf32>
    tpu.vector_store %arg16[%c0_42, %c24], %81 {strides = array<i32>} : memref<16x32xf32, #tpu.memory_space<vmem>>, vector<16x4xf32>,
    %83 = vector.extract_strided_slice %54 {offsets = [112, 0], sizes = [16, 16], strides = [1, 1]} : vector<128x16xf32> to vector<16x16xf32>
    %84 = vector.extract_strided_slice %17 {offsets = [0, 28], sizes = [16, 4], strides = [1, 1]} : vector<16x32xf32> to vector<16x4xf32>
    %cst_43 = arith.constant dense<0.000000e+00> : vector<16x4xf32>
    %85 = tpu.matmul %83, %84, %cst_43 {dimension_numbers = #tpu.dot_dimension_numbers<[1], [0], [0], [1], [0, 0, 1, 1], [], []>} : vector<16x16xf32>, vector<16x4xf32>, vector<16x4xf32> -> vector<16x4xf32>
    %c0_44 = arith.constant 0 : index
    %c28 = arith.constant 28 : index
    %86 = vector.load %arg16[%c0_44, %c28] : memref<16x32xf32, #tpu.memory_space<vmem>>, vector<16x4xf32>
    tpu.vector_store %arg16[%c0_44, %c28], %85 {strides = array<i32>} : memref<16x32xf32, #tpu.memory_space<vmem>>, vector<16x4xf32>,
    %c0_45 = arith.constant 0 : index
    %c0_46 = arith.constant 0 : index
    %87 = vector.load %arg16[%c0_45, %c0_46] : memref<16x32xf32, #tpu.memory_space<vmem>>, vector<16x32xf32>
    %cst_47 = arith.constant dense<0.000000e+00> : vector<16x32xf32>
    %88 = tpu.matmul %87, %9, %cst_47 {dimension_numbers = #tpu.dot_dimension_numbers<[1], [1], [0], [0], [0, 0, 1, 0], [], []>} : vector<16x32xf32>, vector<32x32xf32>, vector<16x32xf32> -> vector<16x32xf32>
    %89 = vector.broadcast %11 : vector<1x32xf32> to vector<16x32xf32>
    %90 = arith.addf %88, %89 : vector<16x32xf32>
    %91 = arith.addf %1, %90 : vector<16x32xf32>
    %92 = vector.extract_strided_slice %91 {offsets = [0, 0], sizes = [8, 32], strides = [1, 1]} : vector<16x32xf32> to vector<8x32xf32>
    %c0_48 = arith.constant 0 : index
    %c0_49 = arith.constant 0 : index
    %93 = vector.load %arg11[%c0_48, %c0_49] : memref<64x32xf32, #tpu.memory_space<vmem>>, vector<64x32xf32>
    %c0_50 = arith.constant 0 : index
    %c0_51 = arith.constant 0 : index
    %94 = vector.load %arg12[%c0_50, %c0_51] : memref<1x64xf32, #tpu.memory_space<vmem>>, vector<1x64xf32>
    %cst_52 = arith.constant dense<0.000000e+00> : vector<8x64xf32>
    %95 = tpu.matmul %92, %93, %cst_52 {dimension_numbers = #tpu.dot_dimension_numbers<[1], [1], [0], [0], [0, 0, 1, 0], [], []>} : vector<8x32xf32>, vector<64x32xf32>, vector<8x64xf32> -> vector<8x64xf32>
    %96 = vector.broadcast %94 : vector<1x64xf32> to vector<8x64xf32>
    %97 = arith.addf %95, %96 : vector<8x64xf32>
    %cst_53 = arith.constant 5.000000e-01 : f32
    %98 = vector.broadcast %cst_53 : f32 to vector<8x64xf32>
    %99 = arith.mulf %98, %97 : vector<8x64xf32>
    %cst_54 = arith.constant 4.471500e-02 : f32
    %100 = vector.broadcast %cst_54 : f32 to vector<8x64xf32>
    %101 = arith.mulf %100, %97 : vector<8x64xf32>
    %102 = arith.mulf %101, %97 : vector<8x64xf32>
    %103 = arith.mulf %102, %97 : vector<8x64xf32>
    %104 = arith.addf %97, %103 : vector<8x64xf32>
    %cst_55 = arith.constant 0.797884583 : f32
    %105 = vector.broadcast %cst_55 : f32 to vector<8x64xf32>
    %106 = arith.mulf %105, %104 : vector<8x64xf32>
    %107 = math.tanh %106 : vector<8x64xf32>
    %cst_56 = arith.constant 1.000000e+00 : f32
    %108 = vector.broadcast %cst_56 : f32 to vector<8x64xf32>
    %109 = arith.addf %108, %107 : vector<8x64xf32>
    %110 = arith.mulf %99, %109 : vector<8x64xf32>
    %c0_57 = arith.constant 0 : index
    %c0_58 = arith.constant 0 : index
    %c0_59 = arith.constant 0 : index
    %111 = vector.load %arg7[%c0_57, %c0_58, %c0_59] : memref<1x192x64xf32, #tpu.memory_space<vmem>>, vector<1x192x64xf32>
    %112 = vector.shape_cast %111 : vector<1x192x64xf32> to vector<192x64xf32>
    %c0_60 = arith.constant 0 : index
    %c0_61 = arith.constant 0 : index
    %c0_62 = arith.constant 0 : index
    %113 = vector.load %arg8[%c0_60, %c0_61, %c0_62] : memref<1x1x192xf32, #tpu.memory_space<vmem>>, vector<1x1x192xf32>
    %114 = vector.shape_cast %113 : vector<1x1x192xf32> to vector<1x192xf32>
    %c0_63 = arith.constant 0 : index
    %c0_64 = arith.constant 0 : index
    %c0_65 = arith.constant 0 : index
    %115 = vector.load %arg9[%c0_63, %c0_64, %c0_65] : memref<1x64x64xf32, #tpu.memory_space<vmem>>, vector<1x64x64xf32>
    %116 = vector.shape_cast %115 : vector<1x64x64xf32> to vector<64x64xf32>
    %c0_66 = arith.constant 0 : index
    %c0_67 = arith.constant 0 : index
    %c0_68 = arith.constant 0 : index
    %117 = vector.load %arg10[%c0_66, %c0_67, %c0_68] : memref<1x1x64xf32, #tpu.memory_space<vmem>>, vector<1x1x64xf32>
    %118 = vector.shape_cast %117 : vector<1x1x64xf32> to vector<1x64xf32>
    %119 = vector.extract_strided_slice %112 {offsets = [0, 0], sizes = [64, 64], strides = [1, 1]} : vector<192x64xf32> to vector<64x64xf32>
    %120 = vector.extract_strided_slice %114 {offsets = [0, 0], sizes = [1, 64], strides = [1, 1]} : vector<1x192xf32> to vector<1x64xf32>
    %cst_69 = arith.constant dense<0.000000e+00> : vector<8x64xf32>
    %121 = tpu.matmul %110, %119, %cst_69 {dimension_numbers = #tpu.dot_dimension_numbers<[1], [1], [0], [0], [0, 0, 1, 0], [], []>} : vector<8x64xf32>, vector<64x64xf32>, vector<8x64xf32> -> vector<8x64xf32>
    %122 = vector.broadcast %120 : vector<1x64xf32> to vector<8x64xf32>
    %123 = arith.addf %121, %122 : vector<8x64xf32>
    %124 = vector.extract_strided_slice %112 {offsets = [64, 0], sizes = [128, 64], strides = [1, 1]} : vector<192x64xf32> to vector<128x64xf32>
    %125 = vector.extract_strided_slice %114 {offsets = [0, 64], sizes = [1, 128], strides = [1, 1]} : vector<1x192xf32> to vector<1x128xf32>
    %cst_70 = arith.constant dense<0.000000e+00> : vector<16x128xf32>
    %126 = tpu.matmul %3, %124, %cst_70 {dimension_numbers = #tpu.dot_dimension_numbers<[1], [1], [0], [0], [0, 0, 1, 0], [], []>} : vector<16x64xf32>, vector<128x64xf32>, vector<16x128xf32> -> vector<16x128xf32>
    %127 = vector.broadcast %125 : vector<1x128xf32> to vector<16x128xf32>
    %128 = arith.addf %126, %127 : vector<16x128xf32>
    %129 = vector.extract_strided_slice %128 {offsets = [0, 0], sizes = [16, 64], strides = [1, 1]} : vector<16x128xf32> to vector<16x64xf32>
    %130 = vector.extract_strided_slice %128 {offsets = [0, 64], sizes = [16, 64], strides = [1, 1]} : vector<16x128xf32> to vector<16x64xf32>
    %131 = vector.extract_strided_slice %123 {offsets = [0, 0], sizes = [8, 8], strides = [1, 1]} : vector<8x64xf32> to vector<8x8xf32>
    %132 = vector.extract_strided_slice %129 {offsets = [0, 0], sizes = [16, 8], strides = [1, 1]} : vector<16x64xf32> to vector<16x8xf32>
    %cst_71 = arith.constant dense<0.000000e+00> : vector<8x16xf32>
    %133 = tpu.matmul %131, %132, %cst_71 {dimension_numbers = #tpu.dot_dimension_numbers<[1], [1], [0], [0], [0, 0, 1, 0], [], []>} : vector<8x8xf32>, vector<16x8xf32>, vector<8x16xf32> -> vector<8x16xf32>
    %134 = vector.extract_strided_slice %123 {offsets = [0, 8], sizes = [8, 8], strides = [1, 1]} : vector<8x64xf32> to vector<8x8xf32>
    %135 = vector.extract_strided_slice %129 {offsets = [0, 8], sizes = [16, 8], strides = [1, 1]} : vector<16x64xf32> to vector<16x8xf32>
    %cst_72 = arith.constant dense<0.000000e+00> : vector<8x16xf32>
    %136 = tpu.matmul %134, %135, %cst_72 {dimension_numbers = #tpu.dot_dimension_numbers<[1], [1], [0], [0], [0, 0, 1, 0], [], []>} : vector<8x8xf32>, vector<16x8xf32>, vector<8x16xf32> -> vector<8x16xf32>
    %137 = vector.extract_strided_slice %123 {offsets = [0, 16], sizes = [8, 8], strides = [1, 1]} : vector<8x64xf32> to vector<8x8xf32>
    %138 = vector.extract_strided_slice %129 {offsets = [0, 16], sizes = [16, 8], strides = [1, 1]} : vector<16x64xf32> to vector<16x8xf32>
    %cst_73 = arith.constant dense<0.000000e+00> : vector<8x16xf32>
    %139 = tpu.matmul %137, %138, %cst_73 {dimension_numbers = #tpu.dot_dimension_numbers<[1], [1], [0], [0], [0, 0, 1, 0], [], []>} : vector<8x8xf32>, vector<16x8xf32>, vector<8x16xf32> -> vector<8x16xf32>
    %140 = vector.extract_strided_slice %123 {offsets = [0, 24], sizes = [8, 8], strides = [1, 1]} : vector<8x64xf32> to vector<8x8xf32>
    %141 = vector.extract_strided_slice %129 {offsets = [0, 24], sizes = [16, 8], strides = [1, 1]} : vector<16x64xf32> to vector<16x8xf32>
    %cst_74 = arith.constant dense<0.000000e+00> : vector<8x16xf32>
    %142 = tpu.matmul %140, %141, %cst_74 {dimension_numbers = #tpu.dot_dimension_numbers<[1], [1], [0], [0], [0, 0, 1, 0], [], []>} : vector<8x8xf32>, vector<16x8xf32>, vector<8x16xf32> -> vector<8x16xf32>
    %143 = vector.extract_strided_slice %123 {offsets = [0, 32], sizes = [8, 8], strides = [1, 1]} : vector<8x64xf32> to vector<8x8xf32>
    %144 = vector.extract_strided_slice %129 {offsets = [0, 32], sizes = [16, 8], strides = [1, 1]} : vector<16x64xf32> to vector<16x8xf32>
    %cst_75 = arith.constant dense<0.000000e+00> : vector<8x16xf32>
    %145 = tpu.matmul %143, %144, %cst_75 {dimension_numbers = #tpu.dot_dimension_numbers<[1], [1], [0], [0], [0, 0, 1, 0], [], []>} : vector<8x8xf32>, vector<16x8xf32>, vector<8x16xf32> -> vector<8x16xf32>
    %146 = vector.extract_strided_slice %123 {offsets = [0, 40], sizes = [8, 8], strides = [1, 1]} : vector<8x64xf32> to vector<8x8xf32>
    %147 = vector.extract_strided_slice %129 {offsets = [0, 40], sizes = [16, 8], strides = [1, 1]} : vector<16x64xf32> to vector<16x8xf32>
    %cst_76 = arith.constant dense<0.000000e+00> : vector<8x16xf32>
    %148 = tpu.matmul %146, %147, %cst_76 {dimension_numbers = #tpu.dot_dimension_numbers<[1], [1], [0], [0], [0, 0, 1, 0], [], []>} : vector<8x8xf32>, vector<16x8xf32>, vector<8x16xf32> -> vector<8x16xf32>
    %149 = vector.extract_strided_slice %123 {offsets = [0, 48], sizes = [8, 8], strides = [1, 1]} : vector<8x64xf32> to vector<8x8xf32>
    %150 = vector.extract_strided_slice %129 {offsets = [0, 48], sizes = [16, 8], strides = [1, 1]} : vector<16x64xf32> to vector<16x8xf32>
    %cst_77 = arith.constant dense<0.000000e+00> : vector<8x16xf32>
    %151 = tpu.matmul %149, %150, %cst_77 {dimension_numbers = #tpu.dot_dimension_numbers<[1], [1], [0], [0], [0, 0, 1, 0], [], []>} : vector<8x8xf32>, vector<16x8xf32>, vector<8x16xf32> -> vector<8x16xf32>
    %152 = vector.extract_strided_slice %123 {offsets = [0, 56], sizes = [8, 8], strides = [1, 1]} : vector<8x64xf32> to vector<8x8xf32>
    %153 = vector.extract_strided_slice %129 {offsets = [0, 56], sizes = [16, 8], strides = [1, 1]} : vector<16x64xf32> to vector<16x8xf32>
    %cst_78 = arith.constant dense<0.000000e+00> : vector<8x16xf32>
    %154 = tpu.matmul %152, %153, %cst_78 {dimension_numbers = #tpu.dot_dimension_numbers<[1], [1], [0], [0], [0, 0, 1, 0], [], []>} : vector<8x8xf32>, vector<16x8xf32>, vector<8x16xf32> -> vector<8x16xf32>
    %155 = tpu.concatenate %133, %136, %139, %142, %145, %148, %151, %154 in 0 : vector<8x16xf32>, vector<8x16xf32>, vector<8x16xf32>, vector<8x16xf32>, vector<8x16xf32>, vector<8x16xf32>, vector<8x16xf32>, vector<8x16xf32> -> vector<64x16xf32>
    %cst_79 = arith.constant 0.353553385 : f32
    %156 = vector.broadcast %cst_79 : f32 to vector<64x16xf32>
    %157 = arith.mulf %155, %156 : vector<64x16xf32>
    %cst_80 = arith.constant dense<0xFF800000> : vector<64xf32>
    %158 = vector.multi_reduction <maximumf>, %157, %cst_80 [1] : vector<64x16xf32> to vector<64xf32>
    %159 = vector.shape_cast %158 : vector<64xf32> to vector<64x1xf32>
    %160 = vector.broadcast %159 : vector<64x1xf32> to vector<64x16xf32>
    %161 = arith.subf %157, %160 : vector<64x16xf32>
    %162 = math.exp %161 : vector<64x16xf32>
    %cst_81 = arith.constant dense<0.000000e+00> : vector<64xf32>
    %163 = vector.multi_reduction <add>, %162, %cst_81 [1] : vector<64x16xf32> to vector<64xf32>
    %164 = vector.shape_cast %163 : vector<64xf32> to vector<64x1xf32>
    %165 = tpu.reciprocal %164 {approx = true} : vector<64x1xf32> -> vector<64x1xf32>
    %166 = vector.broadcast %165 : vector<64x1xf32> to vector<64x16xf32>
    %167 = arith.mulf %162, %166 : vector<64x16xf32>
    %168 = vector.extract_strided_slice %167 {offsets = [0, 0], sizes = [8, 16], strides = [1, 1]} : vector<64x16xf32> to vector<8x16xf32>
    %169 = vector.extract_strided_slice %130 {offsets = [0, 0], sizes = [16, 8], strides = [1, 1]} : vector<16x64xf32> to vector<16x8xf32>
    %cst_82 = arith.constant dense<0.000000e+00> : vector<8x8xf32>
    %170 = tpu.matmul %168, %169, %cst_82 {dimension_numbers = #tpu.dot_dimension_numbers<[1], [0], [0], [1], [0, 0, 1, 1], [], []>} : vector<8x16xf32>, vector<16x8xf32>, vector<8x8xf32> -> vector<8x8xf32>
    %c0_83 = arith.constant 0 : index
    %c0_84 = arith.constant 0 : index
    %171 = vector.load %arg17[%c0_83, %c0_84] : memref<8x64xf32, #tpu.memory_space<vmem>>, vector<8x8xf32>
    tpu.vector_store %arg17[%c0_83, %c0_84], %170 {strides = array<i32>} : memref<8x64xf32, #tpu.memory_space<vmem>>, vector<8x8xf32>,
    %172 = vector.extract_strided_slice %167 {offsets = [8, 0], sizes = [8, 16], strides = [1, 1]} : vector<64x16xf32> to vector<8x16xf32>
    %173 = vector.extract_strided_slice %130 {offsets = [0, 8], sizes = [16, 8], strides = [1, 1]} : vector<16x64xf32> to vector<16x8xf32>
    %cst_85 = arith.constant dense<0.000000e+00> : vector<8x8xf32>
    %174 = tpu.matmul %172, %173, %cst_85 {dimension_numbers = #tpu.dot_dimension_numbers<[1], [0], [0], [1], [0, 0, 1, 1], [], []>} : vector<8x16xf32>, vector<16x8xf32>, vector<8x8xf32> -> vector<8x8xf32>
    %c0_86 = arith.constant 0 : index
    %c8_87 = arith.constant 8 : index
    %175 = vector.load %arg17[%c0_86, %c8_87] : memref<8x64xf32, #tpu.memory_space<vmem>>, vector<8x8xf32>
    tpu.vector_store %arg17[%c0_86, %c8_87], %174 {strides = array<i32>} : memref<8x64xf32, #tpu.memory_space<vmem>>, vector<8x8xf32>,
    %176 = vector.extract_strided_slice %167 {offsets = [16, 0], sizes = [8, 16], strides = [1, 1]} : vector<64x16xf32> to vector<8x16xf32>
    %177 = vector.extract_strided_slice %130 {offsets = [0, 16], sizes = [16, 8], strides = [1, 1]} : vector<16x64xf32> to vector<16x8xf32>
    %cst_88 = arith.constant dense<0.000000e+00> : vector<8x8xf32>
    %178 = tpu.matmul %176, %177, %cst_88 {dimension_numbers = #tpu.dot_dimension_numbers<[1], [0], [0], [1], [0, 0, 1, 1], [], []>} : vector<8x16xf32>, vector<16x8xf32>, vector<8x8xf32> -> vector<8x8xf32>
    %c0_89 = arith.constant 0 : index
    %c16_90 = arith.constant 16 : index
    %179 = vector.load %arg17[%c0_89, %c16_90] : memref<8x64xf32, #tpu.memory_space<vmem>>, vector<8x8xf32>
    tpu.vector_store %arg17[%c0_89, %c16_90], %178 {strides = array<i32>} : memref<8x64xf32, #tpu.memory_space<vmem>>, vector<8x8xf32>,
    %180 = vector.extract_strided_slice %167 {offsets = [24, 0], sizes = [8, 16], strides = [1, 1]} : vector<64x16xf32> to vector<8x16xf32>
    %181 = vector.extract_strided_slice %130 {offsets = [0, 24], sizes = [16, 8], strides = [1, 1]} : vector<16x64xf32> to vector<16x8xf32>
    %cst_91 = arith.constant dense<0.000000e+00> : vector<8x8xf32>
    %182 = tpu.matmul %180, %181, %cst_91 {dimension_numbers = #tpu.dot_dimension_numbers<[1], [0], [0], [1], [0, 0, 1, 1], [], []>} : vector<8x16xf32>, vector<16x8xf32>, vector<8x8xf32> -> vector<8x8xf32>
    %c0_92 = arith.constant 0 : index
    %c24_93 = arith.constant 24 : index
    %183 = vector.load %arg17[%c0_92, %c24_93] : memref<8x64xf32, #tpu.memory_space<vmem>>, vector<8x8xf32>
    tpu.vector_store %arg17[%c0_92, %c24_93], %182 {strides = array<i32>} : memref<8x64xf32, #tpu.memory_space<vmem>>, vector<8x8xf32>,
    %184 = vector.extract_strided_slice %167 {offsets = [32, 0], sizes = [8, 16], strides = [1, 1]} : vector<64x16xf32> to vector<8x16xf32>
    %185 = vector.extract_strided_slice %130 {offsets = [0, 32], sizes = [16, 8], strides = [1, 1]} : vector<16x64xf32> to vector<16x8xf32>
    %cst_94 = arith.constant dense<0.000000e+00> : vector<8x8xf32>
    %186 = tpu.matmul %184, %185, %cst_94 {dimension_numbers = #tpu.dot_dimension_numbers<[1], [0], [0], [1], [0, 0, 1, 1], [], []>} : vector<8x16xf32>, vector<16x8xf32>, vector<8x8xf32> -> vector<8x8xf32>
    %c0_95 = arith.constant 0 : index
    %c32 = arith.constant 32 : index
    %187 = vector.load %arg17[%c0_95, %c32] : memref<8x64xf32, #tpu.memory_space<vmem>>, vector<8x8xf32>
    tpu.vector_store %arg17[%c0_95, %c32], %186 {strides = array<i32>} : memref<8x64xf32, #tpu.memory_space<vmem>>, vector<8x8xf32>,
    %188 = vector.extract_strided_slice %167 {offsets = [40, 0], sizes = [8, 16], strides = [1, 1]} : vector<64x16xf32> to vector<8x16xf32>
    %189 = vector.extract_strided_slice %130 {offsets = [0, 40], sizes = [16, 8], strides = [1, 1]} : vector<16x64xf32> to vector<16x8xf32>
    %cst_96 = arith.constant dense<0.000000e+00> : vector<8x8xf32>
    %190 = tpu.matmul %188, %189, %cst_96 {dimension_numbers = #tpu.dot_dimension_numbers<[1], [0], [0], [1], [0, 0, 1, 1], [], []>} : vector<8x16xf32>, vector<16x8xf32>, vector<8x8xf32> -> vector<8x8xf32>
    %c0_97 = arith.constant 0 : index
    %c40 = arith.constant 40 : index
    %191 = vector.load %arg17[%c0_97, %c40] : memref<8x64xf32, #tpu.memory_space<vmem>>, vector<8x8xf32>
    tpu.vector_store %arg17[%c0_97, %c40], %190 {strides = array<i32>} : memref<8x64xf32, #tpu.memory_space<vmem>>, vector<8x8xf32>,
    %192 = vector.extract_strided_slice %167 {offsets = [48, 0], sizes = [8, 16], strides = [1, 1]} : vector<64x16xf32> to vector<8x16xf32>
    %193 = vector.extract_strided_slice %130 {offsets = [0, 48], sizes = [16, 8], strides = [1, 1]} : vector<16x64xf32> to vector<16x8xf32>
    %cst_98 = arith.constant dense<0.000000e+00> : vector<8x8xf32>
    %194 = tpu.matmul %192, %193, %cst_98 {dimension_numbers = #tpu.dot_dimension_numbers<[1], [0], [0], [1], [0, 0, 1, 1], [], []>} : vector<8x16xf32>, vector<16x8xf32>, vector<8x8xf32> -> vector<8x8xf32>
    %c0_99 = arith.constant 0 : index
    %c48 = arith.constant 48 : index
    %195 = vector.load %arg17[%c0_99, %c48] : memref<8x64xf32, #tpu.memory_space<vmem>>, vector<8x8xf32>
    tpu.vector_store %arg17[%c0_99, %c48], %194 {strides = array<i32>} : memref<8x64xf32, #tpu.memory_space<vmem>>, vector<8x8xf32>,
    %196 = vector.extract_strided_slice %167 {offsets = [56, 0], sizes = [8, 16], strides = [1, 1]} : vector<64x16xf32> to vector<8x16xf32>
    %197 = vector.extract_strided_slice %130 {offsets = [0, 56], sizes = [16, 8], strides = [1, 1]} : vector<16x64xf32> to vector<16x8xf32>
    %cst_100 = arith.constant dense<0.000000e+00> : vector<8x8xf32>
    %198 = tpu.matmul %196, %197, %cst_100 {dimension_numbers = #tpu.dot_dimension_numbers<[1], [0], [0], [1], [0, 0, 1, 1], [], []>} : vector<8x16xf32>, vector<16x8xf32>, vector<8x8xf32> -> vector<8x8xf32>
    %c0_101 = arith.constant 0 : index
    %c56 = arith.constant 56 : index
    %199 = vector.load %arg17[%c0_101, %c56] : memref<8x64xf32, #tpu.memory_space<vmem>>, vector<8x8xf32>
    tpu.vector_store %arg17[%c0_101, %c56], %198 {strides = array<i32>} : memref<8x64xf32, #tpu.memory_space<vmem>>, vector<8x8xf32>,
    %c0_102 = arith.constant 0 : index
    %c0_103 = arith.constant 0 : index
    %200 = vector.load %arg17[%c0_102, %c0_103] : memref<8x64xf32, #tpu.memory_space<vmem>>, vector<8x64xf32>
    %cst_104 = arith.constant dense<0.000000e+00> : vector<8x64xf32>
    %201 = tpu.matmul %200, %116, %cst_104 {dimension_numbers = #tpu.dot_dimension_numbers<[1], [1], [0], [0], [0, 0, 1, 0], [], []>} : vector<8x64xf32>, vector<64x64xf32>, vector<8x64xf32> -> vector<8x64xf32>
    %202 = vector.broadcast %118 : vector<1x64xf32> to vector<8x64xf32>
    %203 = arith.addf %201, %202 : vector<8x64xf32>
    %204 = arith.addf %110, %203 : vector<8x64xf32>
    %c0_105 = arith.constant 0 : index
    %c0_106 = arith.constant 0 : index
    %205 = vector.load %arg13[%c0_105, %c0_106] : memref<32x64xf32, #tpu.memory_space<vmem>>, vector<32x64xf32>
    %c0_107 = arith.constant 0 : index
    %c0_108 = arith.constant 0 : index
    %206 = vector.load %arg14[%c0_107, %c0_108] : memref<1x32xf32, #tpu.memory_space<vmem>>, vector<1x32xf32>
    %cst_109 = arith.constant dense<0.000000e+00> : vector<8x32xf32>
    %207 = tpu.matmul %204, %205, %cst_109 {dimension_numbers = #tpu.dot_dimension_numbers<[1], [1], [0], [0], [0, 0, 1, 0], [], []>} : vector<8x64xf32>, vector<32x64xf32>, vector<8x32xf32> -> vector<8x32xf32>
    %208 = vector.broadcast %206 : vector<1x32xf32> to vector<8x32xf32>
    %209 = arith.addf %207, %208 : vector<8x32xf32>
    %cst_110 = arith.constant 5.000000e-01 : f32
    %210 = vector.broadcast %cst_110 : f32 to vector<8x32xf32>
    %211 = arith.mulf %210, %209 : vector<8x32xf32>
    %cst_111 = arith.constant 4.471500e-02 : f32
    %212 = vector.broadcast %cst_111 : f32 to vector<8x32xf32>
    %213 = arith.mulf %212, %209 : vector<8x32xf32>
    %214 = arith.mulf %213, %209 : vector<8x32xf32>
    %215 = arith.mulf %214, %209 : vector<8x32xf32>
    %216 = arith.addf %209, %215 : vector<8x32xf32>
    %cst_112 = arith.constant 0.797884583 : f32
    %217 = vector.broadcast %cst_112 : f32 to vector<8x32xf32>
    %218 = arith.mulf %217, %216 : vector<8x32xf32>
    %219 = math.tanh %218 : vector<8x32xf32>
    %cst_113 = arith.constant 1.000000e+00 : f32
    %220 = vector.broadcast %cst_113 : f32 to vector<8x32xf32>
    %221 = arith.addf %220, %219 : vector<8x32xf32>
    %222 = arith.mulf %211, %221 : vector<8x32xf32>
    %c0_114 = arith.constant 0 : index
    %c0_115 = arith.constant 0 : index
    %c0_116 = arith.constant 0 : index
    %223 = vector.load %arg15[%c0_114, %c0_115, %c0_116] : memref<1x8x32xf32, #tpu.memory_space<vmem>>, vector<1x8x32xf32>
    %224 = vector.shape_cast %223 : vector<1x8x32xf32> to vector<8x32xf32>
    %225 = vector.shape_cast %222 : vector<8x32xf32> to vector<1x8x32xf32>
    tpu.vector_store %arg15[%c0_114, %c0_115, %c0_116], %225 {strides = array<i32>} : memref<1x8x32xf32, #tpu.memory_space<vmem>>, vector<1x8x32xf32>,
    return
  }
  func.func @transform_0(%arg0: i32) -> (i32, i32, i32) {
    %c0_i32 = arith.constant 0 : i32
    %c0_i32_0 = arith.constant 0 : i32
    %c0_i32_1 = arith.constant 0 : i32
    return %arg0, %c0_i32, %c0_i32_0 : i32, i32, i32
  }
  func.func @transform_1(%arg0: i32) -> (i32, i32, i32) {
    %c0_i32 = arith.constant 0 : i32
    %c0_i32_0 = arith.constant 0 : i32
    %c0_i32_1 = arith.constant 0 : i32
    return %arg0, %c0_i32, %c0_i32_0 : i32, i32, i32
  }
  func.func @transform_2(%arg0: i32) -> (i32, i32, i32) {
    %c0_i32 = arith.constant 0 : i32
    %c0_i32_0 = arith.constant 0 : i32
    %c0_i32_1 = arith.constant 0 : i32
    %c0_i32_2 = arith.constant 0 : i32
    return %c0_i32, %c0_i32_0, %c0_i32_1 : i32, i32, i32
  }
  func.func @transform_3(%arg0: i32) -> (i32, i32, i32) {
    %c0_i32 = arith.constant 0 : i32
    %c0_i32_0 = arith.constant 0 : i32
    %c0_i32_1 = arith.constant 0 : i32
    %c0_i32_2 = arith.constant 0 : i32
    return %c0_i32, %c0_i32_0, %c0_i32_1 : i32, i32, i32
  }
  func.func @transform_4(%arg0: i32) -> (i32, i32, i32) {
    %c0_i32 = arith.constant 0 : i32
    %c0_i32_0 = arith.constant 0 : i32
    %c0_i32_1 = arith.constant 0 : i32
    %c0_i32_2 = arith.constant 0 : i32
    return %c0_i32, %c0_i32_0, %c0_i32_1 : i32, i32, i32
  }
  func.func @transform_5(%arg0: i32) -> (i32, i32, i32) {
    %c0_i32 = arith.constant 0 : i32
    %c0_i32_0 = arith.constant 0 : i32
    %c0_i32_1 = arith.constant 0 : i32
    %c0_i32_2 = arith.constant 0 : i32
    return %c0_i32, %c0_i32_0, %c0_i32_1 : i32, i32, i32
  }
  func.func @transform_6(%arg0: i32) -> (i32, i32, i32) {
    %c0_i32 = arith.constant 0 : i32
    %c0_i32_0 = arith.constant 0 : i32
    %c0_i32_1 = arith.constant 0 : i32
    %c0_i32_2 = arith.constant 0 : i32
    return %c0_i32, %c0_i32_0, %c0_i32_1 : i32, i32, i32
  }
  func.func @transform_7(%arg0: i32) -> (i32, i32, i32) {
    %c0_i32 = arith.constant 0 : i32
    %c0_i32_0 = arith.constant 0 : i32
    %c0_i32_1 = arith.constant 0 : i32
    %c0_i32_2 = arith.constant 0 : i32
    return %c0_i32, %c0_i32_0, %c0_i32_1 : i32, i32, i32
  }
  func.func @transform_8(%arg0: i32) -> (i32, i32, i32) {
    %c0_i32 = arith.constant 0 : i32
    %c0_i32_0 = arith.constant 0 : i32
    %c0_i32_1 = arith.constant 0 : i32
    %c0_i32_2 = arith.constant 0 : i32
    return %c0_i32, %c0_i32_0, %c0_i32_1 : i32, i32, i32
  }
  func.func @transform_9(%arg0: i32) -> (i32, i32, i32) {
    %c0_i32 = arith.constant 0 : i32
    %c0_i32_0 = arith.constant 0 : i32
    %c0_i32_1 = arith.constant 0 : i32
    %c0_i32_2 = arith.constant 0 : i32
    return %c0_i32, %c0_i32_0, %c0_i32_1 : i32, i32, i32
  }
  func.func @transform_10(%arg0: i32) -> (i32, i32) {
    %c0_i32 = arith.constant 0 : i32
    %c0_i32_0 = arith.constant 0 : i32
    %c0_i32_1 = arith.constant 0 : i32
    return %c0_i32, %c0_i32_0 : i32, i32
  }
  func.func @transform_11(%arg0: i32) -> (i32, i32) {
    %c0_i32 = arith.constant 0 : i32
    %c0_i32_0 = arith.constant 0 : i32
    %c0_i32_1 = arith.constant 0 : i32
    return %c0_i32, %c0_i32_0 : i32, i32
  }
  func.func @transform_12(%arg0: i32) -> (i32, i32) {
    %c0_i32 = arith.constant 0 : i32
    %c0_i32_0 = arith.constant 0 : i32
    %c0_i32_1 = arith.constant 0 : i32
    return %c0_i32, %c0_i32_0 : i32, i32
  }
  func.func @transform_13(%arg0: i32) -> (i32, i32) {
    %c0_i32 = arith.constant 0 : i32
    %c0_i32_0 = arith.constant 0 : i32
    %c0_i32_1 = arith.constant 0 : i32
    return %c0_i32, %c0_i32_0 : i32, i32
  }
  func.func @transform_14(%arg0: i32) -> (i32, i32, i32) {
    %c0_i32 = arith.constant 0 : i32
    %c0_i32_0 = arith.constant 0 : i32
    %c0_i32_1 = arith.constant 0 : i32
    return %arg0, %c0_i32, %c0_i32_0 : i32, i32, i32
  }
}

</mosaic_0001>

<llo_original>
// kernel: tpu_custom_call.1
$region0: #{tpu_custom_call.1}
  #allocation0 [shape = 'u32[]', space=smem, size = 0x4, offset = 0x4, fixed_abs, tag = 'smem constant byte address 0x4 - core index']
  #allocation1 [shape = 'u32[72,128]{1,0:T(1,128)}', space=vmem, size = 0x9000, scoped, tag = 'internal scratch']
  #allocation2 [shape = 'f32[16,32]{1,0:T(8,128)}', space=vmem, size = 0x2000, scoped, tag = 'scratch operand']
  #allocation3 [shape = 'f32[8,64]{1,0:T(8,128)}', space=vmem, size = 0x1000, scoped, tag = 'scratch operand']
  %s0 = inlined_call_operand.vmem [shape: f32[2,16,32], index: 0, kind: input, shape index: {}]
  %s1 = inlined_call_operand.vmem [shape: f32[2,16,64], index: 1, kind: input, shape index: {}]
  %s2 = inlined_call_operand.vmem [shape: f32[1,96,32], index: 2, kind: input, shape index: {}]
  %s3 = inlined_call_operand.vmem [shape: f32[1,1,96], index: 3, kind: input, shape index: {}]
  %s4 = inlined_call_operand.vmem [shape: f32[1,32,32], index: 4, kind: input, shape index: {}]
  %s5 = inlined_call_operand.vmem [shape: f32[1,1,32], index: 5, kind: input, shape index: {}]
  %s6 = inlined_call_operand.vmem [shape: f32[1,192,64], index: 6, kind: input, shape index: {}]
  %s7 = inlined_call_operand.vmem [shape: f32[1,1,192], index: 7, kind: input, shape index: {}]
  %s8 = inlined_call_operand.vmem [shape: f32[1,64,64], index: 8, kind: input, shape index: {}]
  %s9 = inlined_call_operand.vmem [shape: f32[1,1,64], index: 9, kind: input, shape index: {}]
  %s10 = inlined_call_operand.vmem [shape: f32[64,32], index: 10, kind: input, shape index: {}]
  %s11 = inlined_call_operand.vmem [shape: f32[1,64], index: 11, kind: input, shape index: {}]
  %s12 = inlined_call_operand.vmem [shape: f32[32,64], index: 12, kind: input, shape index: {}]
  %s13 = inlined_call_operand.vmem [shape: f32[1,32], index: 13, kind: input, shape index: {}]
  %s14 = inlined_call_operand.hbm [shape: f32[2,8,32], index: 14, kind: output, shape index: {}]
  %s15 = sld [smem:[#allocation0]]
  $region89: #{tpu_custom_call.1} parent=0
    _
  %s17 = ssub.s32 1, %s15
  %s18 = scalar_select 0, %s17, %s15
  $region1: #{tpu_custom_call.1} parent=0
    #allocation4 [shape = 'u8[8192]{0}', space=vmem, size = 0x2000, scoped, tag = 'output window, operand 0']
    #allocation5 [shape = 's32[2]{0}', space=sflag, size = 0x8, scoped, tag = 'scoped memory for tpu_custom_call.1']
    %19 = vsyncpa [#allocation5], 0
    %s20 = scalar_lea.sflag [#allocation5], 1
    %21 = vsyncpa %s20, 0
    loop: start=0, step=1, limit=4
    $region2: #{tpu_custom_call.1} parent=1 // loop_pre_header
      _
    $region3: #{tpu_custom_call.1} parent=1 // loop_header
      %s23 = sphi 0, %s27
      %p24 = scmp.ge.s32.totalorder %s23, 4
      %s33 = sphi 0, %s35
      %s36 = sphi 0, %s33
      %s37 = sphi 0, %s36
      %s53 = sphi 0, %s37
      %s59 = sphi 0, %s61
      %s62 = sphi 0, %s59
      %s63 = sphi 0, %s62
      %s79 = sphi 0, %s63
      %s83 = sphi 0, %s83
      %s85 = sphi 0, %s83
      %s86 = sphi 0, %s85
      %s100 = sphi 0, %s86
      %s104 = sphi 0, %s104
      %s106 = sphi 0, %s104
      %s107 = sphi 0, %s106
      %s121 = sphi 0, %s107
      %s125 = sphi 0, %s125
      %s127 = sphi 0, %s125
      %s128 = sphi 0, %s127
      %s142 = sphi 0, %s128
      %s146 = sphi 0, %s146
      %s148 = sphi 0, %s146
      %s149 = sphi 0, %s148
      %s163 = sphi 0, %s149
      %s167 = sphi 0, %s167
      %s169 = sphi 0, %s167
      %s170 = sphi 0, %s169
      %s184 = sphi 0, %s170
      %s188 = sphi 0, %s188
      %s190 = sphi 0, %s188
      %s191 = sphi 0, %s190
      %s205 = sphi 0, %s191
      %s209 = sphi 0, %s209
      %s211 = sphi 0, %s209
      %s212 = sphi 0, %s211
      %s226 = sphi 0, %s212
      %s230 = sphi 0, %s230
      %s232 = sphi 0, %s230
      %s233 = sphi 0, %s232
      %s247 = sphi 0, %s233
      %s251 = sphi 0, %s251
      %s253 = sphi 0, %s251
      %s254 = sphi 0, %s253
      %s268 = sphi 0, %s254
      %s272 = sphi 0, %s272
      %s274 = sphi 0, %s272
      %s275 = sphi 0, %s274
      %s289 = sphi 0, %s275
      %s293 = sphi 0, %s293
      %s295 = sphi 0, %s293
      %s296 = sphi 0, %s295
      %s310 = sphi 0, %s296
      %s314 = sphi 0, %s314
      %s316 = sphi 0, %s314
      %s317 = sphi 0, %s316
      %s331 = sphi 0, %s317
      %s337 = sphi 0, %s339
      %s340 = sphi 0, %s337
      %s341 = sphi 0, %s340
      %s357 = sphi 0, %s341
    $region4: #{tpu_custom_call.1} parent=1 // loop_header_branch
      %26 = sbr.rel (%p24) target = $region8
    $region5: #{tpu_custom_call.1} parent=1 // loop_body
      %s28 = ssub.s32 %s23, 1
      %s29 = ssub.s32 %s23, 2
      %s30 = sadd.s32 %s23, 1
      %s31 = ssub.s32 %s23, %s30
      %p32 = scmp.eq.s32.totalorder %s31, 0
      %s34 = sadd.s32 %s33, 1
      %s35 = scalar_select %p32, %s33, %s34
      %p38 = pneg %p32
      %p39 = scmp.eq.s32.totalorder %s23, 1
      %p40 = por %p38, %p39
      %p41 = scmp.ne.s32.totalorder %s33, %s36
      %p42 = scmp.eq.s32.totalorder %s23, 0
      %p43 = por %p41, %p42
      %p44 = scmp.ne.s32.totalorder %s33, %s36
      %p45 = scmp.eq.s32.totalorder %s28, 1
      %p46 = por %p44, %p45
      %p47 = scmp.ne.s32.totalorder %s36, %s37
      %p48 = scmp.eq.s32.totalorder %s28, 0
      %p49 = por %p47, %p48
      %p50 = scmp.ne.s32.totalorder %s36, %s37
      %p51 = scmp.eq.s32.totalorder %s29, 1
      %p52 = por %p50, %p51
      %p54 = scmp.ne.s32.totalorder %s37, %s53
      %p55 = scmp.eq.s32.totalorder %s29, 0
      %p56 = por %p54, %p55
      %s57 = ssub.s32 %s23, %s30
      %p58 = scmp.eq.s32.totalorder %s57, 0
      %s60 = sadd.s32 %s59, 1
      %s61 = scalar_select %p58, %s59, %s60
      %p64 = pneg %p58
      %p65 = scmp.eq.s32.totalorder %s23, 1
      %p66 = por %p64, %p65
      %p67 = scmp.ne.s32.totalorder %s59, %s62
      %p68 = scmp.eq.s32.totalorder %s23, 0
      %p69 = por %p67, %p68
      %p70 = scmp.ne.s32.totalorder %s59, %s62
      %p71 = scmp.eq.s32.totalorder %s28, 1
      %p72 = por %p70, %p71
      %p73 = scmp.ne.s32.totalorder %s62, %s63
      %p74 = scmp.eq.s32.totalorder %s28, 0
      %p75 = por %p73, %p74
      %p76 = scmp.ne.s32.totalorder %s62, %s63
      %p77 = scmp.eq.s32.totalorder %s29, 1
      %p78 = por %p76, %p77
      %p80 = scmp.ne.s32.totalorder %s63, %s79
      %p81 = scmp.eq.s32.totalorder %s29, 0
      %p82 = por %p80, %p81
      %s84 = sadd.s32 %s83, 1
      %p87 = scmp.eq.s32.totalorder %s23, 1
      %p88 = scmp.ne.s32.totalorder %s83, %s85
      %p89 = scmp.eq.s32.totalorder %s23, 0
      %p90 = por %p88, %p89
      %p91 = scmp.ne.s32.totalorder %s83, %s85
      %p92 = scmp.eq.s32.totalorder %s28, 1
      %p93 = por %p91, %p92
      %p94 = scmp.ne.s32.totalorder %s85, %s86
      %p95 = scmp.eq.s32.totalorder %s28, 0
      %p96 = por %p94, %p95
      %p97 = scmp.ne.s32.totalorder %s85, %s86
      %p98 = scmp.eq.s32.totalorder %s29, 1
      %p99 = por %p97, %p98
      %p101 = scmp.ne.s32.totalorder %s86, %s100
      %p102 = scmp.eq.s32.totalorder %s29, 0
      %p103 = por %p101, %p102
      %s105 = sadd.s32 %s104, 1
      %p108 = scmp.eq.s32.totalorder %s23, 1
      %p109 = scmp.ne.s32.totalorder %s104, %s106
      %p110 = scmp.eq.s32.totalorder %s23, 0
      %p111 = por %p109, %p110
      %p112 = scmp.ne.s32.totalorder %s104, %s106
      %p113 = scmp.eq.s32.totalorder %s28, 1
      %p114 = por %p112, %p113
      %p115 = scmp.ne.s32.totalorder %s106, %s107
      %p116 = scmp.eq.s32.totalorder %s28, 0
      %p117 = por %p115, %p116
      %p118 = scmp.ne.s32.totalorder %s106, %s107
      %p119 = scmp.eq.s32.totalorder %s29, 1
      %p120 = por %p118, %p119
      %p122 = scmp.ne.s32.totalorder %s107, %s121
      %p123 = scmp.eq.s32.totalorder %s29, 0
      %p124 = por %p122, %p123
      %s126 = sadd.s32 %s125, 1
      %p129 = scmp.eq.s32.totalorder %s23, 1
      %p130 = scmp.ne.s32.totalorder %s125, %s127
      %p131 = scmp.eq.s32.totalorder %s23, 0
      %p132 = por %p130, %p131
      %p133 = scmp.ne.s32.totalorder %s125, %s127
      %p134 = scmp.eq.s32.totalorder %s28, 1
      %p135 = por %p133, %p134
      %p136 = scmp.ne.s32.totalorder %s127, %s128
      %p137 = scmp.eq.s32.totalorder %s28, 0
      %p138 = por %p136, %p137
      %p139 = scmp.ne.s32.totalorder %s127, %s128
      %p140 = scmp.eq.s32.totalorder %s29, 1
      %p141 = por %p139, %p140
      %p143 = scmp.ne.s32.totalorder %s128, %s142
      %p144 = scmp.eq.s32.totalorder %s29, 0
      %p145 = por %p143, %p144
      %s147 = sadd.s32 %s146, 1
      %p150 = scmp.eq.s32.totalorder %s23, 1
      %p151 = scmp.ne.s32.totalorder %s146, %s148
      %p152 = scmp.eq.s32.totalorder %s23, 0
      %p153 = por %p151, %p152
      %p154 = scmp.ne.s32.totalorder %s146, %s148
      %p155 = scmp.eq.s32.totalorder %s28, 1
      %p156 = por %p154, %p155
      %p157 = scmp.ne.s32.totalorder %s148, %s149
      %p158 = scmp.eq.s32.totalorder %s28, 0
      %p159 = por %p157, %p158
      %p160 = scmp.ne.s32.totalorder %s148, %s149
      %p161 = scmp.eq.s32.totalorder %s29, 1
      %p162 = por %p160, %p161
      %p164 = scmp.ne.s32.totalorder %s149, %s163
      %p165 = scmp.eq.s32.totalorder %s29, 0
      %p166 = por %p164, %p165
      %s168 = sadd.s32 %s167, 1
      %p171 = scmp.eq.s32.totalorder %s23, 1
      %p172 = scmp.ne.s32.totalorder %s167, %s169
      %p173 = scmp.eq.s32.totalorder %s23, 0
      %p174 = por %p172, %p173
      %p175 = scmp.ne.s32.totalorder %s167, %s169
      %p176 = scmp.eq.s32.totalorder %s28, 1
      %p177 = por %p175, %p176
      %p178 = scmp.ne.s32.totalorder %s169, %s170
      %p179 = scmp.eq.s32.totalorder %s28, 0
      %p180 = por %p178, %p179
      %p181 = scmp.ne.s32.totalorder %s169, %s170
      %p182 = scmp.eq.s32.totalorder %s29, 1
      %p183 = por %p181, %p182
      %p185 = scmp.ne.s32.totalorder %s170, %s184
      %p186 = scmp.eq.s32.totalorder %s29, 0
      %p187 = por %p185, %p186
      %s189 = sadd.s32 %s188, 1
      %p192 = scmp.eq.s32.totalorder %s23, 1
      %p193 = scmp.ne.s32.totalorder %s188, %s190
      %p194 = scmp.eq.s32.totalorder %s23, 0
      %p195 = por %p193, %p194
      %p196 = scmp.ne.s32.totalorder %s188, %s190
      %p197 = scmp.eq.s32.totalorder %s28, 1
      %p198 = por %p196, %p197
      %p199 = scmp.ne.s32.totalorder %s190, %s191
      %p200 = scmp.eq.s32.totalorder %s28, 0
      %p201 = por %p199, %p200
      %p202 = scmp.ne.s32.totalorder %s190, %s191
      %p203 = scmp.eq.s32.totalorder %s29, 1
      %p204 = por %p202, %p203
      %p206 = scmp.ne.s32.totalorder %s191, %s205
      %p207 = scmp.eq.s32.totalorder %s29, 0
      %p208 = por %p206, %p207
      %s210 = sadd.s32 %s209, 1
      %p213 = scmp.eq.s32.totalorder %s23, 1
      %p214 = scmp.ne.s32.totalorder %s209, %s211
      %p215 = scmp.eq.s32.totalorder %s23, 0
      %p216 = por %p214, %p215
      %p217 = scmp.ne.s32.totalorder %s209, %s211
      %p218 = scmp.eq.s32.totalorder %s28, 1
      %p219 = por %p217, %p218
      %p220 = scmp.ne.s32.totalorder %s211, %s212
      %p221 = scmp.eq.s32.totalorder %s28, 0
      %p222 = por %p220, %p221
      %p223 = scmp.ne.s32.totalorder %s211, %s212
      %p224 = scmp.eq.s32.totalorder %s29, 1
      %p225 = por %p223, %p224
      %p227 = scmp.ne.s32.totalorder %s212, %s226
      %p228 = scmp.eq.s32.totalorder %s29, 0
      %p229 = por %p227, %p228
      %s231 = sadd.s32 %s230, 1
      %p234 = scmp.eq.s32.totalorder %s23, 1
      %p235 = scmp.ne.s32.totalorder %s230, %s232
      %p236 = scmp.eq.s32.totalorder %s23, 0
      %p237 = por %p235, %p236
      %p238 = scmp.ne.s32.totalorder %s230, %s232
      %p239 = scmp.eq.s32.totalorder %s28, 1
      %p240 = por %p238, %p239
      %p241 = scmp.ne.s32.totalorder %s232, %s233
      %p242 = scmp.eq.s32.totalorder %s28, 0
      %p243 = por %p241, %p242
      %p244 = scmp.ne.s32.totalorder %s232, %s233
      %p245 = scmp.eq.s32.totalorder %s29, 1
      %p246 = por %p244, %p245
      %p248 = scmp.ne.s32.totalorder %s233, %s247
      %p249 = scmp.eq.s32.totalorder %s29, 0
      %p250 = por %p248, %p249
      %s252 = sadd.s32 %s251, 1
      %p255 = scmp.eq.s32.totalorder %s23, 1
      %p256 = scmp.ne.s32.totalorder %s251, %s253
      %p257 = scmp.eq.s32.totalorder %s23, 0
      %p258 = por %p256, %p257
      %p259 = scmp.ne.s32.totalorder %s251, %s253
      %p260 = scmp.eq.s32.totalorder %s28, 1
      %p261 = por %p259, %p260
      %p262 = scmp.ne.s32.totalorder %s253, %s254
      %p263 = scmp.eq.s32.totalorder %s28, 0
      %p264 = por %p262, %p263
      %p265 = scmp.ne.s32.totalorder %s253, %s254
      %p266 = scmp.eq.s32.totalorder %s29, 1
      %p267 = por %p265, %p266
      %p269 = scmp.ne.s32.totalorder %s254, %s268
      %p270 = scmp.eq.s32.totalorder %s29, 0
      %p271 = por %p269, %p270
      %s273 = sadd.s32 %s272, 1
      %p276 = scmp.eq.s32.totalorder %s23, 1
      %p277 = scmp.ne.s32.totalorder %s272, %s274
      %p278 = scmp.eq.s32.totalorder %s23, 0
      %p279 = por %p277, %p278
      %p280 = scmp.ne.s32.totalorder %s272, %s274
      %p281 = scmp.eq.s32.totalorder %s28, 1
      %p282 = por %p280, %p281
      %p283 = scmp.ne.s32.totalorder %s274, %s275
      %p284 = scmp.eq.s32.totalorder %s28, 0
      %p285 = por %p283, %p284
      %p286 = scmp.ne.s32.totalorder %s274, %s275
      %p287 = scmp.eq.s32.totalorder %s29, 1
      %p288 = por %p286, %p287
      %p290 = scmp.ne.s32.totalorder %s275, %s289
      %p291 = scmp.eq.s32.totalorder %s29, 0
      %p292 = por %p290, %p291
      %s294 = sadd.s32 %s293, 1
      %p297 = scmp.eq.s32.totalorder %s23, 1
      %p298 = scmp.ne.s32.totalorder %s293, %s295
      %p299 = scmp.eq.s32.totalorder %s23, 0
      %p300 = por %p298, %p299
      %p301 = scmp.ne.s32.totalorder %s293, %s295
      %p302 = scmp.eq.s32.totalorder %s28, 1
      %p303 = por %p301, %p302
      %p304 = scmp.ne.s32.totalorder %s295, %s296
      %p305 = scmp.eq.s32.totalorder %s28, 0
      %p306 = por %p304, %p305
      %p307 = scmp.ne.s32.totalorder %s295, %s296
      %p308 = scmp.eq.s32.totalorder %s29, 1
      %p309 = por %p307, %p308
      %p311 = scmp.ne.s32.totalorder %s296, %s310
      %p312 = scmp.eq.s32.totalorder %s29, 0
      %p313 = por %p311, %p312
      %s315 = sadd.s32 %s314, 1
      %p318 = scmp.eq.s32.totalorder %s23, 1
      %p319 = scmp.ne.s32.totalorder %s314, %s316
      %p320 = scmp.eq.s32.totalorder %s23, 0
      %p321 = por %p319, %p320
      %p322 = scmp.ne.s32.totalorder %s314, %s316
      %p323 = scmp.eq.s32.totalorder %s28, 1
      %p324 = por %p322, %p323
      %p325 = scmp.ne.s32.totalorder %s316, %s317
      %p326 = scmp.eq.s32.totalorder %s28, 0
      %p327 = por %p325, %p326
      %p328 = scmp.ne.s32.totalorder %s316, %s317
      %p329 = scmp.eq.s32.totalorder %s29, 1
      %p330 = por %p328, %p329
      %p332 = scmp.ne.s32.totalorder %s317, %s331
      %p333 = scmp.eq.s32.totalorder %s29, 0
      %p334 = por %p332, %p333
      %s335 = ssub.s32 %s23, %s30
      %p336 = scmp.eq.s32.totalorder %s335, 0
      %s338 = sadd.s32 %s337, 1
      %s339 = scalar_select %p336, %s337, %s338
      %p342 = pneg %p336
      %p343 = scmp.eq.s32.totalorder %s23, 1
      %p344 = por %p342, %p343
      %p345 = scmp.ne.s32.totalorder %s337, %s340
      %p346 = scmp.eq.s32.totalorder %s23, 0
      %p347 = por %p345, %p346
      %p348 = scmp.ne.s32.totalorder %s337, %s340
      %p349 = scmp.eq.s32.totalorder %s28, 1
      %p350 = por %p348, %p349
      %p351 = scmp.ne.s32.totalorder %s340, %s341
      %p352 = scmp.eq.s32.totalorder %s28, 0
      %p353 = por %p351, %p352
      %p354 = scmp.ne.s32.totalorder %s340, %s341
      %p355 = scmp.eq.s32.totalorder %s29, 1
      %p356 = por %p354, %p355
      %p358 = scmp.ne.s32.totalorder %s341, %s357
      %p359 = scmp.eq.s32.totalorder %s29, 0
      %p360 = por %p358, %p359
      %p361 = scmp.le.s32.totalorder 1, %s23
      %p362 = scmp.lt.s32.totalorder %s23, 3
      %p363 = pnand %p361, %p362
      %p364 = pneg %p363
      // Predicated region
      $region9: #{tpu_custom_call.1} parent=5 // pred_check
        _
      $region10: #{tpu_custom_call.1} parent=5 // pred_check_branch
        %366 = sbr.rel (%p363) target = $region12
      $region11: #{tpu_custom_call.1} parent=5 // pred_region
        %s367 = ssub.s32 %s23, 1
        // Predicated region
        $region13: #{tpu_custom_call.1} parent=11 // pred_check
          %p368 = pneg %p96
        $region14: #{tpu_custom_call.1} parent=11 // pred_check_branch
          %370 = sbr.rel (%p368) target = $region16
        $region15: #{tpu_custom_call.1} parent=11 // pred_region
          _
        $region16: #{tpu_custom_call.1} parent=11 // pred_fallthru
          _
        // Predicated region
        $region17: #{tpu_custom_call.1} parent=11 // pred_check
          %p371 = pneg %p117
        $region18: #{tpu_custom_call.1} parent=11 // pred_check_branch
          %373 = sbr.rel (%p371) target = $region20
        $region19: #{tpu_custom_call.1} parent=11 // pred_region
          _
        $region20: #{tpu_custom_call.1} parent=11 // pred_fallthru
          _
        // Predicated region
        $region21: #{tpu_custom_call.1} parent=11 // pred_check
          %p374 = pneg %p138
        $region22: #{tpu_custom_call.1} parent=11 // pred_check_branch
          %376 = sbr.rel (%p374) target = $region24
        $region23: #{tpu_custom_call.1} parent=11 // pred_region
          _
        $region24: #{tpu_custom_call.1} parent=11 // pred_fallthru
          _
        // Predicated region
        $region25: #{tpu_custom_call.1} parent=11 // pred_check
          %p377 = pneg %p159
        $region26: #{tpu_custom_call.1} parent=11 // pred_check_branch
          %379 = sbr.rel (%p377) target = $region28
        $region27: #{tpu_custom_call.1} parent=11 // pred_region
          _
        $region28: #{tpu_custom_call.1} parent=11 // pred_fallthru
          _
        // Predicated region
        $region29: #{tpu_custom_call.1} parent=11 // pred_check
          %p380 = pneg %p180
        $region30: #{tpu_custom_call.1} parent=11 // pred_check_branch
          %382 = sbr.rel (%p380) target = $region32
        $region31: #{tpu_custom_call.1} parent=11 // pred_region
          _
        $region32: #{tpu_custom_call.1} parent=11 // pred_fallthru
          _
        // Predicated region
        $region33: #{tpu_custom_call.1} parent=11 // pred_check
          %p383 = pneg %p201
        $region34: #{tpu_custom_call.1} parent=11 // pred_check_branch
          %385 = sbr.rel (%p383) target = $region36
        $region35: #{tpu_custom_call.1} parent=11 // pred_region
          _
        $region36: #{tpu_custom_call.1} parent=11 // pred_fallthru
          _
        // Predicated region
        $region37: #{tpu_custom_call.1} parent=11 // pred_check
          %p386 = pneg %p222
        $region38: #{tpu_custom_call.1} parent=11 // pred_check_branch
          %388 = sbr.rel (%p386) target = $region40
        $region39: #{tpu_custom_call.1} parent=11 // pred_region
          _
        $region40: #{tpu_custom_call.1} parent=11 // pred_fallthru
          _
        // Predicated region
        $region41: #{tpu_custom_call.1} parent=11 // pred_check
          %p389 = pneg %p243
        $region42: #{tpu_custom_call.1} parent=11 // pred_check_branch
          %391 = sbr.rel (%p389) target = $region44
        $region43: #{tpu_custom_call.1} parent=11 // pred_region
          _
        $region44: #{tpu_custom_call.1} parent=11 // pred_fallthru
          _
        // Predicated region
        $region45: #{tpu_custom_call.1} parent=11 // pred_check
          %p392 = pneg %p264
        $region46: #{tpu_custom_call.1} parent=11 // pred_check_branch
          %394 = sbr.rel (%p392) target = $region48
        $region47: #{tpu_custom_call.1} parent=11 // pred_region
          _
        $region48: #{tpu_custom_call.1} parent=11 // pred_fallthru
          _
        // Predicated region
        $region49: #{tpu_custom_call.1} parent=11 // pred_check
          %p395 = pneg %p285
        $region50: #{tpu_custom_call.1} parent=11 // pred_check_branch
          %397 = sbr.rel (%p395) target = $region52
        $region51: #{tpu_custom_call.1} parent=11 // pred_region
          _
        $region52: #{tpu_custom_call.1} parent=11 // pred_fallthru
          _
        // Predicated region
        $region53: #{tpu_custom_call.1} parent=11 // pred_check
          %p398 = pneg %p306
        $region54: #{tpu_custom_call.1} parent=11 // pred_check_branch
          %400 = sbr.rel (%p398) target = $region56
        $region55: #{tpu_custom_call.1} parent=11 // pred_region
          _
        $region56: #{tpu_custom_call.1} parent=11 // pred_fallthru
          _
        // Predicated region
        $region57: #{tpu_custom_call.1} parent=11 // pred_check
          %p401 = pneg %p327
        $region58: #{tpu_custom_call.1} parent=11 // pred_check_branch
          %403 = sbr.rel (%p401) target = $region60
        $region59: #{tpu_custom_call.1} parent=11 // pred_region
          _
        $region60: #{tpu_custom_call.1} parent=11 // pred_fallthru
          _
      $region12: #{tpu_custom_call.1} parent=5 // pred_fallthru
        _
      %p404 = scmp.lt.s32.totalorder %s23, 2
      // Predicated region
      $region61: #{tpu_custom_call.1} parent=5 // pred_check
        %p405 = pneg %p404
      $region62: #{tpu_custom_call.1} parent=5 // pred_check_branch
        %407 = sbr.rel (%p405) target = $region64
      $region63: #{tpu_custom_call.1} parent=5 // pred_region
        // Predicated region
        $region65: #{tpu_custom_call.1} parent=63 // pred_check
          %p408 = pneg %p43
        $region66: #{tpu_custom_call.1} parent=63 // pred_check_branch
          %410 = sbr.rel (%p408) target = $region68
        $region67: #{tpu_custom_call.1} parent=63 // pred_region
          %p411 = scmp.lt.s32.totalorder %s23, 1
          %s412 = scalar_select %p411, %s23, 1
          %s413 = smul.addr %s412, 2
          %s414 = smul.addr %s413, 8
          %s415 = scalar_lea.vmem %s0, %s414
        $region68: #{tpu_custom_call.1} parent=63 // pred_fallthru
          _
        // Predicated region
        $region69: #{tpu_custom_call.1} parent=63 // pred_check
          %p416 = pneg %p69
        $region70: #{tpu_custom_call.1} parent=63 // pred_check_branch
          %418 = sbr.rel (%p416) target = $region72
        $region71: #{tpu_custom_call.1} parent=63 // pred_region
          %p419 = scmp.lt.s32.totalorder %s23, 1
          %s420 = scalar_select %p419, %s23, 1
          %s421 = smul.addr %s420, 2
          %s422 = smul.addr %s421, 8
          %s423 = scalar_lea.vmem %s1, %s422
        $region72: #{tpu_custom_call.1} parent=63 // pred_fallthru
          _
      $region64: #{tpu_custom_call.1} parent=5 // pred_fallthru
        _
      %p424 = scmp.le.s32.totalorder 1, %s23
      %p425 = scmp.lt.s32.totalorder %s23, 3
      %p426 = pnand %p424, %p425
      %p427 = pneg %p426
      // Predicated region
      $region73: #{tpu_custom_call.1} parent=5 // pred_check
        _
      $region74: #{tpu_custom_call.1} parent=5 // pred_check_branch
        %429 = sbr.rel (%p426) target = $region76
      $region75: #{tpu_custom_call.1} parent=5 // pred_region
        %s430 = ssub.s32 %s23, 1
        %p431 = scmp.lt.s32.totalorder %s28, 1
        %s432 = scalar_select %p431, %s28, 1
        %s433 = smul.addr %s432, 2
        %s434 = smul.addr %s433, 8
        %s435 = scalar_lea.vmem %s0, %s434
        %p436 = pneg %p49
        %p437 = pneg %p46
        %p438 = scmp.lt.s32.totalorder %s28, 1
        %s439 = scalar_select %p438, %s28, 1
        %s440 = smul.addr %s439, 2
        %s441 = smul.addr %s440, 8
        %s442 = scalar_lea.vmem %s1, %s441
        %p443 = pneg %p75
        %p444 = pneg %p72
        %p445 = pneg %p96
        %p446 = pneg %p93
        %p447 = pneg %p117
        %p448 = pneg %p114
        %p449 = pneg %p138
        %p450 = pneg %p135
        %p451 = pneg %p159
        %p452 = pneg %p156
        %p453 = pneg %p180
        %p454 = pneg %p177
        %p455 = pneg %p201
        %p456 = pneg %p198
        %p457 = pneg %p222
        %p458 = pneg %p219
        %p459 = pneg %p243
        %p460 = pneg %p240
        %p461 = pneg %p264
        %p462 = pneg %p261
        %p463 = pneg %p285
        %p464 = pneg %p282
        %p465 = pneg %p306
        %p466 = pneg %p303
        %p467 = pneg %p327
        %p468 = pneg %p324
        %p469 = pneg %p353
        %p470 = pneg %p350
        %s471 = sand.u32 %s340, 1
        %s472 = scalar_lea.sflag [#allocation5], %s471
        %s473 = sand.u32 %s340, 1
        %s474 = smul.addr %s473, 8
        %s475 = scalar_lea.vmem [#allocation4], %s474
        %p476 = scmp.lt.s32.totalorder %s28, 1
        %s477 = scalar_select %p476, %s28, 1
        %s478 = smul.addr %s477, 2
        %s479 = smul.addr %s478, 8
        %s480 = scalar_lea.vmem %s0, %s479
        %p481 = scmp.lt.s32.totalorder %s28, 1
        %s482 = scalar_select %p481, %s28, 1
        %s483 = smul.addr %s482, 2
        %s484 = smul.addr %s483, 8
        %s485 = scalar_lea.vmem %s1, %s484
        %v486 = vld [vmem:[%s480] sm:$0xff]
        %v487 = vld [vmem:[%s480 + $0x8] sm:$0xff]
        %v488 = vld [vmem:[%s485] sm:$0xff]
        %v489 = vld [vmem:[%s485 + $0x8] sm:$0xff]
        %v490 = vld [vmem:[%s2] sm:$0xff]
        %v491 = vld [vmem:[%s2 + $0x8] sm:$0xff]
        %v492 = vld [vmem:[%s2 + $0x10] sm:$0xff]
        %v493 = vld [vmem:[%s2 + $0x18] sm:$0xff]
        %v494 = vld [vmem:[%s2 + $0x20] sm:$0xff]
        %v495 = vld [vmem:[%s2 + $0x28] sm:$0xff]
        %v496 = vld [vmem:[%s2 + $0x30] sm:$0xff]
        %v497 = vld [vmem:[%s2 + $0x38] sm:$0xff]
        %v498 = vld [vmem:[%s2 + $0x40] sm:$0xff]
        %v499 = vld [vmem:[%s2 + $0x48] sm:$0xff]
        %v500 = vld [vmem:[%s2 + $0x50] sm:$0xff]
        %v501 = vld [vmem:[%s2 + $0x58] sm:$0xff]
        %v502 = vld [vmem:[%s3] sm:$0x1]
        %v503 = vld [vmem:[%s4] sm:$0xff]
        %v504 = vld [vmem:[%s4 + $0x8] sm:$0xff]
        %v505 = vld [vmem:[%s4 + $0x10] sm:$0xff]
        %v506 = vld [vmem:[%s4 + $0x18] sm:$0xff]
        %v507 = vld [vmem:[%s5] sm:$0x1]
        %v509 = vperm.slane %v502, 0
        %vm511 = vcmask 261120
        %v513 = vsel %vm511, %v486, 0
        %v516 = vsel %vm511, %v487, 0
        %v519 = vsel %vm511, %v490, 0
        %v522 = vsel %vm511, %v491, 0
        %v525 = vsel %vm511, %v492, 0
        %v528 = vsel %vm511, %v493, 0
        %v531 = vsel %vm511, %v494, 0
        %v534 = vsel %vm511, %v495, 0
        %v537 = vsel %vm511, %v496, 0
        %v540 = vsel %vm511, %v497, 0
        %v543 = vsel %vm511, %v498, 0
        %v546 = vsel %vm511, %v499, 0
        %v549 = vsel %vm511, %v500, 0
        %v552 = vsel %vm511, %v501, 0
        %554 = vmatpush.xpose.msra.mxu0 0.0
        %555 = vmatpush.xpose.msra.mxu0 0.0
        %556 = vmatpush.xpose.msra.mxu0 0.0
        %557 = vmatpush.xpose.msra.mxu0 0.0
        %558 = vmatpush.xpose.msra.mxu0 %v552
        %559 = vmatpush.xpose.msra.mxu0 %v549
        %560 = vmatpush.xpose.msra.mxu0 %v546
        %561 = vmatpush.xpose.msra.mxu0 %v543
        %562 = vmatpush.xpose.msra.mxu0 %v540
        %563 = vmatpush.xpose.msra.mxu0 %v537
        %564 = vmatpush.xpose.msra.mxu0 %v534
        %565 = vmatpush.xpose.msra.mxu0 %v531
        %566 = vmatpush.xpose.msra.mxu0 %v528
        %567 = vmatpush.xpose.msra.mxu0 %v525
        %568 = vmatpush.xpose.msra.mxu0 %v522
        %569 = vmatpush.xpose.msra.mxu0 %v519
        %570 = vmatmul.f32.gmra.mxu0 %v513
        %v571 = vpop.f32.mrf.mxu0
        %v572 = vadd.f32 %v509, %v571
        %573 = vmatmul.f32.gmra.mxu0 %v516
        %v574 = vpop.f32.mrf.mxu0
        %v575 = vadd.f32 %v509, %v574
        %576 = vdwg.mxu0
        %579 = vrot.lane.b32.xlu0 %v572, 96
        %v580 = vpop.permute.xlu0 %579
        %581 = vrot.lane.b32.xlu0 %v575, 96
        %v582 = vpop.permute.xlu0 %581
        %vm583 = vcmask 31744
        %v584 = vsel %vm583, %v572, 0
        %v586 = vsel %vm583, %v575, 0
        %v588 = vsel %vm583, %v580, 0
        %v590 = vsel %vm583, %v582, 0
        %592 = vmatpush.xpose.msra.mxu0 0.0
        %593 = vmatpush.xpose.msra.mxu0 0.0
        %594 = vmatpush.xpose.msra.mxu0 0.0
        %595 = vmatpush.xpose.msra.mxu0 0.0
        %596 = vmatpush.xpose.msra.mxu0 0.0
        %597 = vmatpush.xpose.msra.mxu0 0.0
        %598 = vmatpush.xpose.msra.mxu0 0.0
        %599 = vmatpush.xpose.msra.mxu0 0.0
        %600 = vmatpush.xpose.msra.mxu0 0.0
        %601 = vmatpush.xpose.msra.mxu0 0.0
        %602 = vmatpush.xpose.msra.mxu0 0.0
        %603 = vmatpush.xpose.msra.mxu0 0.0
        %604 = vmatpush.xpose.msra.mxu0 0.0
        %605 = vmatpush.xpose.msra.mxu0 0.0
        %606 = vmatpush.xpose.msra.mxu0 %v590
        %607 = vmatpush.xpose.msra.mxu0 %v588
        %608 = vmatmul.f32.gmra.mxu0 %v584
        %v609 = vpop.f32.mrf.mxu0
        %v610 = vadd.f32 0.0, %v609
        %611 = vmatmul.f32.gmra.mxu0 %v586
        %v612 = vpop.f32.mrf.mxu0
        %v613 = vadd.f32 0.0, %v612
        %614 = vdwg.mxu0
        %615 = vrot.lane.b32.xlu0 %v572, 124
        %v616 = vpop.permute.xlu0 %615
        %617 = vrot.lane.b32.xlu0 %v575, 124
        %v618 = vpop.permute.xlu0 %617
        %619 = vrot.lane.b32.xlu0 %v572, 92
        %v620 = vpop.permute.xlu0 %619
        %621 = vrot.lane.b32.xlu0 %v575, 92
        %v622 = vpop.permute.xlu0 %621
        %v623 = vsel %vm583, %v616, 0
        %v625 = vsel %vm583, %v618, 0
        %v627 = vsel %vm583, %v620, 0
        %v629 = vsel %vm583, %v622, 0
        %631 = vmatpush.xpose.msra.mxu0 0.0
        %632 = vmatpush.xpose.msra.mxu0 0.0
        %633 = vmatpush.xpose.msra.mxu0 0.0
        %634 = vmatpush.xpose.msra.mxu0 0.0
        %635 = vmatpush.xpose.msra.mxu0 0.0
        %636 = vmatpush.xpose.msra.mxu0 0.0
        %637 = vmatpush.xpose.msra.mxu0 0.0
        %638 = vmatpush.xpose.msra.mxu0 0.0
        %639 = vmatpush.xpose.msra.mxu0 0.0
        %640 = vmatpush.xpose.msra.mxu0 0.0
        %641 = vmatpush.xpose.msra.mxu0 0.0
        %642 = vmatpush.xpose.msra.mxu0 0.0
        %643 = vmatpush.xpose.msra.mxu0 0.0
        %644 = vmatpush.xpose.msra.mxu0 0.0
        %645 = vmatpush.xpose.msra.mxu0 %v629
        %646 = vmatpush.xpose.msra.mxu0 %v627
        %647 = vmatmul.f32.gmra.mxu0 %v623
        %v648 = vpop.f32.mrf.mxu0
        %v649 = vadd.f32 0.0, %v648
        %650 = vmatmul.f32.gmra.mxu0 %v625
        %v651 = vpop.f32.mrf.mxu0
        %v652 = vadd.f32 0.0, %v651
        %653 = vdwg.mxu0
        %654 = vrot.lane.b32.xlu0 %v572, 120
        %v655 = vpop.permute.xlu0 %654
        %656 = vrot.lane.b32.xlu0 %v575, 120
        %v657 = vpop.permute.xlu0 %656
        %658 = vrot.lane.b32.xlu0 %v572, 88
        %v659 = vpop.permute.xlu0 %658
        %660 = vrot.lane.b32.xlu0 %v575, 88
        %v661 = vpop.permute.xlu0 %660
        %v662 = vsel %vm583, %v655, 0
        %v664 = vsel %vm583, %v657, 0
        %v666 = vsel %vm583, %v659, 0
        %v668 = vsel %vm583, %v661, 0
        %670 = vmatpush.xpose.msra.mxu0 0.0
        %671 = vmatpush.xpose.msra.mxu0 0.0
        %672 = vmatpush.xpose.msra.mxu0 0.0
        %673 = vmatpush.xpose.msra.mxu0 0.0
        %674 = vmatpush.xpose.msra.mxu0 0.0
        %675 = vmatpush.xpose.msra.mxu0 0.0
        %676 = vmatpush.xpose.msra.mxu0 0.0
        %677 = vmatpush.xpose.msra.mxu0 0.0
        %678 = vmatpush.xpose.msra.mxu0 0.0
        %679 = vmatpush.xpose.msra.mxu0 0.0
        %680 = vmatpush.xpose.msra.mxu0 0.0
        %681 = vmatpush.xpose.msra.mxu0 0.0
        %682 = vmatpush.xpose.msra.mxu0 0.0
        %683 = vmatpush.xpose.msra.mxu0 0.0
        %684 = vmatpush.xpose.msra.mxu0 %v668
        %685 = vmatpush.xpose.msra.mxu0 %v666
        %686 = vmatmul.f32.gmra.mxu0 %v662
        %v687 = vpop.f32.mrf.mxu0
        %v688 = vadd.f32 0.0, %v687
        %689 = vmatmul.f32.gmra.mxu0 %v664
        %v690 = vpop.f32.mrf.mxu0
        %v691 = vadd.f32 0.0, %v690
        %692 = vdwg.mxu0
        %693 = vrot.lane.b32.xlu0 %v572, 116
        %v694 = vpop.permute.xlu0 %693
        %695 = vrot.lane.b32.xlu0 %v575, 116
        %v696 = vpop.permute.xlu0 %695
        %697 = vrot.lane.b32.xlu0 %v572, 84
        %v698 = vpop.permute.xlu0 %697
        %699 = vrot.lane.b32.xlu0 %v575, 84
        %v700 = vpop.permute.xlu0 %699
        %v701 = vsel %vm583, %v694, 0
        %v703 = vsel %vm583, %v696, 0
        %v705 = vsel %vm583, %v698, 0
        %v707 = vsel %vm583, %v700, 0
        %709 = vmatpush.xpose.msra.mxu0 0.0
        %710 = vmatpush.xpose.msra.mxu0 0.0
        %711 = vmatpush.xpose.msra.mxu0 0.0
        %712 = vmatpush.xpose.msra.mxu0 0.0
        %713 = vmatpush.xpose.msra.mxu0 0.0
        %714 = vmatpush.xpose.msra.mxu0 0.0
        %715 = vmatpush.xpose.msra.mxu0 0.0
        %716 = vmatpush.xpose.msra.mxu0 0.0
        %717 = vmatpush.xpose.msra.mxu0 0.0
        %718 = vmatpush.xpose.msra.mxu0 0.0
        %719 = vmatpush.xpose.msra.mxu0 0.0
        %720 = vmatpush.xpose.msra.mxu0 0.0
        %721 = vmatpush.xpose.msra.mxu0 0.0
        %722 = vmatpush.xpose.msra.mxu0 0.0
        %723 = vmatpush.xpose.msra.mxu0 %v707
        %724 = vmatpush.xpose.msra.mxu0 %v705
        %725 = vmatmul.f32.gmra.mxu0 %v701
        %v726 = vpop.f32.mrf.mxu0
        %v727 = vadd.f32 0.0, %v726
        %728 = vmatmul.f32.gmra.mxu0 %v703
        %v729 = vpop.f32.mrf.mxu0
        %v730 = vadd.f32 0.0, %v729
        %731 = vdwg.mxu0
        %732 = vrot.lane.b32.xlu0 %v572, 112
        %v733 = vpop.permute.xlu0 %732
        %734 = vrot.lane.b32.xlu0 %v575, 112
        %v735 = vpop.permute.xlu0 %734
        %736 = vrot.lane.b32.xlu0 %v572, 80
        %v737 = vpop.permute.xlu0 %736
        %738 = vrot.lane.b32.xlu0 %v575, 80
        %v739 = vpop.permute.xlu0 %738
        %v740 = vsel %vm583, %v733, 0
        %v742 = vsel %vm583, %v735, 0
        %v744 = vsel %vm583, %v737, 0
        %v746 = vsel %vm583, %v739, 0
        %748 = vmatpush.xpose.msra.mxu0 0.0
        %749 = vmatpush.xpose.msra.mxu0 0.0
        %750 = vmatpush.xpose.msra.mxu0 0.0
        %751 = vmatpush.xpose.msra.mxu0 0.0
        %752 = vmatpush.xpose.msra.mxu0 0.0
        %753 = vmatpush.xpose.msra.mxu0 0.0
        %754 = vmatpush.xpose.msra.mxu0 0.0
        %755 = vmatpush.xpose.msra.mxu0 0.0
        %756 = vmatpush.xpose.msra.mxu0 0.0
        %757 = vmatpush.xpose.msra.mxu0 0.0
        %758 = vmatpush.xpose.msra.mxu0 0.0
        %759 = vmatpush.xpose.msra.mxu0 0.0
        %760 = vmatpush.xpose.msra.mxu0 0.0
        %761 = vmatpush.xpose.msra.mxu0 0.0
        %762 = vmatpush.xpose.msra.mxu0 %v746
        %763 = vmatpush.xpose.msra.mxu0 %v744
        %764 = vmatmul.f32.gmra.mxu0 %v740
        %v765 = vpop.f32.mrf.mxu0
        %v766 = vadd.f32 0.0, %v765
        %767 = vmatmul.f32.gmra.mxu0 %v742
        %v768 = vpop.f32.mrf.mxu0
        %v769 = vadd.f32 0.0, %v768
        %770 = vdwg.mxu0
        %771 = vrot.lane.b32.xlu0 %v572, 108
        %v772 = vpop.permute.xlu0 %771
        %773 = vrot.lane.b32.xlu0 %v575, 108
        %v774 = vpop.permute.xlu0 %773
        %775 = vrot.lane.b32.xlu0 %v572, 76
        %v776 = vpop.permute.xlu0 %775
        %777 = vrot.lane.b32.xlu0 %v575, 76
        %v778 = vpop.permute.xlu0 %777
        %v779 = vsel %vm583, %v772, 0
        %v781 = vsel %vm583, %v774, 0
        %v783 = vsel %vm583, %v776, 0
        %v785 = vsel %vm583, %v778, 0
        %787 = vmatpush.xpose.msra.mxu0 0.0
        %788 = vmatpush.xpose.msra.mxu0 0.0
        %789 = vmatpush.xpose.msra.mxu0 0.0
        %790 = vmatpush.xpose.msra.mxu0 0.0
        %791 = vmatpush.xpose.msra.mxu0 0.0
        %792 = vmatpush.xpose.msra.mxu0 0.0
        %793 = vmatpush.xpose.msra.mxu0 0.0
        %794 = vmatpush.xpose.msra.mxu0 0.0
        %795 = vmatpush.xpose.msra.mxu0 0.0
        %796 = vmatpush.xpose.msra.mxu0 0.0
        %797 = vmatpush.xpose.msra.mxu0 0.0
        %798 = vmatpush.xpose.msra.mxu0 0.0
        %799 = vmatpush.xpose.msra.mxu0 0.0
        %800 = vmatpush.xpose.msra.mxu0 0.0
        %801 = vmatpush.xpose.msra.mxu0 %v785
        %802 = vmatpush.xpose.msra.mxu0 %v783
        %803 = vmatmul.f32.gmra.mxu0 %v779
        %v804 = vpop.f32.mrf.mxu0
        %v805 = vadd.f32 0.0, %v804
        %806 = vmatmul.f32.gmra.mxu0 %v781
        %v807 = vpop.f32.mrf.mxu0
        %v808 = vadd.f32 0.0, %v807
        %809 = vdwg.mxu0
        %810 = vrot.lane.b32.xlu0 %v572, 104
        %v811 = vpop.permute.xlu0 %810
        %812 = vrot.lane.b32.xlu0 %v575, 104
        %v813 = vpop.permute.xlu0 %812
        %814 = vrot.lane.b32.xlu0 %v572, 72
        %v815 = vpop.permute.xlu0 %814
        %816 = vrot.lane.b32.xlu0 %v575, 72
        %v817 = vpop.permute.xlu0 %816
        %v818 = vsel %vm583, %v811, 0
        %v820 = vsel %vm583, %v813, 0
        %v822 = vsel %vm583, %v815, 0
        %v824 = vsel %vm583, %v817, 0
        %826 = vmatpush.xpose.msra.mxu0 0.0
        %827 = vmatpush.xpose.msra.mxu0 0.0
        %828 = vmatpush.xpose.msra.mxu0 0.0
        %829 = vmatpush.xpose.msra.mxu0 0.0
        %830 = vmatpush.xpose.msra.mxu0 0.0
        %831 = vmatpush.xpose.msra.mxu0 0.0
        %832 = vmatpush.xpose.msra.mxu0 0.0
        %833 = vmatpush.xpose.msra.mxu0 0.0
        %834 = vmatpush.xpose.msra.mxu0 0.0
        %835 = vmatpush.xpose.msra.mxu0 0.0
        %836 = vmatpush.xpose.msra.mxu0 0.0
        %837 = vmatpush.xpose.msra.mxu0 0.0
        %838 = vmatpush.xpose.msra.mxu0 0.0
        %839 = vmatpush.xpose.msra.mxu0 0.0
        %840 = vmatpush.xpose.msra.mxu0 %v824
        %841 = vmatpush.xpose.msra.mxu0 %v822
        %842 = vmatmul.f32.gmra.mxu0 %v818
        %v843 = vpop.f32.mrf.mxu0
        %v844 = vadd.f32 0.0, %v843
        %845 = vmatmul.f32.gmra.mxu0 %v820
        %v846 = vpop.f32.mrf.mxu0
        %v847 = vadd.f32 0.0, %v846
        %848 = vdwg.mxu0
        %849 = vrot.lane.b32.xlu0 %v572, 100
        %v850 = vpop.permute.xlu0 %849
        %851 = vrot.lane.b32.xlu0 %v575, 100
        %v852 = vpop.permute.xlu0 %851
        %853 = vrot.lane.b32.xlu0 %v572, 68
        %v854 = vpop.permute.xlu0 %853
        %855 = vrot.lane.b32.xlu0 %v575, 68
        %v856 = vpop.permute.xlu0 %855
        %v857 = vsel %vm583, %v850, 0
        %v859 = vsel %vm583, %v852, 0
        %v861 = vsel %vm583, %v854, 0
        %v863 = vsel %vm583, %v856, 0
        %865 = vmatpush.xpose.msra.mxu0 0.0
        %866 = vmatpush.xpose.msra.mxu0 0.0
        %867 = vmatpush.xpose.msra.mxu0 0.0
        %868 = vmatpush.xpose.msra.mxu0 0.0
        %869 = vmatpush.xpose.msra.mxu0 0.0
        %870 = vmatpush.xpose.msra.mxu0 0.0
        %871 = vmatpush.xpose.msra.mxu0 0.0
        %872 = vmatpush.xpose.msra.mxu0 0.0
        %873 = vmatpush.xpose.msra.mxu0 0.0
        %874 = vmatpush.xpose.msra.mxu0 0.0
        %875 = vmatpush.xpose.msra.mxu0 0.0
        %876 = vmatpush.xpose.msra.mxu0 0.0
        %877 = vmatpush.xpose.msra.mxu0 0.0
        %878 = vmatpush.xpose.msra.mxu0 0.0
        %879 = vmatpush.xpose.msra.mxu0 %v863
        %880 = vmatpush.xpose.msra.mxu0 %v861
        %881 = vmatmul.f32.gmra.mxu0 %v857
        %v882 = vpop.f32.mrf.mxu0
        %v883 = vadd.f32 0.0, %v882
        %884 = vmatmul.f32.gmra.mxu0 %v859
        %v885 = vpop.f32.mrf.mxu0
        %v886 = vadd.f32 0.0, %v885
        %887 = vdwg.mxu0
        %v888 = vmul.f32 %v610, 0.5
        %v889 = vmul.f32 %v613, 0.5
        %v890 = vmul.f32 %v649, 0.5
        %v891 = vmul.f32 %v652, 0.5
        %v892 = vmul.f32 %v688, 0.5
        %v893 = vmul.f32 %v691, 0.5
        %v894 = vmul.f32 %v727, 0.5
        %v895 = vmul.f32 %v730, 0.5
        %v896 = vmul.f32 %v766, 0.5
        %v897 = vmul.f32 %v769, 0.5
        %v898 = vmul.f32 %v805, 0.5
        %v899 = vmul.f32 %v808, 0.5
        %v900 = vmul.f32 %v844, 0.5
        %v901 = vmul.f32 %v847, 0.5
        %v902 = vmul.f32 %v883, 0.5
        %v903 = vmul.f32 %v886, 0.5
        %vm904 = vcmask 130048
        %v905 = vsel %vm904, %v888, -inf
        %906 = vmax.xlane.f32.xlu0 %v905
        %v907 = vpop.xlane.xlu0 %906
        %v908 = vsel %vm904, %v889, -inf
        %909 = vmax.xlane.f32.xlu0 %v908
        %v910 = vpop.xlane.xlu0 %909
        %v911 = vsel %vm904, %v890, -inf
        %912 = vmax.xlane.f32.xlu0 %v911
        %v913 = vpop.xlane.xlu0 %912
        %v914 = vsel %vm904, %v891, -inf
        %915 = vmax.xlane.f32.xlu0 %v914
        %v916 = vpop.xlane.xlu0 %915
        %v917 = vsel %vm904, %v892, -inf
        %918 = vmax.xlane.f32.xlu0 %v917
        %v919 = vpop.xlane.xlu0 %918
        %v920 = vsel %vm904, %v893, -inf
        %921 = vmax.xlane.f32.xlu0 %v920
        %v922 = vpop.xlane.xlu0 %921
        %v923 = vsel %vm904, %v894, -inf
        %924 = vmax.xlane.f32.xlu0 %v923
        %v925 = vpop.xlane.xlu0 %924
        %v926 = vsel %vm904, %v895, -inf
        %927 = vmax.xlane.f32.xlu0 %v926
        %v928 = vpop.xlane.xlu0 %927
        %v929 = vsel %vm904, %v896, -inf
        %930 = vmax.xlane.f32.xlu0 %v929
        %v931 = vpop.xlane.xlu0 %930
        %v932 = vsel %vm904, %v897, -inf
        %933 = vmax.xlane.f32.xlu0 %v932
        %v934 = vpop.xlane.xlu0 %933
        %v935 = vsel %vm904, %v898, -inf
        %936 = vmax.xlane.f32.xlu0 %v935
        %v937 = vpop.xlane.xlu0 %936
        %v938 = vsel %vm904, %v899, -inf
        %939 = vmax.xlane.f32.xlu0 %v938
        %v940 = vpop.xlane.xlu0 %939
        %v941 = vsel %vm904, %v900, -inf
        %942 = vmax.xlane.f32.xlu0 %v941
        %v943 = vpop.xlane.xlu0 %942
        %v944 = vsel %vm904, %v901, -inf
        %945 = vmax.xlane.f32.xlu0 %v944
        %v946 = vpop.xlane.xlu0 %945
        %v947 = vsel %vm904, %v902, -inf
        %948 = vmax.xlane.f32.xlu0 %v947
        %v949 = vpop.xlane.xlu0 %948
        %v950 = vsel %vm904, %v903, -inf
        %951 = vmax.xlane.f32.xlu0 %v950
        %v952 = vpop.xlane.xlu0 %951
        %v953 = vsub.f32 %v888, %v907
        %v954 = vsub.f32 %v889, %v910
        %v955 = vsub.f32 %v890, %v913
        %v956 = vsub.f32 %v891, %v916
        %v957 = vsub.f32 %v892, %v919
        %v958 = vsub.f32 %v893, %v922
        %v959 = vsub.f32 %v894, %v925
        %v960 = vsub.f32 %v895, %v928
        %v961 = vsub.f32 %v896, %v931
        %v962 = vsub.f32 %v897, %v934
        %v963 = vsub.f32 %v898, %v937
        %v964 = vsub.f32 %v899, %v940
        %v965 = vsub.f32 %v900, %v943
        %v966 = vsub.f32 %v901, %v946
        %v967 = vsub.f32 %v902, %v949
        %v968 = vsub.f32 %v903, %v952
        %v969 = vmul.f32 %v953, 1.442695
        %v970 = vpow.pop %v969
        %v971 = vmul.f32 %v954, 1.442695
        %v972 = vpow.pop %v971
        %v973 = vmul.f32 %v955, 1.442695
        %v974 = vpow.pop %v973
        %v975 = vmul.f32 %v956, 1.442695
        %v976 = vpow.pop %v975
        %v977 = vmul.f32 %v957, 1.442695
        %v978 = vpow.pop %v977
        %v979 = vmul.f32 %v958, 1.442695
        %v980 = vpow.pop %v979
        %v981 = vmul.f32 %v959, 1.442695
        %v982 = vpow.pop %v981
        %v983 = vmul.f32 %v960, 1.442695
        %v984 = vpow.pop %v983
        %v985 = vmul.f32 %v961, 1.442695
        %v986 = vpow.pop %v985
        %v987 = vmul.f32 %v962, 1.442695
        %v988 = vpow.pop %v987
        %v989 = vmul.f32 %v963, 1.442695
        %v990 = vpow.pop %v989
        %v991 = vmul.f32 %v964, 1.442695
        %v992 = vpow.pop %v991
        %v993 = vmul.f32 %v965, 1.442695
        %v994 = vpow.pop %v993
        %v995 = vmul.f32 %v966, 1.442695
        %v996 = vpow.pop %v995
        %v997 = vmul.f32 %v967, 1.442695
        %v998 = vpow.pop %v997
        %v999 = vmul.f32 %v968, 1.442695
        %v1000 = vpow.pop %v999
        %v1001 = vsel %vm904, %v970, 0.0
        %1002 = vadd.xlane.f32.xlu0 %v1001
        %v1003 = vpop.xlane.xlu0 %1002
        %v1004 = vsel %vm904, %v972, 0.0
        %1005 = vadd.xlane.f32.xlu0 %v1004
        %v1006 = vpop.xlane.xlu0 %1005
        %v1007 = vsel %vm904, %v974, 0.0
        %1008 = vadd.xlane.f32.xlu0 %v1007
        %v1009 = vpop.xlane.xlu0 %1008
        %v1010 = vsel %vm904, %v976, 0.0
        %1011 = vadd.xlane.f32.xlu0 %v1010
        %v1012 = vpop.xlane.xlu0 %1011
        %v1013 = vsel %vm904, %v978, 0.0
        %1014 = vadd.xlane.f32.xlu0 %v1013
        %v1015 = vpop.xlane.xlu0 %1014
        %v1016 = vsel %vm904, %v980, 0.0
        %1017 = vadd.xlane.f32.xlu0 %v1016
        %v1018 = vpop.xlane.xlu0 %1017
        %v1019 = vsel %vm904, %v982, 0.0
        %1020 = vadd.xlane.f32.xlu0 %v1019
        %v1021 = vpop.xlane.xlu0 %1020
        %v1022 = vsel %vm904, %v984, 0.0
        %1023 = vadd.xlane.f32.xlu0 %v1022
        %v1024 = vpop.xlane.xlu0 %1023
        %v1025 = vsel %vm904, %v986, 0.0
        %1026 = vadd.xlane.f32.xlu0 %v1025
        %v1027 = vpop.xlane.xlu0 %1026
        %v1028 = vsel %vm904, %v988, 0.0
        %1029 = vadd.xlane.f32.xlu0 %v1028
        %v1030 = vpop.xlane.xlu0 %1029
        %v1031 = vsel %vm904, %v990, 0.0
        %1032 = vadd.xlane.f32.xlu0 %v1031
        %v1033 = vpop.xlane.xlu0 %1032
        %v1034 = vsel %vm904, %v992, 0.0
        %1035 = vadd.xlane.f32.xlu0 %v1034
        %v1036 = vpop.xlane.xlu0 %1035
        %v1037 = vsel %vm904, %v994, 0.0
        %1038 = vadd.xlane.f32.xlu0 %v1037
        %v1039 = vpop.xlane.xlu0 %1038
        %v1040 = vsel %vm904, %v996, 0.0
        %1041 = vadd.xlane.f32.xlu0 %v1040
        %v1042 = vpop.xlane.xlu0 %1041
        %v1043 = vsel %vm904, %v998, 0.0
        %1044 = vadd.xlane.f32.xlu0 %v1043
        %v1045 = vpop.xlane.xlu0 %1044
        %v1046 = vsel %vm904, %v1000, 0.0
        %1047 = vadd.xlane.f32.xlu0 %v1046
        %v1048 = vpop.xlane.xlu0 %1047
        %v1049 = vrcp.pop %v1003
        %v1050 = vrcp.pop %v1006
        %v1051 = vrcp.pop %v1009
        %v1052 = vrcp.pop %v1012
        %v1053 = vrcp.pop %v1015
        %v1054 = vrcp.pop %v1018
        %v1055 = vrcp.pop %v1021
        %v1056 = vrcp.pop %v1024
        %v1057 = vrcp.pop %v1027
        %v1058 = vrcp.pop %v1030
        %v1059 = vrcp.pop %v1033
        %v1060 = vrcp.pop %v1036
        %v1061 = vrcp.pop %v1039
        %v1062 = vrcp.pop %v1042
        %v1063 = vrcp.pop %v1045
        %v1064 = vrcp.pop %v1048
        %v1065 = vmul.f32 %v970, %v1049
        %v1066 = vmul.f32 %v972, %v1050
        %v1067 = vmul.f32 %v974, %v1051
        %v1068 = vmul.f32 %v976, %v1052
        %v1069 = vmul.f32 %v978, %v1053
        %v1070 = vmul.f32 %v980, %v1054
        %v1071 = vmul.f32 %v982, %v1055
        %v1072 = vmul.f32 %v984, %v1056
        %v1073 = vmul.f32 %v986, %v1057
        %v1074 = vmul.f32 %v988, %v1058
        %v1075 = vmul.f32 %v990, %v1059
        %v1076 = vmul.f32 %v992, %v1060
        %v1077 = vmul.f32 %v994, %v1061
        %v1078 = vmul.f32 %v996, %v1062
        %v1079 = vmul.f32 %v998, %v1063
        %v1080 = vmul.f32 %v1000, %v1064
        %1081 = vrot.lane.b32.xlu0 %v572, 64
        %v1082 = vpop.permute.xlu0 %1081
        %1083 = vrot.lane.b32.xlu0 %v575, 64
        %v1084 = vpop.permute.xlu0 %1083
        %v1088 = vsel %vm904, %v1065, 0
        %v1091 = vsel %vm904, %v1066, 0
        %1093 = vmatpush.msra.mxu0 0.0
        %1094 = vmatpush.msra.mxu0 0.0
        %1095 = vmatpush.msra.mxu0 0.0
        %1096 = vmatpush.msra.mxu0 0.0
        %1097 = vmatpush.msra.mxu0 0.0
        %1098 = vmatpush.msra.mxu0 0.0
        %1099 = vmatpush.msra.mxu0 0.0
        %1100 = vmatpush.msra.mxu0 0.0
        %1101 = vmatpush.msra.mxu0 0.0
        %1102 = vmatpush.msra.mxu0 0.0
        %1103 = vmatpush.msra.mxu0 0.0
        %1104 = vmatpush.msra.mxu0 0.0
        %1105 = vmatpush.msra.mxu0 0.0
        %1106 = vmatpush.msra.mxu0 0.0
        %1107 = vmatpush.msra.mxu0 %v1084
        %1108 = vmatpush.msra.mxu0 %v1082
        %1109 = vmatmul.f32.gmra.mxu0 %v1088
        %v1110 = vpop.f32.mrf.mxu0
        %v1111 = vadd.f32 0.0, %v1110
        %1112 = vmatmul.f32.gmra.mxu0 %v1091
        %v1113 = vpop.f32.mrf.mxu0
        %v1114 = vadd.f32 0.0, %v1113
        %1115 = vdwg.mxu0
        %1116 = vst.msk [vmem:[#allocation2] sm:$0xff] %vm583, %v1111
        %1117 = vst.msk [vmem:[#allocation2 + $0x8] sm:$0xff] %vm583, %v1114
        %1118 = vrot.lane.b32.xlu0 %v572, 60
        %v1119 = vpop.permute.xlu0 %1118
        %1120 = vrot.lane.b32.xlu0 %v575, 60
        %v1121 = vpop.permute.xlu0 %1120
        %v1125 = vsel %vm904, %v1067, 0
        %v1128 = vsel %vm904, %v1068, 0
        %1130 = vmatpush.msra.mxu0 0.0
        %1131 = vmatpush.msra.mxu0 0.0
        %1132 = vmatpush.msra.mxu0 0.0
        %1133 = vmatpush.msra.mxu0 0.0
        %1134 = vmatpush.msra.mxu0 0.0
        %1135 = vmatpush.msra.mxu0 0.0
        %1136 = vmatpush.msra.mxu0 0.0
        %1137 = vmatpush.msra.mxu0 0.0
        %1138 = vmatpush.msra.mxu0 0.0
        %1139 = vmatpush.msra.mxu0 0.0
        %1140 = vmatpush.msra.mxu0 0.0
        %1141 = vmatpush.msra.mxu0 0.0
        %1142 = vmatpush.msra.mxu0 0.0
        %1143 = vmatpush.msra.mxu0 0.0
        %1144 = vmatpush.msra.mxu0 %v1121
        %1145 = vmatpush.msra.mxu0 %v1119
        %1146 = vmatmul.f32.gmra.mxu0 %v1125
        %v1147 = vpop.f32.mrf.mxu0
        %v1148 = vadd.f32 0.0, %v1147
        %1149 = vmatmul.f32.gmra.mxu0 %v1128
        %v1150 = vpop.f32.mrf.mxu0
        %v1151 = vadd.f32 0.0, %v1150
        %1152 = vdwg.mxu0
        %1155 = vrot.lane.b32.xlu0 %v1148, 4
        %v1156 = vpop.permute.xlu0 %1155
        %1157 = vrot.lane.b32.xlu0 %v1151, 4
        %v1158 = vpop.permute.xlu0 %1157
        %vm1161 = vcmask 64544
        %1162 = vst.msk [vmem:[#allocation2] sm:$0xff] %vm1161, %v1156
        %1163 = vst.msk [vmem:[#allocation2 + $0x8] sm:$0xff] %vm1161, %v1158
        %1164 = vrot.lane.b32.xlu0 %v572, 56
        %v1165 = vpop.permute.xlu0 %1164
        %1166 = vrot.lane.b32.xlu0 %v575, 56
        %v1167 = vpop.permute.xlu0 %1166
        %v1171 = vsel %vm904, %v1069, 0
        %v1174 = vsel %vm904, %v1070, 0
        %1176 = vmatpush.msra.mxu0 0.0
        %1177 = vmatpush.msra.mxu0 0.0
        %1178 = vmatpush.msra.mxu0 0.0
        %1179 = vmatpush.msra.mxu0 0.0
        %1180 = vmatpush.msra.mxu0 0.0
        %1181 = vmatpush.msra.mxu0 0.0
        %1182 = vmatpush.msra.mxu0 0.0
        %1183 = vmatpush.msra.mxu0 0.0
        %1184 = vmatpush.msra.mxu0 0.0
        %1185 = vmatpush.msra.mxu0 0.0
        %1186 = vmatpush.msra.mxu0 0.0
        %1187 = vmatpush.msra.mxu0 0.0
        %1188 = vmatpush.msra.mxu0 0.0
        %1189 = vmatpush.msra.mxu0 0.0
        %1190 = vmatpush.msra.mxu0 %v1167
        %1191 = vmatpush.msra.mxu0 %v1165
        %1192 = vmatmul.f32.gmra.mxu0 %v1171
        %v1193 = vpop.f32.mrf.mxu0
        %v1194 = vadd.f32 0.0, %v1193
        %1195 = vmatmul.f32.gmra.mxu0 %v1174
        %v1196 = vpop.f32.mrf.mxu0
        %v1197 = vadd.f32 0.0, %v1196
        %1198 = vdwg.mxu0
        %1201 = vrot.lane.b32.xlu0 %v1194, 8
        %v1202 = vpop.permute.xlu0 %1201
        %1203 = vrot.lane.b32.xlu0 %v1197, 8
        %v1204 = vpop.permute.xlu0 %1203
        %vm1207 = vcmask 97344
        %1208 = vst.msk [vmem:[#allocation2] sm:$0xff] %vm1207, %v1202
        %1209 = vst.msk [vmem:[#allocation2 + $0x8] sm:$0xff] %vm1207, %v1204
        %1210 = vrot.lane.b32.xlu0 %v572, 52
        %v1211 = vpop.permute.xlu0 %1210
        %1212 = vrot.lane.b32.xlu0 %v575, 52
        %v1213 = vpop.permute.xlu0 %1212
        %v1217 = vsel %vm904, %v1071, 0
        %v1220 = vsel %vm904, %v1072, 0
        %1222 = vmatpush.msra.mxu0 0.0
        %1223 = vmatpush.msra.mxu0 0.0
        %1224 = vmatpush.msra.mxu0 0.0
        %1225 = vmatpush.msra.mxu0 0.0
        %1226 = vmatpush.msra.mxu0 0.0
        %1227 = vmatpush.msra.mxu0 0.0
        %1228 = vmatpush.msra.mxu0 0.0
        %1229 = vmatpush.msra.mxu0 0.0
        %1230 = vmatpush.msra.mxu0 0.0
        %1231 = vmatpush.msra.mxu0 0.0
        %1232 = vmatpush.msra.mxu0 0.0
        %1233 = vmatpush.msra.mxu0 0.0
        %1234 = vmatpush.msra.mxu0 0.0
        %1235 = vmatpush.msra.mxu0 0.0
        %1236 = vmatpush.msra.mxu0 %v1213
        %1237 = vmatpush.msra.mxu0 %v1211
        %1238 = vmatmul.f32.gmra.mxu0 %v1217
        %v1239 = vpop.f32.mrf.mxu0
        %v1240 = vadd.f32 0.0, %v1239
        %1241 = vmatmul.f32.gmra.mxu0 %v1220
        %v1242 = vpop.f32.mrf.mxu0
        %v1243 = vadd.f32 0.0, %v1242
        %1244 = vdwg.mxu0
        %1247 = vrot.lane.b32.xlu0 %v1240, 12
        %v1248 = vpop.permute.xlu0 %1247
        %1249 = vrot.lane.b32.xlu0 %v1243, 12
        %v1250 = vpop.permute.xlu0 %1249
        %vm1253 = vcmask 130144
        %1254 = vst.msk [vmem:[#allocation2] sm:$0xff] %vm1253, %v1248
        %1255 = vst.msk [vmem:[#allocation2 + $0x8] sm:$0xff] %vm1253, %v1250
        %1256 = vrot.lane.b32.xlu0 %v572, 48
        %v1257 = vpop.permute.xlu0 %1256
        %1258 = vrot.lane.b32.xlu0 %v575, 48
        %v1259 = vpop.permute.xlu0 %1258
        %v1263 = vsel %vm904, %v1073, 0
        %v1266 = vsel %vm904, %v1074, 0
        %1268 = vmatpush.msra.mxu0 0.0
        %1269 = vmatpush.msra.mxu0 0.0
        %1270 = vmatpush.msra.mxu0 0.0
        %1271 = vmatpush.msra.mxu0 0.0
        %1272 = vmatpush.msra.mxu0 0.0
        %1273 = vmatpush.msra.mxu0 0.0
        %1274 = vmatpush.msra.mxu0 0.0
        %1275 = vmatpush.msra.mxu0 0.0
        %1276 = vmatpush.msra.mxu0 0.0
        %1277 = vmatpush.msra.mxu0 0.0
        %1278 = vmatpush.msra.mxu0 0.0
        %1279 = vmatpush.msra.mxu0 0.0
        %1280 = vmatpush.msra.mxu0 0.0
        %1281 = vmatpush.msra.mxu0 0.0
        %1282 = vmatpush.msra.mxu0 %v1259
        %1283 = vmatpush.msra.mxu0 %v1257
        %1284 = vmatmul.f32.gmra.mxu0 %v1263
        %v1285 = vpop.f32.mrf.mxu0
        %v1286 = vadd.f32 0.0, %v1285
        %1287 = vmatmul.f32.gmra.mxu0 %v1266
        %v1288 = vpop.f32.mrf.mxu0
        %v1289 = vadd.f32 0.0, %v1288
        %1290 = vdwg.mxu0
        %1293 = vrot.lane.b32.xlu0 %v1286, 16
        %v1294 = vpop.permute.xlu0 %1293
        %1295 = vrot.lane.b32.xlu0 %v1289, 16
        %v1296 = vpop.permute.xlu0 %1295
        %vm1299 = vcmask 162944
        %1300 = vst.msk [vmem:[#allocation2] sm:$0xff] %vm1299, %v1294
        %1301 = vst.msk [vmem:[#allocation2 + $0x8] sm:$0xff] %vm1299, %v1296
        %1302 = vrot.lane.b32.xlu0 %v572, 44
        %v1303 = vpop.permute.xlu0 %1302
        %1304 = vrot.lane.b32.xlu0 %v575, 44
        %v1305 = vpop.permute.xlu0 %1304
        %v1309 = vsel %vm904, %v1075, 0
        %v1312 = vsel %vm904, %v1076, 0
        %1314 = vmatpush.msra.mxu0 0.0
        %1315 = vmatpush.msra.mxu0 0.0
        %1316 = vmatpush.msra.mxu0 0.0
        %1317 = vmatpush.msra.mxu0 0.0
        %1318 = vmatpush.msra.mxu0 0.0
        %1319 = vmatpush.msra.mxu0 0.0
        %1320 = vmatpush.msra.mxu0 0.0
        %1321 = vmatpush.msra.mxu0 0.0
        %1322 = vmatpush.msra.mxu0 0.0
        %1323 = vmatpush.msra.mxu0 0.0
        %1324 = vmatpush.msra.mxu0 0.0
        %1325 = vmatpush.msra.mxu0 0.0
        %1326 = vmatpush.msra.mxu0 0.0
        %1327 = vmatpush.msra.mxu0 0.0
        %1328 = vmatpush.msra.mxu0 %v1305
        %1329 = vmatpush.msra.mxu0 %v1303
        %1330 = vmatmul.f32.gmra.mxu0 %v1309
        %v1331 = vpop.f32.mrf.mxu0
        %v1332 = vadd.f32 0.0, %v1331
        %1333 = vmatmul.f32.gmra.mxu0 %v1312
        %v1334 = vpop.f32.mrf.mxu0
        %v1335 = vadd.f32 0.0, %v1334
        %1336 = vdwg.mxu0
        %1339 = vrot.lane.b32.xlu0 %v1332, 20
        %v1340 = vpop.permute.xlu0 %1339
        %1341 = vrot.lane.b32.xlu0 %v1335, 20
        %v1342 = vpop.permute.xlu0 %1341
        %vm1345 = vcmask 195744
        %1346 = vst.msk [vmem:[#allocation2] sm:$0xff] %vm1345, %v1340
        %1347 = vst.msk [vmem:[#allocation2 + $0x8] sm:$0xff] %vm1345, %v1342
        %1348 = vrot.lane.b32.xlu0 %v572, 40
        %v1349 = vpop.permute.xlu0 %1348
        %1350 = vrot.lane.b32.xlu0 %v575, 40
        %v1351 = vpop.permute.xlu0 %1350
        %v1355 = vsel %vm904, %v1077, 0
        %v1358 = vsel %vm904, %v1078, 0
        %1360 = vmatpush.msra.mxu0 0.0
        %1361 = vmatpush.msra.mxu0 0.0
        %1362 = vmatpush.msra.mxu0 0.0
        %1363 = vmatpush.msra.mxu0 0.0
        %1364 = vmatpush.msra.mxu0 0.0
        %1365 = vmatpush.msra.mxu0 0.0
        %1366 = vmatpush.msra.mxu0 0.0
        %1367 = vmatpush.msra.mxu0 0.0
        %1368 = vmatpush.msra.mxu0 0.0
        %1369 = vmatpush.msra.mxu0 0.0
        %1370 = vmatpush.msra.mxu0 0.0
        %1371 = vmatpush.msra.mxu0 0.0
        %1372 = vmatpush.msra.mxu0 0.0
        %1373 = vmatpush.msra.mxu0 0.0
        %1374 = vmatpush.msra.mxu0 %v1351
        %1375 = vmatpush.msra.mxu0 %v1349
        %1376 = vmatmul.f32.gmra.mxu0 %v1355
        %v1377 = vpop.f32.mrf.mxu0
        %v1378 = vadd.f32 0.0, %v1377
        %1379 = vmatmul.f32.gmra.mxu0 %v1358
        %v1380 = vpop.f32.mrf.mxu0
        %v1381 = vadd.f32 0.0, %v1380
        %1382 = vdwg.mxu0
        %1385 = vrot.lane.b32.xlu0 %v1378, 24
        %v1386 = vpop.permute.xlu0 %1385
        %1387 = vrot.lane.b32.xlu0 %v1381, 24
        %v1388 = vpop.permute.xlu0 %1387
        %vm1391 = vcmask 228544
        %1392 = vst.msk [vmem:[#allocation2] sm:$0xff] %vm1391, %v1386
        %1393 = vst.msk [vmem:[#allocation2 + $0x8] sm:$0xff] %vm1391, %v1388
        %1394 = vrot.lane.b32.xlu0 %v572, 36
        %v1395 = vpop.permute.xlu0 %1394
        %1396 = vrot.lane.b32.xlu0 %v575, 36
        %v1397 = vpop.permute.xlu0 %1396
        %v1401 = vsel %vm904, %v1079, 0
        %v1404 = vsel %vm904, %v1080, 0
        %1406 = vmatpush.msra.mxu0 0.0
        %1407 = vmatpush.msra.mxu0 0.0
        %1408 = vmatpush.msra.mxu0 0.0
        %1409 = vmatpush.msra.mxu0 0.0
        %1410 = vmatpush.msra.mxu0 0.0
        %1411 = vmatpush.msra.mxu0 0.0
        %1412 = vmatpush.msra.mxu0 0.0
        %1413 = vmatpush.msra.mxu0 0.0
        %1414 = vmatpush.msra.mxu0 0.0
        %1415 = vmatpush.msra.mxu0 0.0
        %1416 = vmatpush.msra.mxu0 0.0
        %1417 = vmatpush.msra.mxu0 0.0
        %1418 = vmatpush.msra.mxu0 0.0
        %1419 = vmatpush.msra.mxu0 0.0
        %1420 = vmatpush.msra.mxu0 %v1397
        %1421 = vmatpush.msra.mxu0 %v1395
        %1422 = vmatmul.f32.gmra.mxu0 %v1401
        %v1423 = vpop.f32.mrf.mxu0
        %v1424 = vadd.f32 0.0, %v1423
        %1425 = vmatmul.f32.gmra.mxu0 %v1404
        %v1426 = vpop.f32.mrf.mxu0
        %v1427 = vadd.f32 0.0, %v1426
        %1428 = vdwg.mxu0
        %1431 = vrot.lane.b32.xlu0 %v1424, 28
        %v1432 = vpop.permute.xlu0 %1431
        %1433 = vrot.lane.b32.xlu0 %v1427, 28
        %v1434 = vpop.permute.xlu0 %1433
        %vm1437 = vcmask 261344
        %1438 = vst.msk [vmem:[#allocation2] sm:$0xff] %vm1437, %v1432
        %1439 = vst.msk [vmem:[#allocation2 + $0x8] sm:$0xff] %vm1437, %v1434
        %v1440 = vld [vmem:[#allocation2] sm:$0xff]
        %v1441 = vld [vmem:[#allocation2 + $0x8] sm:$0xff]
        %v1443 = vperm.slane %v507, 0
        %v1446 = vsel %vm511, %v1440, 0
        %v1449 = vsel %vm511, %v1441, 0
        %v1452 = vsel %vm511, %v503, 0
        %v1455 = vsel %vm511, %v504, 0
        %v1458 = vsel %vm511, %v505, 0
        %v1461 = vsel %vm511, %v506, 0
        %1463 = vmatpush.xpose.msra.mxu0 0.0
        %1464 = vmatpush.xpose.msra.mxu0 0.0
        %1465 = vmatpush.xpose.msra.mxu0 0.0
        %1466 = vmatpush.xpose.msra.mxu0 0.0
        %1467 = vmatpush.xpose.msra.mxu0 0.0
        %1468 = vmatpush.xpose.msra.mxu0 0.0
        %1469 = vmatpush.xpose.msra.mxu0 0.0
        %1470 = vmatpush.xpose.msra.mxu0 0.0
        %1471 = vmatpush.xpose.msra.mxu0 0.0
        %1472 = vmatpush.xpose.msra.mxu0 0.0
        %1473 = vmatpush.xpose.msra.mxu0 0.0
        %1474 = vmatpush.xpose.msra.mxu0 0.0
        %1475 = vmatpush.xpose.msra.mxu0 %v1461
        %1476 = vmatpush.xpose.msra.mxu0 %v1458
        %1477 = vmatpush.xpose.msra.mxu0 %v1455
        %1478 = vmatpush.xpose.msra.mxu0 %v1452
        %1479 = vmatmul.f32.gmra.mxu0 %v1446
        %v1480 = vpop.f32.mrf.mxu0
        %v1481 = vadd.f32 %v1443, %v1480
        %1482 = vmatmul.f32.gmra.mxu0 %v1449
        %v1483 = vpop.f32.mrf.mxu0
        %1484 = vdwg.mxu0
        %v1485 = vadd.f32 %v486, %v1481
        %v1486 = vld [vmem:[%s10] sm:$0xff]
        %v1487 = vld [vmem:[%s10 + $0x8] sm:$0xff]
        %v1488 = vld [vmem:[%s10 + $0x10] sm:$0xff]
        %v1489 = vld [vmem:[%s10 + $0x18] sm:$0xff]
        %v1490 = vld [vmem:[%s10 + $0x20] sm:$0xff]
        %v1491 = vld [vmem:[%s10 + $0x28] sm:$0xff]
        %v1492 = vld [vmem:[%s10 + $0x30] sm:$0xff]
        %v1493 = vld [vmem:[%s10 + $0x38] sm:$0xff]
        %v1494 = vld [vmem:[%s11] sm:$0x1]
        %v1496 = vperm.slane %v1494, 0
        %v1499 = vsel %vm511, %v1485, 0
        %v1502 = vsel %vm511, %v1486, 0
        %v1505 = vsel %vm511, %v1487, 0
        %v1508 = vsel %vm511, %v1488, 0
        %v1511 = vsel %vm511, %v1489, 0
        %v1514 = vsel %vm511, %v1490, 0
        %v1517 = vsel %vm511, %v1491, 0
        %v1520 = vsel %vm511, %v1492, 0
        %v1523 = vsel %vm511, %v1493, 0
        %1525 = vmatpush.xpose.msra.mxu0 0.0
        %1526 = vmatpush.xpose.msra.mxu0 0.0
        %1527 = vmatpush.xpose.msra.mxu0 0.0
        %1528 = vmatpush.xpose.msra.mxu0 0.0
        %1529 = vmatpush.xpose.msra.mxu0 0.0
        %1530 = vmatpush.xpose.msra.mxu0 0.0
        %1531 = vmatpush.xpose.msra.mxu0 0.0
        %1532 = vmatpush.xpose.msra.mxu0 0.0
        %1533 = vmatpush.xpose.msra.mxu0 %v1523
        %1534 = vmatpush.xpose.msra.mxu0 %v1520
        %1535 = vmatpush.xpose.msra.mxu0 %v1517
        %1536 = vmatpush.xpose.msra.mxu0 %v1514
        %1537 = vmatpush.xpose.msra.mxu0 %v1511
        %1538 = vmatpush.xpose.msra.mxu0 %v1508
        %1539 = vmatpush.xpose.msra.mxu0 %v1505
        %1540 = vmatpush.xpose.msra.mxu0 %v1502
        %1541 = vmatmul.f32.gmra.mxu0 %v1499
        %v1542 = vpop.f32.mrf.mxu0
        %v1543 = vadd.f32 %v1496, %v1542
        %1544 = vdwg.mxu0
        %v1545 = vmul.f32 %v1543, 0.5
        %v1546 = vmul.f32 %v1543, 0.044715
        %v1547 = vmul.f32 %v1546, %v1543
        %v1548 = vmul.f32 %v1547, %v1543
        %v1549 = vadd.f32 %v1543, %v1548
        %v1550 = vmul.f32 %v1549, 0.7978846
        %v1551 = vtanh.pop %v1550
        %v1552 = vadd.f32 %v1551, 1.0
        %v1553 = vmul.f32 %v1545, %v1552
        %v1554 = vld [vmem:[%s6] sm:$0xff]
        %v1555 = vld [vmem:[%s6 + $0x8] sm:$0xff]
        %v1556 = vld [vmem:[%s6 + $0x10] sm:$0xff]
        %v1557 = vld [vmem:[%s6 + $0x18] sm:$0xff]
        %v1558 = vld [vmem:[%s6 + $0x20] sm:$0xff]
        %v1559 = vld [vmem:[%s6 + $0x28] sm:$0xff]
        %v1560 = vld [vmem:[%s6 + $0x30] sm:$0xff]
        %v1561 = vld [vmem:[%s6 + $0x38] sm:$0xff]
        %v1562 = vld [vmem:[%s6 + $0x40] sm:$0xff]
        %v1563 = vld [vmem:[%s6 + $0x48] sm:$0xff]
        %v1564 = vld [vmem:[%s6 + $0x50] sm:$0xff]
        %v1565 = vld [vmem:[%s6 + $0x58] sm:$0xff]
        %v1566 = vld [vmem:[%s6 + $0x60] sm:$0xff]
        %v1567 = vld [vmem:[%s6 + $0x68] sm:$0xff]
        %v1568 = vld [vmem:[%s6 + $0x70] sm:$0xff]
        %v1569 = vld [vmem:[%s6 + $0x78] sm:$0xff]
        %v1570 = vld [vmem:[%s6 + $0x80] sm:$0xff]
        %v1571 = vld [vmem:[%s6 + $0x88] sm:$0xff]
        %v1572 = vld [vmem:[%s6 + $0x90] sm:$0xff]
        %v1573 = vld [vmem:[%s6 + $0x98] sm:$0xff]
        %v1574 = vld [vmem:[%s6 + $0xa0] sm:$0xff]
        %v1575 = vld [vmem:[%s6 + $0xa8] sm:$0xff]
        %v1576 = vld [vmem:[%s6 + $0xb0] sm:$0xff]
        %v1577 = vld [vmem:[%s6 + $0xb8] sm:$0xff]
        %v1578 = vld [vmem:[%s7] sm:$0x3]
        %v1579 = vld [vmem:[%s8] sm:$0xff]
        %v1580 = vld [vmem:[%s8 + $0x8] sm:$0xff]
        %v1581 = vld [vmem:[%s8 + $0x10] sm:$0xff]
        %v1582 = vld [vmem:[%s8 + $0x18] sm:$0xff]
        %v1583 = vld [vmem:[%s8 + $0x20] sm:$0xff]
        %v1584 = vld [vmem:[%s8 + $0x28] sm:$0xff]
        %v1585 = vld [vmem:[%s8 + $0x30] sm:$0xff]
        %v1586 = vld [vmem:[%s8 + $0x38] sm:$0xff]
        %v1587 = vld [vmem:[%s9] sm:$0x1]
        %v1589 = vperm.slane %v1578, 0
        %vm1591 = vcmask 523264
        %v1593 = vsel %vm1591, %v1553, 0
        %v1596 = vsel %vm1591, %v1554, 0
        %v1599 = vsel %vm1591, %v1555, 0
        %v1602 = vsel %vm1591, %v1556, 0
        %v1605 = vsel %vm1591, %v1557, 0
        %v1608 = vsel %vm1591, %v1558, 0
        %v1611 = vsel %vm1591, %v1559, 0
        %v1614 = vsel %vm1591, %v1560, 0
        %v1617 = vsel %vm1591, %v1561, 0
        %1619 = vmatpush.xpose.msra.mxu0 0.0
        %1620 = vmatpush.xpose.msra.mxu0 0.0
        %1621 = vmatpush.xpose.msra.mxu0 0.0
        %1622 = vmatpush.xpose.msra.mxu0 0.0
        %1623 = vmatpush.xpose.msra.mxu0 0.0
        %1624 = vmatpush.xpose.msra.mxu0 0.0
        %1625 = vmatpush.xpose.msra.mxu0 0.0
        %1626 = vmatpush.xpose.msra.mxu0 0.0
        %1627 = vmatpush.xpose.msra.mxu0 %v1617
        %1628 = vmatpush.xpose.msra.mxu0 %v1614
        %1629 = vmatpush.xpose.msra.mxu0 %v1611
        %1630 = vmatpush.xpose.msra.mxu0 %v1608
        %1631 = vmatpush.xpose.msra.mxu0 %v1605
        %1632 = vmatpush.xpose.msra.mxu0 %v1602
        %1633 = vmatpush.xpose.msra.mxu0 %v1599
        %1634 = vmatpush.xpose.msra.mxu0 %v1596
        %1635 = vmatmul.f32.gmra.mxu0 %v1593
        %v1636 = vpop.f32.mrf.mxu0
        %v1637 = vadd.f32 %v1589, %v1636
        %1638 = vdwg.mxu0
        %v1639 = vperm.slane %v1578, 1
        %1640 = vrot.lane.b32.xlu0 %v1589, 64
        %v1641 = vpop.permute.xlu0 %1640
        %1642 = vrot.lane.b32.xlu0 %v1639, 64
        %v1643 = vpop.permute.xlu0 %1642
        %v1644 = vsel %vm1591, %v1641, %v1643
        %v1647 = vsel %vm1591, %v488, 0
        %v1650 = vsel %vm1591, %v489, 0
        %v1653 = vsel %vm1591, %v1562, 0
        %v1656 = vsel %vm1591, %v1563, 0
        %v1659 = vsel %vm1591, %v1564, 0
        %v1662 = vsel %vm1591, %v1565, 0
        %v1665 = vsel %vm1591, %v1566, 0
        %v1668 = vsel %vm1591, %v1567, 0
        %v1671 = vsel %vm1591, %v1568, 0
        %v1674 = vsel %vm1591, %v1569, 0
        %v1677 = vsel %vm1591, %v1570, 0
        %v1680 = vsel %vm1591, %v1571, 0
        %v1683 = vsel %vm1591, %v1572, 0
        %v1686 = vsel %vm1591, %v1573, 0
        %v1689 = vsel %vm1591, %v1574, 0
        %v1692 = vsel %vm1591, %v1575, 0
        %v1695 = vsel %vm1591, %v1576, 0
        %v1698 = vsel %vm1591, %v1577, 0
        %1700 = vmatpush.xpose.msra.mxu0 %v1698
        %1701 = vmatpush.xpose.msra.mxu0 %v1695
        %1702 = vmatpush.xpose.msra.mxu0 %v1692
        %1703 = vmatpush.xpose.msra.mxu0 %v1689
        %1704 = vmatpush.xpose.msra.mxu0 %v1686
        %1705 = vmatpush.xpose.msra.mxu0 %v1683
        %1706 = vmatpush.xpose.msra.mxu0 %v1680
        %1707 = vmatpush.xpose.msra.mxu0 %v1677
        %1708 = vmatpush.xpose.msra.mxu0 %v1674
        %1709 = vmatpush.xpose.msra.mxu0 %v1671
        %1710 = vmatpush.xpose.msra.mxu0 %v1668
        %1711 = vmatpush.xpose.msra.mxu0 %v1665
        %1712 = vmatpush.xpose.msra.mxu0 %v1662
        %1713 = vmatpush.xpose.msra.mxu0 %v1659
        %1714 = vmatpush.xpose.msra.mxu0 %v1656
        %1715 = vmatpush.xpose.msra.mxu0 %v1653
        %1716 = vmatmul.f32.gmra.mxu0 %v1647
        %v1717 = vpop.f32.mrf.mxu0
        %v1718 = vadd.f32 %v1644, %v1717
        %1719 = vmatmul.f32.gmra.mxu0 %v1650
        %v1720 = vpop.f32.mrf.mxu0
        %v1721 = vadd.f32 %v1644, %v1720
        %1722 = vdwg.mxu0
        %vm1723 = vcmask 64512
        %v1725 = vsel %vm1723, %v1637, 0
        %v1728 = vsel %vm1723, %v1718, 0
        %v1731 = vsel %vm1723, %v1721, 0
        %1733 = vmatpush.xpose.msra.mxu0 0.0
        %1734 = vmatpush.xpose.msra.mxu0 0.0
        %1735 = vmatpush.xpose.msra.mxu0 0.0
        %1736 = vmatpush.xpose.msra.mxu0 0.0
        %1737 = vmatpush.xpose.msra.mxu0 0.0
        %1738 = vmatpush.xpose.msra.mxu0 0.0
        %1739 = vmatpush.xpose.msra.mxu0 0.0
        %1740 = vmatpush.xpose.msra.mxu0 0.0
        %1741 = vmatpush.xpose.msra.mxu0 0.0
        %1742 = vmatpush.xpose.msra.mxu0 0.0
        %1743 = vmatpush.xpose.msra.mxu0 0.0
        %1744 = vmatpush.xpose.msra.mxu0 0.0
        %1745 = vmatpush.xpose.msra.mxu0 0.0
        %1746 = vmatpush.xpose.msra.mxu0 0.0
        %1747 = vmatpush.xpose.msra.mxu0 %v1731
        %1748 = vmatpush.xpose.msra.mxu0 %v1728
        %1749 = vmatmul.f32.gmra.mxu0 %v1725
        %v1750 = vpop.f32.mrf.mxu0
        %v1751 = vadd.f32 0.0, %v1750
        %1752 = vdwg.mxu0
        %1753 = vrot.lane.b32.xlu0 %v1637, 120
        %v1754 = vpop.permute.xlu0 %1753
        %1755 = vrot.lane.b32.xlu0 %v1718, 120
        %v1756 = vpop.permute.xlu0 %1755
        %1757 = vrot.lane.b32.xlu0 %v1721, 120
        %v1758 = vpop.permute.xlu0 %1757
        %v1759 = vsel %vm1723, %v1754, 0
        %v1761 = vsel %vm1723, %v1756, 0
        %v1763 = vsel %vm1723, %v1758, 0
        %1765 = vmatpush.xpose.msra.mxu0 0.0
        %1766 = vmatpush.xpose.msra.mxu0 0.0
        %1767 = vmatpush.xpose.msra.mxu0 0.0
        %1768 = vmatpush.xpose.msra.mxu0 0.0
        %1769 = vmatpush.xpose.msra.mxu0 0.0
        %1770 = vmatpush.xpose.msra.mxu0 0.0
        %1771 = vmatpush.xpose.msra.mxu0 0.0
        %1772 = vmatpush.xpose.msra.mxu0 0.0
        %1773 = vmatpush.xpose.msra.mxu0 0.0
        %1774 = vmatpush.xpose.msra.mxu0 0.0
        %1775 = vmatpush.xpose.msra.mxu0 0.0
        %1776 = vmatpush.xpose.msra.mxu0 0.0
        %1777 = vmatpush.xpose.msra.mxu0 0.0
        %1778 = vmatpush.xpose.msra.mxu0 0.0
        %1779 = vmatpush.xpose.msra.mxu0 %v1763
        %1780 = vmatpush.xpose.msra.mxu0 %v1761
        %1781 = vmatmul.f32.gmra.mxu0 %v1759
        %v1782 = vpop.f32.mrf.mxu0
        %v1783 = vadd.f32 0.0, %v1782
        %1784 = vdwg.mxu0
        %1785 = vrot.lane.b32.xlu0 %v1637, 112
        %v1786 = vpop.permute.xlu0 %1785
        %1787 = vrot.lane.b32.xlu0 %v1718, 112
        %v1788 = vpop.permute.xlu0 %1787
        %1789 = vrot.lane.b32.xlu0 %v1721, 112
        %v1790 = vpop.permute.xlu0 %1789
        %v1791 = vsel %vm1723, %v1786, 0
        %v1793 = vsel %vm1723, %v1788, 0
        %v1795 = vsel %vm1723, %v1790, 0
        %1797 = vmatpush.xpose.msra.mxu0 0.0
        %1798 = vmatpush.xpose.msra.mxu0 0.0
        %1799 = vmatpush.xpose.msra.mxu0 0.0
        %1800 = vmatpush.xpose.msra.mxu0 0.0
        %1801 = vmatpush.xpose.msra.mxu0 0.0
        %1802 = vmatpush.xpose.msra.mxu0 0.0
        %1803 = vmatpush.xpose.msra.mxu0 0.0
        %1804 = vmatpush.xpose.msra.mxu0 0.0
        %1805 = vmatpush.xpose.msra.mxu0 0.0
        %1806 = vmatpush.xpose.msra.mxu0 0.0
        %1807 = vmatpush.xpose.msra.mxu0 0.0
        %1808 = vmatpush.xpose.msra.mxu0 0.0
        %1809 = vmatpush.xpose.msra.mxu0 0.0
        %1810 = vmatpush.xpose.msra.mxu0 0.0
        %1811 = vmatpush.xpose.msra.mxu0 %v1795
        %1812 = vmatpush.xpose.msra.mxu0 %v1793
        %1813 = vmatmul.f32.gmra.mxu0 %v1791
        %v1814 = vpop.f32.mrf.mxu0
        %v1815 = vadd.f32 0.0, %v1814
        %1816 = vdwg.mxu0
        %1817 = vrot.lane.b32.xlu0 %v1637, 104
        %v1818 = vpop.permute.xlu0 %1817
        %1819 = vrot.lane.b32.xlu0 %v1718, 104
        %v1820 = vpop.permute.xlu0 %1819
        %1821 = vrot.lane.b32.xlu0 %v1721, 104
        %v1822 = vpop.permute.xlu0 %1821
        %v1823 = vsel %vm1723, %v1818, 0
        %v1825 = vsel %vm1723, %v1820, 0
        %v1827 = vsel %vm1723, %v1822, 0
        %1829 = vmatpush.xpose.msra.mxu0 0.0
        %1830 = vmatpush.xpose.msra.mxu0 0.0
        %1831 = vmatpush.xpose.msra.mxu0 0.0
        %1832 = vmatpush.xpose.msra.mxu0 0.0
        %1833 = vmatpush.xpose.msra.mxu0 0.0
        %1834 = vmatpush.xpose.msra.mxu0 0.0
        %1835 = vmatpush.xpose.msra.mxu0 0.0
        %1836 = vmatpush.xpose.msra.mxu0 0.0
        %1837 = vmatpush.xpose.msra.mxu0 0.0
        %1838 = vmatpush.xpose.msra.mxu0 0.0
        %1839 = vmatpush.xpose.msra.mxu0 0.0
        %1840 = vmatpush.xpose.msra.mxu0 0.0
        %1841 = vmatpush.xpose.msra.mxu0 0.0
        %1842 = vmatpush.xpose.msra.mxu0 0.0
        %1843 = vmatpush.xpose.msra.mxu0 %v1827
        %1844 = vmatpush.xpose.msra.mxu0 %v1825
        %1845 = vmatmul.f32.gmra.mxu0 %v1823
        %v1846 = vpop.f32.mrf.mxu0
        %v1847 = vadd.f32 0.0, %v1846
        %1848 = vdwg.mxu0
        %1849 = vrot.lane.b32.xlu0 %v1637, 96
        %v1850 = vpop.permute.xlu0 %1849
        %1851 = vrot.lane.b32.xlu0 %v1718, 96
        %v1852 = vpop.permute.xlu0 %1851
        %1853 = vrot.lane.b32.xlu0 %v1721, 96
        %v1854 = vpop.permute.xlu0 %1853
        %v1855 = vsel %vm1723, %v1850, 0
        %v1857 = vsel %vm1723, %v1852, 0
        %v1859 = vsel %vm1723, %v1854, 0
        %1861 = vmatpush.xpose.msra.mxu0 0.0
        %1862 = vmatpush.xpose.msra.mxu0 0.0
        %1863 = vmatpush.xpose.msra.mxu0 0.0
        %1864 = vmatpush.xpose.msra.mxu0 0.0
        %1865 = vmatpush.xpose.msra.mxu0 0.0
        %1866 = vmatpush.xpose.msra.mxu0 0.0
        %1867 = vmatpush.xpose.msra.mxu0 0.0
        %1868 = vmatpush.xpose.msra.mxu0 0.0
        %1869 = vmatpush.xpose.msra.mxu0 0.0
        %1870 = vmatpush.xpose.msra.mxu0 0.0
        %1871 = vmatpush.xpose.msra.mxu0 0.0
        %1872 = vmatpush.xpose.msra.mxu0 0.0
        %1873 = vmatpush.xpose.msra.mxu0 0.0
        %1874 = vmatpush.xpose.msra.mxu0 0.0
        %1875 = vmatpush.xpose.msra.mxu0 %v1859
        %1876 = vmatpush.xpose.msra.mxu0 %v1857
        %1877 = vmatmul.f32.gmra.mxu0 %v1855
        %v1878 = vpop.f32.mrf.mxu0
        %v1879 = vadd.f32 0.0, %v1878
        %1880 = vdwg.mxu0
        %1881 = vrot.lane.b32.xlu0 %v1637, 88
        %v1882 = vpop.permute.xlu0 %1881
        %1883 = vrot.lane.b32.xlu0 %v1718, 88
        %v1884 = vpop.permute.xlu0 %1883
        %1885 = vrot.lane.b32.xlu0 %v1721, 88
        %v1886 = vpop.permute.xlu0 %1885
        %v1887 = vsel %vm1723, %v1882, 0
        %v1889 = vsel %vm1723, %v1884, 0
        %v1891 = vsel %vm1723, %v1886, 0
        %1893 = vmatpush.xpose.msra.mxu0 0.0
        %1894 = vmatpush.xpose.msra.mxu0 0.0
        %1895 = vmatpush.xpose.msra.mxu0 0.0
        %1896 = vmatpush.xpose.msra.mxu0 0.0
        %1897 = vmatpush.xpose.msra.mxu0 0.0
        %1898 = vmatpush.xpose.msra.mxu0 0.0
        %1899 = vmatpush.xpose.msra.mxu0 0.0
        %1900 = vmatpush.xpose.msra.mxu0 0.0
        %1901 = vmatpush.xpose.msra.mxu0 0.0
        %1902 = vmatpush.xpose.msra.mxu0 0.0
        %1903 = vmatpush.xpose.msra.mxu0 0.0
        %1904 = vmatpush.xpose.msra.mxu0 0.0
        %1905 = vmatpush.xpose.msra.mxu0 0.0
        %1906 = vmatpush.xpose.msra.mxu0 0.0
        %1907 = vmatpush.xpose.msra.mxu0 %v1891
        %1908 = vmatpush.xpose.msra.mxu0 %v1889
        %1909 = vmatmul.f32.gmra.mxu0 %v1887
        %v1910 = vpop.f32.mrf.mxu0
        %v1911 = vadd.f32 0.0, %v1910
        %1912 = vdwg.mxu0
        %1913 = vrot.lane.b32.xlu0 %v1637, 80
        %v1914 = vpop.permute.xlu0 %1913
        %1915 = vrot.lane.b32.xlu0 %v1718, 80
        %v1916 = vpop.permute.xlu0 %1915
        %1917 = vrot.lane.b32.xlu0 %v1721, 80
        %v1918 = vpop.permute.xlu0 %1917
        %v1919 = vsel %vm1723, %v1914, 0
        %v1921 = vsel %vm1723, %v1916, 0
        %v1923 = vsel %vm1723, %v1918, 0
        %1925 = vmatpush.xpose.msra.mxu0 0.0
        %1926 = vmatpush.xpose.msra.mxu0 0.0
        %1927 = vmatpush.xpose.msra.mxu0 0.0
        %1928 = vmatpush.xpose.msra.mxu0 0.0
        %1929 = vmatpush.xpose.msra.mxu0 0.0
        %1930 = vmatpush.xpose.msra.mxu0 0.0
        %1931 = vmatpush.xpose.msra.mxu0 0.0
        %1932 = vmatpush.xpose.msra.mxu0 0.0
        %1933 = vmatpush.xpose.msra.mxu0 0.0
        %1934 = vmatpush.xpose.msra.mxu0 0.0
        %1935 = vmatpush.xpose.msra.mxu0 0.0
        %1936 = vmatpush.xpose.msra.mxu0 0.0
        %1937 = vmatpush.xpose.msra.mxu0 0.0
        %1938 = vmatpush.xpose.msra.mxu0 0.0
        %1939 = vmatpush.xpose.msra.mxu0 %v1923
        %1940 = vmatpush.xpose.msra.mxu0 %v1921
        %1941 = vmatmul.f32.gmra.mxu0 %v1919
        %v1942 = vpop.f32.mrf.mxu0
        %v1943 = vadd.f32 0.0, %v1942
        %1944 = vdwg.mxu0
        %1945 = vrot.lane.b32.xlu0 %v1637, 72
        %v1946 = vpop.permute.xlu0 %1945
        %1947 = vrot.lane.b32.xlu0 %v1718, 72
        %v1948 = vpop.permute.xlu0 %1947
        %1949 = vrot.lane.b32.xlu0 %v1721, 72
        %v1950 = vpop.permute.xlu0 %1949
        %v1951 = vsel %vm1723, %v1946, 0
        %v1953 = vsel %vm1723, %v1948, 0
        %v1955 = vsel %vm1723, %v1950, 0
        %1957 = vmatpush.xpose.msra.mxu0 0.0
        %1958 = vmatpush.xpose.msra.mxu0 0.0
        %1959 = vmatpush.xpose.msra.mxu0 0.0
        %1960 = vmatpush.xpose.msra.mxu0 0.0
        %1961 = vmatpush.xpose.msra.mxu0 0.0
        %1962 = vmatpush.xpose.msra.mxu0 0.0
        %1963 = vmatpush.xpose.msra.mxu0 0.0
        %1964 = vmatpush.xpose.msra.mxu0 0.0
        %1965 = vmatpush.xpose.msra.mxu0 0.0
        %1966 = vmatpush.xpose.msra.mxu0 0.0
        %1967 = vmatpush.xpose.msra.mxu0 0.0
        %1968 = vmatpush.xpose.msra.mxu0 0.0
        %1969 = vmatpush.xpose.msra.mxu0 0.0
        %1970 = vmatpush.xpose.msra.mxu0 0.0
        %1971 = vmatpush.xpose.msra.mxu0 %v1955
        %1972 = vmatpush.xpose.msra.mxu0 %v1953
        %1973 = vmatmul.f32.gmra.mxu0 %v1951
        %v1974 = vpop.f32.mrf.mxu0
        %v1975 = vadd.f32 0.0, %v1974
        %1976 = vdwg.mxu0
        %v1977 = vmul.f32 %v1751, 0.35355338
        %v1978 = vmul.f32 %v1783, 0.35355338
        %v1979 = vmul.f32 %v1815, 0.35355338
        %v1980 = vmul.f32 %v1847, 0.35355338
        %v1981 = vmul.f32 %v1879, 0.35355338
        %v1982 = vmul.f32 %v1911, 0.35355338
        %v1983 = vmul.f32 %v1943, 0.35355338
        %v1984 = vmul.f32 %v1975, 0.35355338
        %v1985 = vsel %vm904, %v1977, -inf
        %1986 = vmax.xlane.f32.xlu0 %v1985
        %v1987 = vpop.xlane.xlu0 %1986
        %v1988 = vsel %vm904, %v1978, -inf
        %1989 = vmax.xlane.f32.xlu0 %v1988
        %v1990 = vpop.xlane.xlu0 %1989
        %v1991 = vsel %vm904, %v1979, -inf
        %1992 = vmax.xlane.f32.xlu0 %v1991
        %v1993 = vpop.xlane.xlu0 %1992
        %v1994 = vsel %vm904, %v1980, -inf
        %1995 = vmax.xlane.f32.xlu0 %v1994
        %v1996 = vpop.xlane.xlu0 %1995
        %v1997 = vsel %vm904, %v1981, -inf
        %1998 = vmax.xlane.f32.xlu0 %v1997
        %v1999 = vpop.xlane.xlu0 %1998
        %v2000 = vsel %vm904, %v1982, -inf
        %2001 = vmax.xlane.f32.xlu0 %v2000
        %v2002 = vpop.xlane.xlu0 %2001
        %v2003 = vsel %vm904, %v1983, -inf
        %2004 = vmax.xlane.f32.xlu0 %v2003
        %v2005 = vpop.xlane.xlu0 %2004
        %v2006 = vsel %vm904, %v1984, -inf
        %2007 = vmax.xlane.f32.xlu0 %v2006
        %v2008 = vpop.xlane.xlu0 %2007
        %v2009 = vsub.f32 %v1977, %v1987
        %v2010 = vsub.f32 %v1978, %v1990
        %v2011 = vsub.f32 %v1979, %v1993
        %v2012 = vsub.f32 %v1980, %v1996
        %v2013 = vsub.f32 %v1981, %v1999
        %v2014 = vsub.f32 %v1982, %v2002
        %v2015 = vsub.f32 %v1983, %v2005
        %v2016 = vsub.f32 %v1984, %v2008
        %v2017 = vmul.f32 %v2009, 1.442695
        %v2018 = vpow.pop %v2017
        %v2019 = vmul.f32 %v2010, 1.442695
        %v2020 = vpow.pop %v2019
        %v2021 = vmul.f32 %v2011, 1.442695
        %v2022 = vpow.pop %v2021
        %v2023 = vmul.f32 %v2012, 1.442695
        %v2024 = vpow.pop %v2023
        %v2025 = vmul.f32 %v2013, 1.442695
        %v2026 = vpow.pop %v2025
        %v2027 = vmul.f32 %v2014, 1.442695
        %v2028 = vpow.pop %v2027
        %v2029 = vmul.f32 %v2015, 1.442695
        %v2030 = vpow.pop %v2029
        %v2031 = vmul.f32 %v2016, 1.442695
        %v2032 = vpow.pop %v2031
        %v2033 = vsel %vm904, %v2018, 0.0
        %2034 = vadd.xlane.f32.xlu0 %v2033
        %v2035 = vpop.xlane.xlu0 %2034
        %v2036 = vsel %vm904, %v2020, 0.0
        %2037 = vadd.xlane.f32.xlu0 %v2036
        %v2038 = vpop.xlane.xlu0 %2037
        %v2039 = vsel %vm904, %v2022, 0.0
        %2040 = vadd.xlane.f32.xlu0 %v2039
        %v2041 = vpop.xlane.xlu0 %2040
        %v2042 = vsel %vm904, %v2024, 0.0
        %2043 = vadd.xlane.f32.xlu0 %v2042
        %v2044 = vpop.xlane.xlu0 %2043
        %v2045 = vsel %vm904, %v2026, 0.0
        %2046 = vadd.xlane.f32.xlu0 %v2045
        %v2047 = vpop.xlane.xlu0 %2046
        %v2048 = vsel %vm904, %v2028, 0.0
        %2049 = vadd.xlane.f32.xlu0 %v2048
        %v2050 = vpop.xlane.xlu0 %2049
        %v2051 = vsel %vm904, %v2030, 0.0
        %2052 = vadd.xlane.f32.xlu0 %v2051
        %v2053 = vpop.xlane.xlu0 %2052
        %v2054 = vsel %vm904, %v2032, 0.0
        %2055 = vadd.xlane.f32.xlu0 %v2054
        %v2056 = vpop.xlane.xlu0 %2055
        %v2057 = vrcp.pop %v2035
        %v2058 = vrcp.pop %v2038
        %v2059 = vrcp.pop %v2041
        %v2060 = vrcp.pop %v2044
        %v2061 = vrcp.pop %v2047
        %v2062 = vrcp.pop %v2050
        %v2063 = vrcp.pop %v2053
        %v2064 = vrcp.pop %v2056
        %v2065 = vmul.f32 %v2018, %v2057
        %v2066 = vmul.f32 %v2020, %v2058
        %v2067 = vmul.f32 %v2022, %v2059
        %v2068 = vmul.f32 %v2024, %v2060
        %v2069 = vmul.f32 %v2026, %v2061
        %v2070 = vmul.f32 %v2028, %v2062
        %v2071 = vmul.f32 %v2030, %v2063
        %v2072 = vmul.f32 %v2032, %v2064
        %2073 = vrot.lane.b32.xlu0 %v1718, 64
        %v2074 = vpop.permute.xlu0 %2073
        %2075 = vrot.lane.b32.xlu0 %v1721, 64
        %v2076 = vpop.permute.xlu0 %2075
        %v2080 = vsel %vm904, %v2065, 0
        %2082 = vmatpush.msra.mxu0 0.0
        %2083 = vmatpush.msra.mxu0 0.0
        %2084 = vmatpush.msra.mxu0 0.0
        %2085 = vmatpush.msra.mxu0 0.0
        %2086 = vmatpush.msra.mxu0 0.0
        %2087 = vmatpush.msra.mxu0 0.0
        %2088 = vmatpush.msra.mxu0 0.0
        %2089 = vmatpush.msra.mxu0 0.0
        %2090 = vmatpush.msra.mxu0 0.0
        %2091 = vmatpush.msra.mxu0 0.0
        %2092 = vmatpush.msra.mxu0 0.0
        %2093 = vmatpush.msra.mxu0 0.0
        %2094 = vmatpush.msra.mxu0 0.0
        %2095 = vmatpush.msra.mxu0 0.0
        %2096 = vmatpush.msra.mxu0 %v2076
        %2097 = vmatpush.msra.mxu0 %v2074
        %2098 = vmatmul.f32.gmra.mxu0 %v2080
        %v2099 = vpop.f32.mrf.mxu0
        %v2100 = vadd.f32 0.0, %v2099
        %2101 = vdwg.mxu0
        %2102 = vst.msk [vmem:[#allocation3] sm:$0xff] %vm1723, %v2100
        %2103 = vrot.lane.b32.xlu0 %v1718, 56
        %v2104 = vpop.permute.xlu0 %2103
        %2105 = vrot.lane.b32.xlu0 %v1721, 56
        %v2106 = vpop.permute.xlu0 %2105
        %v2110 = vsel %vm904, %v2066, 0
        %2112 = vmatpush.msra.mxu0 0.0
        %2113 = vmatpush.msra.mxu0 0.0
        %2114 = vmatpush.msra.mxu0 0.0
        %2115 = vmatpush.msra.mxu0 0.0
        %2116 = vmatpush.msra.mxu0 0.0
        %2117 = vmatpush.msra.mxu0 0.0
        %2118 = vmatpush.msra.mxu0 0.0
        %2119 = vmatpush.msra.mxu0 0.0
        %2120 = vmatpush.msra.mxu0 0.0
        %2121 = vmatpush.msra.mxu0 0.0
        %2122 = vmatpush.msra.mxu0 0.0
        %2123 = vmatpush.msra.mxu0 0.0
        %2124 = vmatpush.msra.mxu0 0.0
        %2125 = vmatpush.msra.mxu0 0.0
        %2126 = vmatpush.msra.mxu0 %v2106
        %2127 = vmatpush.msra.mxu0 %v2104
        %2128 = vmatmul.f32.gmra.mxu0 %v2110
        %v2129 = vpop.f32.mrf.mxu0
        %v2130 = vadd.f32 0.0, %v2129
        %2131 = vdwg.mxu0
        %2133 = vrot.lane.b32.xlu0 %v2130, 8
        %v2134 = vpop.permute.xlu0 %2133
        %vm2136 = vcmask 130112
        %2137 = vst.msk [vmem:[#allocation3] sm:$0xff] %vm2136, %v2134
        %2138 = vrot.lane.b32.xlu0 %v1718, 48
        %v2139 = vpop.permute.xlu0 %2138
        %2140 = vrot.lane.b32.xlu0 %v1721, 48
        %v2141 = vpop.permute.xlu0 %2140
        %v2145 = vsel %vm904, %v2067, 0
        %2147 = vmatpush.msra.mxu0 0.0
        %2148 = vmatpush.msra.mxu0 0.0
        %2149 = vmatpush.msra.mxu0 0.0
        %2150 = vmatpush.msra.mxu0 0.0
        %2151 = vmatpush.msra.mxu0 0.0
        %2152 = vmatpush.msra.mxu0 0.0
        %2153 = vmatpush.msra.mxu0 0.0
        %2154 = vmatpush.msra.mxu0 0.0
        %2155 = vmatpush.msra.mxu0 0.0
        %2156 = vmatpush.msra.mxu0 0.0
        %2157 = vmatpush.msra.mxu0 0.0
        %2158 = vmatpush.msra.mxu0 0.0
        %2159 = vmatpush.msra.mxu0 0.0
        %2160 = vmatpush.msra.mxu0 0.0
        %2161 = vmatpush.msra.mxu0 %v2141
        %2162 = vmatpush.msra.mxu0 %v2139
        %2163 = vmatmul.f32.gmra.mxu0 %v2145
        %v2164 = vpop.f32.mrf.mxu0
        %v2165 = vadd.f32 0.0, %v2164
        %2166 = vdwg.mxu0
        %2168 = vrot.lane.b32.xlu0 %v2165, 16
        %v2169 = vpop.permute.xlu0 %2168
        %vm2171 = vcmask 195712
        %2172 = vst.msk [vmem:[#allocation3] sm:$0xff] %vm2171, %v2169
        %2173 = vrot.lane.b32.xlu0 %v1718, 40
        %v2174 = vpop.permute.xlu0 %2173
        %2175 = vrot.lane.b32.xlu0 %v1721, 40
        %v2176 = vpop.permute.xlu0 %2175
        %v2180 = vsel %vm904, %v2068, 0
        %2182 = vmatpush.msra.mxu0 0.0
        %2183 = vmatpush.msra.mxu0 0.0
        %2184 = vmatpush.msra.mxu0 0.0
        %2185 = vmatpush.msra.mxu0 0.0
        %2186 = vmatpush.msra.mxu0 0.0
        %2187 = vmatpush.msra.mxu0 0.0
        %2188 = vmatpush.msra.mxu0 0.0
        %2189 = vmatpush.msra.mxu0 0.0
        %2190 = vmatpush.msra.mxu0 0.0
        %2191 = vmatpush.msra.mxu0 0.0
        %2192 = vmatpush.msra.mxu0 0.0
        %2193 = vmatpush.msra.mxu0 0.0
        %2194 = vmatpush.msra.mxu0 0.0
        %2195 = vmatpush.msra.mxu0 0.0
        %2196 = vmatpush.msra.mxu0 %v2176
        %2197 = vmatpush.msra.mxu0 %v2174
        %2198 = vmatmul.f32.gmra.mxu0 %v2180
        %v2199 = vpop.f32.mrf.mxu0
        %v2200 = vadd.f32 0.0, %v2199
        %2201 = vdwg.mxu0
        %2203 = vrot.lane.b32.xlu0 %v2200, 24
        %v2204 = vpop.permute.xlu0 %2203
        %vm2206 = vcmask 261312
        %2207 = vst.msk [vmem:[#allocation3] sm:$0xff] %vm2206, %v2204
        %2208 = vrot.lane.b32.xlu0 %v1718, 32
        %v2209 = vpop.permute.xlu0 %2208
        %2210 = vrot.lane.b32.xlu0 %v1721, 32
        %v2211 = vpop.permute.xlu0 %2210
        %v2215 = vsel %vm904, %v2069, 0
        %2217 = vmatpush.msra.mxu0 0.0
        %2218 = vmatpush.msra.mxu0 0.0
        %2219 = vmatpush.msra.mxu0 0.0
        %2220 = vmatpush.msra.mxu0 0.0
        %2221 = vmatpush.msra.mxu0 0.0
        %2222 = vmatpush.msra.mxu0 0.0
        %2223 = vmatpush.msra.mxu0 0.0
        %2224 = vmatpush.msra.mxu0 0.0
        %2225 = vmatpush.msra.mxu0 0.0
        %2226 = vmatpush.msra.mxu0 0.0
        %2227 = vmatpush.msra.mxu0 0.0
        %2228 = vmatpush.msra.mxu0 0.0
        %2229 = vmatpush.msra.mxu0 0.0
        %2230 = vmatpush.msra.mxu0 0.0
        %2231 = vmatpush.msra.mxu0 %v2211
        %2232 = vmatpush.msra.mxu0 %v2209
        %2233 = vmatmul.f32.gmra.mxu0 %v2215
        %v2234 = vpop.f32.mrf.mxu0
        %v2235 = vadd.f32 0.0, %v2234
        %2236 = vdwg.mxu0
        %2238 = vrot.lane.b32.xlu0 %v2235, 32
        %v2239 = vpop.permute.xlu0 %2238
        %vm2241 = vcmask 326912
        %2242 = vst.msk [vmem:[#allocation3] sm:$0xff] %vm2241, %v2239
        %2243 = vrot.lane.b32.xlu0 %v1718, 24
        %v2244 = vpop.permute.xlu0 %2243
        %2245 = vrot.lane.b32.xlu0 %v1721, 24
        %v2246 = vpop.permute.xlu0 %2245
        %v2250 = vsel %vm904, %v2070, 0
        %2252 = vmatpush.msra.mxu0 0.0
        %2253 = vmatpush.msra.mxu0 0.0
        %2254 = vmatpush.msra.mxu0 0.0
        %2255 = vmatpush.msra.mxu0 0.0
        %2256 = vmatpush.msra.mxu0 0.0
        %2257 = vmatpush.msra.mxu0 0.0
        %2258 = vmatpush.msra.mxu0 0.0
        %2259 = vmatpush.msra.mxu0 0.0
        %2260 = vmatpush.msra.mxu0 0.0
        %2261 = vmatpush.msra.mxu0 0.0
        %2262 = vmatpush.msra.mxu0 0.0
        %2263 = vmatpush.msra.mxu0 0.0
        %2264 = vmatpush.msra.mxu0 0.0
        %2265 = vmatpush.msra.mxu0 0.0
        %2266 = vmatpush.msra.mxu0 %v2246
        %2267 = vmatpush.msra.mxu0 %v2244
        %2268 = vmatmul.f32.gmra.mxu0 %v2250
        %v2269 = vpop.f32.mrf.mxu0
        %v2270 = vadd.f32 0.0, %v2269
        %2271 = vdwg.mxu0
        %2273 = vrot.lane.b32.xlu0 %v2270, 40
        %v2274 = vpop.permute.xlu0 %2273
        %vm2276 = vcmask 392512
        %2277 = vst.msk [vmem:[#allocation3] sm:$0xff] %vm2276, %v2274
        %2278 = vrot.lane.b32.xlu0 %v1718, 16
        %v2279 = vpop.permute.xlu0 %2278
        %2280 = vrot.lane.b32.xlu0 %v1721, 16
        %v2281 = vpop.permute.xlu0 %2280
        %v2285 = vsel %vm904, %v2071, 0
        %2287 = vmatpush.msra.mxu0 0.0
        %2288 = vmatpush.msra.mxu0 0.0
        %2289 = vmatpush.msra.mxu0 0.0
        %2290 = vmatpush.msra.mxu0 0.0
        %2291 = vmatpush.msra.mxu0 0.0
        %2292 = vmatpush.msra.mxu0 0.0
        %2293 = vmatpush.msra.mxu0 0.0
        %2294 = vmatpush.msra.mxu0 0.0
        %2295 = vmatpush.msra.mxu0 0.0
        %2296 = vmatpush.msra.mxu0 0.0
        %2297 = vmatpush.msra.mxu0 0.0
        %2298 = vmatpush.msra.mxu0 0.0
        %2299 = vmatpush.msra.mxu0 0.0
        %2300 = vmatpush.msra.mxu0 0.0
        %2301 = vmatpush.msra.mxu0 %v2281
        %2302 = vmatpush.msra.mxu0 %v2279
        %2303 = vmatmul.f32.gmra.mxu0 %v2285
        %v2304 = vpop.f32.mrf.mxu0
        %v2305 = vadd.f32 0.0, %v2304
        %2306 = vdwg.mxu0
        %2308 = vrot.lane.b32.xlu0 %v2305, 48
        %v2309 = vpop.permute.xlu0 %2308
        %vm2311 = vcmask 458112
        %2312 = vst.msk [vmem:[#allocation3] sm:$0xff] %vm2311, %v2309
        %2313 = vrot.lane.b32.xlu0 %v1718, 8
        %v2314 = vpop.permute.xlu0 %2313
        %2315 = vrot.lane.b32.xlu0 %v1721, 8
        %v2316 = vpop.permute.xlu0 %2315
        %v2320 = vsel %vm904, %v2072, 0
        %2322 = vmatpush.msra.mxu0 0.0
        %2323 = vmatpush.msra.mxu0 0.0
        %2324 = vmatpush.msra.mxu0 0.0
        %2325 = vmatpush.msra.mxu0 0.0
        %2326 = vmatpush.msra.mxu0 0.0
        %2327 = vmatpush.msra.mxu0 0.0
        %2328 = vmatpush.msra.mxu0 0.0
        %2329 = vmatpush.msra.mxu0 0.0
        %2330 = vmatpush.msra.mxu0 0.0
        %2331 = vmatpush.msra.mxu0 0.0
        %2332 = vmatpush.msra.mxu0 0.0
        %2333 = vmatpush.msra.mxu0 0.0
        %2334 = vmatpush.msra.mxu0 0.0
        %2335 = vmatpush.msra.mxu0 0.0
        %2336 = vmatpush.msra.mxu0 %v2316
        %2337 = vmatpush.msra.mxu0 %v2314
        %2338 = vmatmul.f32.gmra.mxu0 %v2320
        %v2339 = vpop.f32.mrf.mxu0
        %v2340 = vadd.f32 0.0, %v2339
        %2341 = vdwg.mxu0
        %2343 = vrot.lane.b32.xlu0 %v2340, 56
        %v2344 = vpop.permute.xlu0 %2343
        %vm2346 = vcmask 523712
        %2347 = vst.msk [vmem:[#allocation3] sm:$0xff] %vm2346, %v2344
        %v2348 = vld [vmem:[#allocation3] sm:$0xff]
        %v2350 = vperm.slane %v1587, 0
        %v2353 = vsel %vm1591, %v2348, 0
        %v2356 = vsel %vm1591, %v1579, 0
        %v2359 = vsel %vm1591, %v1580, 0
        %v2362 = vsel %vm1591, %v1581, 0
        %v2365 = vsel %vm1591, %v1582, 0
        %v2368 = vsel %vm1591, %v1583, 0
        %v2371 = vsel %vm1591, %v1584, 0
        %v2374 = vsel %vm1591, %v1585, 0
        %v2377 = vsel %vm1591, %v1586, 0
        %2379 = vmatpush.xpose.msra.mxu0 0.0
        %2380 = vmatpush.xpose.msra.mxu0 0.0
        %2381 = vmatpush.xpose.msra.mxu0 0.0
        %2382 = vmatpush.xpose.msra.mxu0 0.0
        %2383 = vmatpush.xpose.msra.mxu0 0.0
        %2384 = vmatpush.xpose.msra.mxu0 0.0
        %2385 = vmatpush.xpose.msra.mxu0 0.0
        %2386 = vmatpush.xpose.msra.mxu0 0.0
        %2387 = vmatpush.xpose.msra.mxu0 %v2377
        %2388 = vmatpush.xpose.msra.mxu0 %v2374
        %2389 = vmatpush.xpose.msra.mxu0 %v2371
        %2390 = vmatpush.xpose.msra.mxu0 %v2368
        %2391 = vmatpush.xpose.msra.mxu0 %v2365
        %2392 = vmatpush.xpose.msra.mxu0 %v2362
        %2393 = vmatpush.xpose.msra.mxu0 %v2359
        %2394 = vmatpush.xpose.msra.mxu0 %v2356
        %2395 = vmatmul.f32.gmra.mxu0 %v2353
        %v2396 = vpop.f32.mrf.mxu0
        %v2397 = vadd.f32 %v2350, %v2396
        %2398 = vdwg.mxu0
        %v2399 = vadd.f32 %v1553, %v2397
        %v2400 = vld [vmem:[%s12] sm:$0xff]
        %v2401 = vld [vmem:[%s12 + $0x8] sm:$0xff]
        %v2402 = vld [vmem:[%s12 + $0x10] sm:$0xff]
        %v2403 = vld [vmem:[%s12 + $0x18] sm:$0xff]
        %v2404 = vld [vmem:[%s13] sm:$0x1]
        %v2406 = vperm.slane %v2404, 0
        %v2409 = vsel %vm1591, %v2399, 0
        %v2412 = vsel %vm1591, %v2400, 0
        %v2415 = vsel %vm1591, %v2401, 0
        %v2418 = vsel %vm1591, %v2402, 0
        %v2421 = vsel %vm1591, %v2403, 0
        %2423 = vmatpush.xpose.msra.mxu0 0.0
        %2424 = vmatpush.xpose.msra.mxu0 0.0
        %2425 = vmatpush.xpose.msra.mxu0 0.0
        %2426 = vmatpush.xpose.msra.mxu0 0.0
        %2427 = vmatpush.xpose.msra.mxu0 0.0
        %2428 = vmatpush.xpose.msra.mxu0 0.0
        %2429 = vmatpush.xpose.msra.mxu0 0.0
        %2430 = vmatpush.xpose.msra.mxu0 0.0
        %2431 = vmatpush.xpose.msra.mxu0 0.0
        %2432 = vmatpush.xpose.msra.mxu0 0.0
        %2433 = vmatpush.xpose.msra.mxu0 0.0
        %2434 = vmatpush.xpose.msra.mxu0 0.0
        %2435 = vmatpush.xpose.msra.mxu0 %v2421
        %2436 = vmatpush.xpose.msra.mxu0 %v2418
        %2437 = vmatpush.xpose.msra.mxu0 %v2415
        %2438 = vmatpush.xpose.msra.mxu0 %v2412
        %2439 = vmatmul.f32.gmra.mxu0 %v2409
        %v2440 = vpop.f32.mrf.mxu0
        %v2441 = vadd.f32 %v2406, %v2440
        %2442 = vdwg.mxu0
        %v2443 = vmul.f32 %v2441, 0.5
        %v2444 = vmul.f32 %v2441, 0.044715
        %v2445 = vmul.f32 %v2444, %v2441
        %v2446 = vmul.f32 %v2445, %v2441
        %v2447 = vadd.f32 %v2441, %v2446
        %v2448 = vmul.f32 %v2447, 0.7978846
        %v2449 = vtanh.pop %v2448
        %v2450 = vadd.f32 %v2449, 1.0
        %v2451 = vmul.f32 %v2443, %v2450
        %2452 = vst.msk [vmem:[%s475] sm:$0xff] %vm511, %v2451
        %s2453 = sand.u32 %s340, 1
        %s2454 = scalar_lea.sflag [#allocation5], %s2453
        %s2455 = sand.u32 %s340, 1
        %s2456 = smul.addr %s2455, 8
        %s2457 = scalar_lea.vmem [#allocation4], %s2456
        // Predicated region
        $region77: #{tpu_custom_call.1} parent=75 // pred_check
          %p2458 = pneg %p350
        $region78: #{tpu_custom_call.1} parent=75 // pred_check_branch
          %2460 = sbr.rel (%p2458) target = $region80
        $region79: #{tpu_custom_call.1} parent=75 // pred_region
          %2462 = vsyncadd %s2454, 0
          %s2463 = smul.addr %s28, 8
          %s2464 = scalar_lea.hbm %s14, %s2463
          %s2466 = sshll.u32 %s2457, 4
          %s2467 = int_to_ptr.vmem [resolvable:$true] %s2466
          %s2468 = sshll.u32 %s2464, 4
          %s2469 = int_to_ptr.hbm [resolvable:$true] %s2468
          %2471 = dma.vmem_to_hbm [thread:$0]  %s2467, 128, %s2469, %s2454
        $region80: #{tpu_custom_call.1} parent=75 // pred_fallthru
          _
      $region76: #{tpu_custom_call.1} parent=5 // pred_fallthru
        _
      %p2472 = scmp.le.s32.totalorder 2, %s23
      // Predicated region
      $region81: #{tpu_custom_call.1} parent=5 // pred_check
        %p2473 = pneg %p2472
      $region82: #{tpu_custom_call.1} parent=5 // pred_check_branch
        %2475 = sbr.rel (%p2473) target = $region84
      $region83: #{tpu_custom_call.1} parent=5 // pred_region
        %s2476 = ssub.s32 %s23, 2
        // Predicated region
        $region85: #{tpu_custom_call.1} parent=83 // pred_check
          %p2477 = pneg %p356
        $region86: #{tpu_custom_call.1} parent=83 // pred_check_branch
          %2479 = sbr.rel (%p2477) target = $region88
        $region87: #{tpu_custom_call.1} parent=83 // pred_region
          %s2480 = sand.u32 %s341, 1
          %s2481 = scalar_lea.sflag [#allocation5], %s2480
          %s2482 = sand.u32 %s341, 1
          %s2483 = smul.addr %s2482, 8
          %s2484 = scalar_lea.vmem [#allocation4], %s2483
          %2486 = dma.done %s2481, 128
        $region88: #{tpu_custom_call.1} parent=83 // pred_fallthru
          _
      $region84: #{tpu_custom_call.1} parent=5 // pred_fallthru
        _
    $region6: #{tpu_custom_call.1} parent=1 // loop_footer
      %s27 = sadd.s32 1, %s23
    $region7: #{tpu_custom_call.1} parent=1 // loop_footer_branch
      %22 = sbr.rel target = $region3
    $region8: #{tpu_custom_call.1} parent=1 // loop_exit
      _
    %2487 = vsyncpa [#allocation5], 1
    %s2488 = scalar_lea.sflag [#allocation5], 1
    %2489 = vsyncpa %s2488, 1

</llo_original>
